<compile_context>
chip_gen: v7x
topology: tpu7x:2x2x1
jax: 0.10.0
libtpu: 0.0.40
codegen_flags: <defaults>
</compile_context>

<pallas_src>
import functools

import numpy as np
import jax
import jax.numpy as jnp
from jax import lax
from jax.experimental import pallas as pl
from jax.experimental.pallas import tpu as pltpu


# ------------------------------- Pallas kernel -------------------------------

def _fused_resblock_kernel(xcol_ref, mask_ref, w1_ref, b1_ref, w2_ref, b2_ref,
                           xskip_ref, ws_ref, o_ref, h1_scr, *, TH, Wc):
    # xcol_ref : (1, 1, 4, PRW, 9*Cin)  bf16  conv1 im2col, phase-major rows
    # mask_ref : (1, 4, PRW, 1)         f32   0 (real h1 pixel) or -1e30 (zero pad)
    # w1_ref   : (9*Cin, C) bf16 ; b1_ref: (1, C) f32
    # w2_ref   : (16, C, C) bf16        pool-folded conv2 taps (already * 0.25)
    # b2_ref   : (1, C) f32             b2 + bs folded together
    # xskip_ref: (1, 1, M2, 4*Cin) bf16 skip-path 2x2 pool phases
    # ws_ref   : (4*Cin, C) bf16        4 stacked copies of 0.25 * Ws
    # o_ref    : (1, 1, M2, C) f32      final residual-block output tile
    # h1_scr   : VMEM (4, PRW, C) bf16  phase-major padded h1
    M2 = TH * Wc

    # ---- conv1 (3x3, pad 1) + bias + ReLU: one K=9*Cin matmul per phase block ----
    for p in range(4):
        acc = jnp.dot(xcol_ref[0, 0, p], w1_ref[...],
                      preferred_element_type=jnp.float32)
        h = jnp.maximum(acc + b1_ref[...] + mask_ref[0, p], 0.0)
        h1_scr[p] = h.astype(h1_scr.dtype)

    # ---- skip path: AvgPool2 -> 1x1 conv as one K=4*Cin matmul; biases folded ----
    acc2 = jnp.dot(xskip_ref[0, 0], ws_ref[...],
                   preferred_element_type=jnp.float32) + b2_ref[...]

    # ---- conv2 (3x3, pad 1) + AvgPool2 == 4x4/stride-2 conv on zero-padded h1.
    #      In the phase-major layout every tap is a contiguous (M2, C) slab. --------
    for e in range(4):
        ae, de = e % 2, e // 2
        for f in range(4):
            bf_, df = f % 2, f // 2
            acc2 = acc2 + jnp.dot(
                h1_scr[2 * ae + bf_, pl.ds(de * Wc + df, M2), :],
                w2_ref[e * 4 + f],
                preferred_element_type=jnp.float32)

    o_ref[0, 0] = acc2.astype(o_ref.dtype)


# ------------------------------ wrapper (glue) --------------------------------

def first_resblock_discriminator(x_nchw, params, *, tile_h=None):
    w1, b1 = params["w1"], params["b1"]
    w2, b2 = params["w2"], params["b2"]
    ws, bs = params["ws"], params["bs"]

    N, Cin, H, W = x_nchw.shape
    Cout = w1.shape[0]
    assert H % 2 == 0 and W % 2 == 0
    Hh, Wh = H // 2, W // 2

    # --- static tiling / layout parameters -----------------------------------
    TH = tile_h if (tile_h is not None and Hh % tile_h == 0) else Hh
    n_tiles = Hh // TH
    PR = TH + 2                 # phase rows per tile (1 halo + 1 wrap-guard row)
    Wc = Wh + 2                 # extended phase cols (1 pad + 1 wrap-guard col)
    PRW = PR * Wc
    M2 = TH * Wc                # output rows per tile (cols >= Wh are discarded)
    K1, K3 = 9 * Cin, 4 * Cin
    C = ((Cout + 127) // 128) * 128   # lane-dense padded channel dim

    f32, bf16 = jnp.float32, jnp.bfloat16
    x = jnp.transpose(x_nchw, (0, 2, 3, 1)).astype(f32)            # NHWC
    xpad = jnp.pad(x, ((0, 0), (2, 4), (2, 4), (0, 0)))            # generous zero pad

    # --- conv1 im2col, phase-major: h1phase(p=2a+b, gi, pc) = h1p[2gi+a, 2pc+b] ----
    GR = Hh + 2
    phase_slabs = []
    for a in (0, 1):
        for b in (0, 1):
            taps = [xpad[:, a + dy: a + dy + 2 * GR: 2,
                            b + dx: b + dx + 2 * Wc: 2, :]
                    for dy in range(3) for dx in range(3)]
            phase_slabs.append(jnp.concatenate(taps, axis=-1))      # (N, GR, Wc, K1)
    xcol_g = jnp.stack(phase_slabs, axis=1)                         # (N, 4, GR, Wc, K1)
    xcol = jnp.stack([xcol_g[:, :, t * TH: t * TH + PR] for t in range(n_tiles)],
                     axis=1)                                        # (N, T, 4, PR, Wc, K1)
    xcol = xcol.reshape(N, n_tiles, 4, PRW, K1).astype(bf16)

    # additive mask: 0 where the phase position is a real h1 pixel, -1e30 where it is
    # conv2's zero padding (so relu(acc + b1 + mask) == 0 there).  Static (numpy).
    t_i = np.arange(n_tiles)[:, None, None, None]
    a_i = np.array([0, 0, 1, 1])[None, :, None, None]
    b_i = np.array([0, 1, 0, 1])[None, :, None, None]
    li = np.arange(PR)[None, None, :, None]
    pc = np.arange(Wc)[None, None, None, :]
    r = 2 * (t_i * TH + li) + a_i
    c = 2 * pc + b_i
    valid = (r >= 1) & (r <= H) & (c >= 1) & (c <= W)
    maskadd = jnp.asarray(np.where(valid, 0.0, -1e30)
                          .astype(np.float32).reshape(n_tiles, 4, PRW, 1))

    # --- skip-path im2col: rows = (i, j_ext), cols = 4*Cin (2x2 pool phases) ------
    sk = [xpad[:, 2 + a: 2 + a + 2 * Hh: 2, 2 + b: 2 + b + 2 * Wc: 2, :]
          for a in (0, 1) for b in (0, 1)]
    xsk_g = jnp.concatenate(sk, axis=-1)                            # (N, Hh, Wc, K3)
    xskip = jnp.stack([xsk_g[:, t * TH:(t + 1) * TH] for t in range(n_tiles)],
                      axis=1).reshape(N, n_tiles, M2, K3).astype(bf16)

    # --- folded / padded weights ---------------------------------------------------
    w1f = jnp.zeros((K1, C), f32).at[:, :Cout].set(
        jnp.transpose(w1, (2, 3, 1, 0)).reshape(K1, Cout)).astype(bf16)
    b1p = jnp.zeros((1, C), f32).at[0, :Cout].set(b1)

    # fold AvgPool2d(2) into conv2: pool(conv2(y))[i,j] = sum_{e,f} y_pad[2i+e,2j+f] @ W2eff[e,f]
    w2hwio = jnp.transpose(w2, (2, 3, 1, 0))                        # (3,3,Cout,Cout)
    taps2 = []
    for e in range(4):
        dys = [d for d in range(3) if 0 <= e - d <= 1]
        for f in range(4):
            dxs = [d for d in range(3) if 0 <= f - d <= 1]
            taps2.append(0.25 * sum(w2hwio[dy, dx] for dy in dys for dx in dxs))
    w2f = jnp.zeros((16, C, C), f32).at[:, :Cout, :Cout].set(
        jnp.stack(taps2, axis=0)).astype(bf16)

    ws_io = 0.25 * jnp.transpose(ws[:, :, 0, 0], (1, 0))            # (Cin, Cout)
    wsf = jnp.zeros((K3, C), f32).at[:, :Cout].set(
        jnp.tile(ws_io, (4, 1))).astype(bf16)
    bias2 = jnp.zeros((1, C), f32).at[0, :Cout].set(b2 + bs)

    # --- fused pallas call ---------------------------------------------------------
    kernel = functools.partial(_fused_resblock_kernel, TH=TH, Wc=Wc)
    out = pl.pallas_call(
        kernel,
        out_shape=jax.ShapeDtypeStruct((N, n_tiles, M2, C), f32),
        grid_spec=pltpu.PrefetchScalarGridSpec(
            num_scalar_prefetch=0,
            grid=(N, n_tiles),
            in_specs=[
                pl.BlockSpec((1, 1, 4, PRW, K1), lambda n, t: (n, t, 0, 0, 0)),
                pl.BlockSpec((1, 4, PRW, 1), lambda n, t: (t, 0, 0, 0)),
                pl.BlockSpec((K1, C), lambda n, t: (0, 0)),
                pl.BlockSpec((1, C), lambda n, t: (0, 0)),
                pl.BlockSpec((16, C, C), lambda n, t: (0, 0, 0)),
                pl.BlockSpec((1, C), lambda n, t: (0, 0)),
                pl.BlockSpec((1, 1, M2, K3), lambda n, t: (n, t, 0, 0)),
                pl.BlockSpec((K3, C), lambda n, t: (0, 0)),
            ],
            out_specs=pl.BlockSpec((1, 1, M2, C), lambda n, t: (n, t, 0, 0)),
            scratch_shapes=[pltpu.VMEM((4, PRW, C), bf16)],
        ),
        compiler_params=pltpu.CompilerParams(
            dimension_semantics=("parallel", "parallel"),
            vmem_limit_bytes=64 * 1024 * 1024),
    )(xcol, maskadd, w1f, b1p, w2f, bias2, xskip, wsf)

    y = out.reshape(N, n_tiles, TH, Wc, C)[:, :, :, :Wh, :Cout]
    y = y.reshape(N, Hh, Wh, Cout)
    return jnp.transpose(y, (0, 3, 1, 2))                           # back to NCHW


# --------------------------- parameter initialization ---------------------------

def _xavier_uniform(key, shape, gain):
    o, i, kh, kw = shape
    fan_in, fan_out = i * kh * kw, o * kh * kw
    bound = gain * (6.0 / (fan_in + fan_out)) ** 0.5
    return jax.random.uniform(key, shape, jnp.float32, -bound, bound)


def init_params(key, in_ch, out_ch):
    ks = jax.random.split(key, 6)
    w1 = _xavier_uniform(ks[0], (out_ch, in_ch, 3, 3), 1.0)
    w2 = _xavier_uniform(ks[1], (out_ch, out_ch, 3, 3), 1.0)
    ws = _xavier_uniform(ks[2], (out_ch, in_ch, 1, 1), 2.0 ** 0.5)

    def bias(k, fan_in, n):
        b = 1.0 / fan_in ** 0.5
        return jax.random.uniform(k, (n,), jnp.float32, -b, b)

    b1 = bias(ks[3], in_ch * 9, out_ch)
    b2 = bias(ks[4], out_ch * 9, out_ch)
    bs = bias(ks[5], in_ch * 1, out_ch)
    return dict(w1=w1, b1=b1, w2=w2, b2=b2, ws=ws, bs=bs)


# ------------------------------ pure-JAX reference -------------------------------

def reference_forward(x, p):
    def conv(z, w, b, pad):
        out = lax.conv_general_dilated(
            z, w, (1, 1), [(pad, pad), (pad, pad)],
            dimension_numbers=("NCHW", "OIHW", "NCHW"))
        return out + b.reshape(1, -1, 1, 1)

    def pool(z):
        n, c, h, w = z.shape
        return z.reshape(n, c, h // 2, 2, w // 2, 2).mean(axis=(3, 5))

    h = jax.nn.relu(conv(x, p["w1"], p["b1"], 1))
    main = pool(conv(h, p["w2"], p["b2"], 1))
    skip = conv(pool(x), p["ws"], p["bs"], 0)
    return main + skip


if __name__ == "__main__":
    key = jax.random.PRNGKey(0)
    kx, kp = jax.random.split(key)

    N, Cin, Cout, H, W = 2, 4, 8, 16, 16
    x = jax.random.normal(kx, (N, Cin, H, W), jnp.float32)
    params = init_params(kp, Cin, Cout)

    out = first_resblock_discriminator(x, params, tile_h=4)
    jax.block_until_ready(out)

    ref = reference_forward(x, params)
    assert out.shape == (N, Cout, H // 2, W // 2), out.shape
    # bf16 MXU inputs with f32 accumulation -> relaxed tolerance vs the f32 reference
    err = float(jnp.max(jnp.abs(out - ref)))
    assert err < 1e-1, err

    print("KERNEL_OK")
</pallas_src>

<mosaic_0001>
module attributes {stable_mosaic.version = 11 : i64} {
  func.func @_fused_resblock_kernel(%arg0: i32, %arg1: i32, %arg2: memref<1x1x4x60x36xbf16, #tpu.memory_space<vmem>>, %arg3: memref<1x4x60x1xf32, #tpu.memory_space<vmem>>, %arg4: memref<36x128xbf16, #tpu.memory_space<vmem>>, %arg5: memref<1x128xf32, #tpu.memory_space<vmem>>, %arg6: memref<16x128x128xbf16, #tpu.memory_space<vmem>>, %arg7: memref<1x128xf32, #tpu.memory_space<vmem>>, %arg8: memref<1x1x40x16xbf16, #tpu.memory_space<vmem>>, %arg9: memref<16x128xbf16, #tpu.memory_space<vmem>>, %arg10: memref<1x1x40x128xf32, #tpu.memory_space<vmem>>, %arg11: memref<4x60x128xbf16, #tpu.memory_space<vmem>>) attributes {dimension_semantics = [#tpu.dimension_semantics<parallel>, #tpu.dimension_semantics<parallel>], iteration_bounds = array<i64: 2, 2>, scalar_prefetch = 0 : i64, scratch_operands = 1 : i64, tpu.core_type = #tpu.core_type<tc>, window_params = [{transform_indices = @transform_0, window_bounds = array<i64: 1, 1, 4, 60, 36>}, {transform_indices = @transform_1, window_bounds = array<i64: 1, 4, 60, 1>}, {pipeline_mode = #tpu.pipeline_mode<synchronous>, transform_indices = @transform_2, window_bounds = array<i64: 36, 128>}, {pipeline_mode = #tpu.pipeline_mode<synchronous>, transform_indices = @transform_3, window_bounds = array<i64: 1, 128>}, {pipeline_mode = #tpu.pipeline_mode<synchronous>, transform_indices = @transform_4, window_bounds = array<i64: 16, 128, 128>}, {pipeline_mode = #tpu.pipeline_mode<synchronous>, transform_indices = @transform_5, window_bounds = array<i64: 1, 128>}, {transform_indices = @transform_6, window_bounds = array<i64: 1, 1, 40, 16>}, {pipeline_mode = #tpu.pipeline_mode<synchronous>, transform_indices = @transform_7, window_bounds = array<i64: 16, 128>}, {transform_indices = @transform_8, window_bounds = array<i64: 1, 1, 40, 128>}]} {
    %c0 = arith.constant 0 : index
    %c0_0 = arith.constant 0 : index
    %c0_1 = arith.constant 0 : index
    %c0_2 = arith.constant 0 : index
    %c0_3 = arith.constant 0 : index
    %0 = vector.load %arg2[%c0, %c0_0, %c0_1, %c0_2, %c0_3] : memref<1x1x4x60x36xbf16, #tpu.memory_space<vmem>>, vector<1x1x1x60x36xbf16>
    %1 = vector.shape_cast %0 : vector<1x1x1x60x36xbf16> to vector<60x36xbf16>
    %c0_4 = arith.constant 0 : index
    %c0_5 = arith.constant 0 : index
    %2 = vector.load %arg4[%c0_4, %c0_5] : memref<36x128xbf16, #tpu.memory_space<vmem>>, vector<36x128xbf16>
    %cst = arith.constant dense<0.000000e+00> : vector<60x128xf32>
    %3 = tpu.matmul %1, %2, %cst {dimension_numbers = #tpu.dot_dimension_numbers<[1], [0], [0], [1], [0, 0, 1, 1], [], []>} : vector<60x36xbf16>, vector<36x128xbf16>, vector<60x128xf32> -> vector<60x128xf32>
    %c0_6 = arith.constant 0 : index
    %c0_7 = arith.constant 0 : index
    %4 = vector.load %arg5[%c0_6, %c0_7] : memref<1x128xf32, #tpu.memory_space<vmem>>, vector<1x128xf32>
    %5 = vector.broadcast %4 : vector<1x128xf32> to vector<60x128xf32>
    %6 = arith.addf %3, %5 : vector<60x128xf32>
    %c0_8 = arith.constant 0 : index
    %c0_9 = arith.constant 0 : index
    %c0_10 = arith.constant 0 : index
    %c0_11 = arith.constant 0 : index
    %7 = vector.load %arg3[%c0_8, %c0_9, %c0_10, %c0_11] : memref<1x4x60x1xf32, #tpu.memory_space<vmem>>, vector<1x1x60x1xf32>
    %8 = vector.shape_cast %7 : vector<1x1x60x1xf32> to vector<60x1xf32>
    %9 = vector.broadcast %8 : vector<60x1xf32> to vector<60x128xf32>
    %10 = arith.addf %6, %9 : vector<60x128xf32>
    %cst_12 = arith.constant 0.000000e+00 : f32
    %11 = vector.broadcast %cst_12 : f32 to vector<60x128xf32>
    %12 = arith.maximumf %10, %11 : vector<60x128xf32>
    %13 = arith.truncf %12 : vector<60x128xf32> to vector<60x128xbf16>
    %c0_13 = arith.constant 0 : index
    %c0_14 = arith.constant 0 : index
    %c0_15 = arith.constant 0 : index
    %14 = vector.load %arg11[%c0_13, %c0_14, %c0_15] : memref<4x60x128xbf16, #tpu.memory_space<vmem>>, vector<1x60x128xbf16>
    %15 = vector.shape_cast %14 : vector<1x60x128xbf16> to vector<60x128xbf16>
    %16 = vector.shape_cast %13 : vector<60x128xbf16> to vector<1x60x128xbf16>
    tpu.vector_store %arg11[%c0_13, %c0_14, %c0_15], %16 {strides = array<i32>} : memref<4x60x128xbf16, #tpu.memory_space<vmem>>, vector<1x60x128xbf16>,
    %c0_16 = arith.constant 0 : index
    %c0_17 = arith.constant 0 : index
    %c1 = arith.constant 1 : index
    %c0_18 = arith.constant 0 : index
    %c0_19 = arith.constant 0 : index
    %17 = vector.load %arg2[%c0_16, %c0_17, %c1, %c0_18, %c0_19] : memref<1x1x4x60x36xbf16, #tpu.memory_space<vmem>>, vector<1x1x1x60x36xbf16>
    %18 = vector.shape_cast %17 : vector<1x1x1x60x36xbf16> to vector<60x36xbf16>
    %c0_20 = arith.constant 0 : index
    %c0_21 = arith.constant 0 : index
    %19 = vector.load %arg4[%c0_20, %c0_21] : memref<36x128xbf16, #tpu.memory_space<vmem>>, vector<36x128xbf16>
    %cst_22 = arith.constant dense<0.000000e+00> : vector<60x128xf32>
    %20 = tpu.matmul %18, %19, %cst_22 {dimension_numbers = #tpu.dot_dimension_numbers<[1], [0], [0], [1], [0, 0, 1, 1], [], []>} : vector<60x36xbf16>, vector<36x128xbf16>, vector<60x128xf32> -> vector<60x128xf32>
    %c0_23 = arith.constant 0 : index
    %c0_24 = arith.constant 0 : index
    %21 = vector.load %arg5[%c0_23, %c0_24] : memref<1x128xf32, #tpu.memory_space<vmem>>, vector<1x128xf32>
    %22 = vector.broadcast %21 : vector<1x128xf32> to vector<60x128xf32>
    %23 = arith.addf %20, %22 : vector<60x128xf32>
    %c0_25 = arith.constant 0 : index
    %c1_26 = arith.constant 1 : index
    %c0_27 = arith.constant 0 : index
    %c0_28 = arith.constant 0 : index
    %24 = vector.load %arg3[%c0_25, %c1_26, %c0_27, %c0_28] : memref<1x4x60x1xf32, #tpu.memory_space<vmem>>, vector<1x1x60x1xf32>
    %25 = vector.shape_cast %24 : vector<1x1x60x1xf32> to vector<60x1xf32>
    %26 = vector.broadcast %25 : vector<60x1xf32> to vector<60x128xf32>
    %27 = arith.addf %23, %26 : vector<60x128xf32>
    %cst_29 = arith.constant 0.000000e+00 : f32
    %28 = vector.broadcast %cst_29 : f32 to vector<60x128xf32>
    %29 = arith.maximumf %27, %28 : vector<60x128xf32>
    %30 = arith.truncf %29 : vector<60x128xf32> to vector<60x128xbf16>
    %c1_30 = arith.constant 1 : index
    %c0_31 = arith.constant 0 : index
    %c0_32 = arith.constant 0 : index
    %31 = vector.load %arg11[%c1_30, %c0_31, %c0_32] : memref<4x60x128xbf16, #tpu.memory_space<vmem>>, vector<1x60x128xbf16>
    %32 = vector.shape_cast %31 : vector<1x60x128xbf16> to vector<60x128xbf16>
    %33 = vector.shape_cast %30 : vector<60x128xbf16> to vector<1x60x128xbf16>
    tpu.vector_store %arg11[%c1_30, %c0_31, %c0_32], %33 {strides = array<i32>} : memref<4x60x128xbf16, #tpu.memory_space<vmem>>, vector<1x60x128xbf16>,
    %c0_33 = arith.constant 0 : index
    %c0_34 = arith.constant 0 : index
    %c2 = arith.constant 2 : index
    %c0_35 = arith.constant 0 : index
    %c0_36 = arith.constant 0 : index
    %34 = vector.load %arg2[%c0_33, %c0_34, %c2, %c0_35, %c0_36] : memref<1x1x4x60x36xbf16, #tpu.memory_space<vmem>>, vector<1x1x1x60x36xbf16>
    %35 = vector.shape_cast %34 : vector<1x1x1x60x36xbf16> to vector<60x36xbf16>
    %c0_37 = arith.constant 0 : index
    %c0_38 = arith.constant 0 : index
    %36 = vector.load %arg4[%c0_37, %c0_38] : memref<36x128xbf16, #tpu.memory_space<vmem>>, vector<36x128xbf16>
    %cst_39 = arith.constant dense<0.000000e+00> : vector<60x128xf32>
    %37 = tpu.matmul %35, %36, %cst_39 {dimension_numbers = #tpu.dot_dimension_numbers<[1], [0], [0], [1], [0, 0, 1, 1], [], []>} : vector<60x36xbf16>, vector<36x128xbf16>, vector<60x128xf32> -> vector<60x128xf32>
    %c0_40 = arith.constant 0 : index
    %c0_41 = arith.constant 0 : index
    %38 = vector.load %arg5[%c0_40, %c0_41] : memref<1x128xf32, #tpu.memory_space<vmem>>, vector<1x128xf32>
    %39 = vector.broadcast %38 : vector<1x128xf32> to vector<60x128xf32>
    %40 = arith.addf %37, %39 : vector<60x128xf32>
    %c0_42 = arith.constant 0 : index
    %c2_43 = arith.constant 2 : index
    %c0_44 = arith.constant 0 : index
    %c0_45 = arith.constant 0 : index
    %41 = vector.load %arg3[%c0_42, %c2_43, %c0_44, %c0_45] : memref<1x4x60x1xf32, #tpu.memory_space<vmem>>, vector<1x1x60x1xf32>
    %42 = vector.shape_cast %41 : vector<1x1x60x1xf32> to vector<60x1xf32>
    %43 = vector.broadcast %42 : vector<60x1xf32> to vector<60x128xf32>
    %44 = arith.addf %40, %43 : vector<60x128xf32>
    %cst_46 = arith.constant 0.000000e+00 : f32
    %45 = vector.broadcast %cst_46 : f32 to vector<60x128xf32>
    %46 = arith.maximumf %44, %45 : vector<60x128xf32>
    %47 = arith.truncf %46 : vector<60x128xf32> to vector<60x128xbf16>
    %c2_47 = arith.constant 2 : index
    %c0_48 = arith.constant 0 : index
    %c0_49 = arith.constant 0 : index
    %48 = vector.load %arg11[%c2_47, %c0_48, %c0_49] : memref<4x60x128xbf16, #tpu.memory_space<vmem>>, vector<1x60x128xbf16>
    %49 = vector.shape_cast %48 : vector<1x60x128xbf16> to vector<60x128xbf16>
    %50 = vector.shape_cast %47 : vector<60x128xbf16> to vector<1x60x128xbf16>
    tpu.vector_store %arg11[%c2_47, %c0_48, %c0_49], %50 {strides = array<i32>} : memref<4x60x128xbf16, #tpu.memory_space<vmem>>, vector<1x60x128xbf16>,
    %c0_50 = arith.constant 0 : index
    %c0_51 = arith.constant 0 : index
    %c3 = arith.constant 3 : index
    %c0_52 = arith.constant 0 : index
    %c0_53 = arith.constant 0 : index
    %51 = vector.load %arg2[%c0_50, %c0_51, %c3, %c0_52, %c0_53] : memref<1x1x4x60x36xbf16, #tpu.memory_space<vmem>>, vector<1x1x1x60x36xbf16>
    %52 = vector.shape_cast %51 : vector<1x1x1x60x36xbf16> to vector<60x36xbf16>
    %c0_54 = arith.constant 0 : index
    %c0_55 = arith.constant 0 : index
    %53 = vector.load %arg4[%c0_54, %c0_55] : memref<36x128xbf16, #tpu.memory_space<vmem>>, vector<36x128xbf16>
    %cst_56 = arith.constant dense<0.000000e+00> : vector<60x128xf32>
    %54 = tpu.matmul %52, %53, %cst_56 {dimension_numbers = #tpu.dot_dimension_numbers<[1], [0], [0], [1], [0, 0, 1, 1], [], []>} : vector<60x36xbf16>, vector<36x128xbf16>, vector<60x128xf32> -> vector<60x128xf32>
    %c0_57 = arith.constant 0 : index
    %c0_58 = arith.constant 0 : index
    %55 = vector.load %arg5[%c0_57, %c0_58] : memref<1x128xf32, #tpu.memory_space<vmem>>, vector<1x128xf32>
    %56 = vector.broadcast %55 : vector<1x128xf32> to vector<60x128xf32>
    %57 = arith.addf %54, %56 : vector<60x128xf32>
    %c0_59 = arith.constant 0 : index
    %c3_60 = arith.constant 3 : index
    %c0_61 = arith.constant 0 : index
    %c0_62 = arith.constant 0 : index
    %58 = vector.load %arg3[%c0_59, %c3_60, %c0_61, %c0_62] : memref<1x4x60x1xf32, #tpu.memory_space<vmem>>, vector<1x1x60x1xf32>
    %59 = vector.shape_cast %58 : vector<1x1x60x1xf32> to vector<60x1xf32>
    %60 = vector.broadcast %59 : vector<60x1xf32> to vector<60x128xf32>
    %61 = arith.addf %57, %60 : vector<60x128xf32>
    %cst_63 = arith.constant 0.000000e+00 : f32
    %62 = vector.broadcast %cst_63 : f32 to vector<60x128xf32>
    %63 = arith.maximumf %61, %62 : vector<60x128xf32>
    %64 = arith.truncf %63 : vector<60x128xf32> to vector<60x128xbf16>
    %c3_64 = arith.constant 3 : index
    %c0_65 = arith.constant 0 : index
    %c0_66 = arith.constant 0 : index
    %65 = vector.load %arg11[%c3_64, %c0_65, %c0_66] : memref<4x60x128xbf16, #tpu.memory_space<vmem>>, vector<1x60x128xbf16>
    %66 = vector.shape_cast %65 : vector<1x60x128xbf16> to vector<60x128xbf16>
    %67 = vector.shape_cast %64 : vector<60x128xbf16> to vector<1x60x128xbf16>
    tpu.vector_store %arg11[%c3_64, %c0_65, %c0_66], %67 {strides = array<i32>} : memref<4x60x128xbf16, #tpu.memory_space<vmem>>, vector<1x60x128xbf16>,
    %c0_67 = arith.constant 0 : index
    %c0_68 = arith.constant 0 : index
    %c0_69 = arith.constant 0 : index
    %c0_70 = arith.constant 0 : index
    %68 = vector.load %arg8[%c0_67, %c0_68, %c0_69, %c0_70] : memref<1x1x40x16xbf16, #tpu.memory_space<vmem>>, vector<1x1x40x16xbf16>
    %69 = vector.shape_cast %68 : vector<1x1x40x16xbf16> to vector<40x16xbf16>
    %c0_71 = arith.constant 0 : index
    %c0_72 = arith.constant 0 : index
    %70 = vector.load %arg9[%c0_71, %c0_72] : memref<16x128xbf16, #tpu.memory_space<vmem>>, vector<16x128xbf16>
    %cst_73 = arith.constant dense<0.000000e+00> : vector<40x128xf32>
    %71 = tpu.matmul %69, %70, %cst_73 {dimension_numbers = #tpu.dot_dimension_numbers<[1], [0], [0], [1], [0, 0, 1, 1], [], []>} : vector<40x16xbf16>, vector<16x128xbf16>, vector<40x128xf32> -> vector<40x128xf32>
    %c0_74 = arith.constant 0 : index
    %c0_75 = arith.constant 0 : index
    %72 = vector.load %arg7[%c0_74, %c0_75] : memref<1x128xf32, #tpu.memory_space<vmem>>, vector<1x128xf32>
    %73 = vector.broadcast %72 : vector<1x128xf32> to vector<40x128xf32>
    %74 = arith.addf %71, %73 : vector<40x128xf32>
    %c0_76 = arith.constant 0 : index
    %c0_77 = arith.constant 0 : index
    %c0_78 = arith.constant 0 : index
    %75 = vector.load %arg11[%c0_76, %c0_77, %c0_78] : memref<4x60x128xbf16, #tpu.memory_space<vmem>>, vector<1x40x128xbf16>
    %76 = vector.shape_cast %75 : vector<1x40x128xbf16> to vector<40x128xbf16>
    %c0_79 = arith.constant 0 : index
    %c0_80 = arith.constant 0 : index
    %c0_81 = arith.constant 0 : index
    %77 = vector.load %arg6[%c0_79, %c0_80, %c0_81] : memref<16x128x128xbf16, #tpu.memory_space<vmem>>, vector<1x128x128xbf16>
    %78 = vector.shape_cast %77 : vector<1x128x128xbf16> to vector<128x128xbf16>
    %cst_82 = arith.constant dense<0.000000e+00> : vector<40x128xf32>
    %79 = tpu.matmul %76, %78, %cst_82 {dimension_numbers = #tpu.dot_dimension_numbers<[1], [0], [0], [1], [0, 0, 1, 1], [], []>} : vector<40x128xbf16>, vector<128x128xbf16>, vector<40x128xf32> -> vector<40x128xf32>
    %80 = arith.addf %74, %79 : vector<40x128xf32>
    %c1_83 = arith.constant 1 : index
    %c0_84 = arith.constant 0 : index
    %c0_85 = arith.constant 0 : index
    %81 = vector.load %arg11[%c1_83, %c0_84, %c0_85] : memref<4x60x128xbf16, #tpu.memory_space<vmem>>, vector<1x40x128xbf16>
    %82 = vector.shape_cast %81 : vector<1x40x128xbf16> to vector<40x128xbf16>
    %c1_86 = arith.constant 1 : index
    %c0_87 = arith.constant 0 : index
    %c0_88 = arith.constant 0 : index
    %83 = vector.load %arg6[%c1_86, %c0_87, %c0_88] : memref<16x128x128xbf16, #tpu.memory_space<vmem>>, vector<1x128x128xbf16>
    %84 = vector.shape_cast %83 : vector<1x128x128xbf16> to vector<128x128xbf16>
    %cst_89 = arith.constant dense<0.000000e+00> : vector<40x128xf32>
    %85 = tpu.matmul %82, %84, %cst_89 {dimension_numbers = #tpu.dot_dimension_numbers<[1], [0], [0], [1], [0, 0, 1, 1], [], []>} : vector<40x128xbf16>, vector<128x128xbf16>, vector<40x128xf32> -> vector<40x128xf32>
    %86 = arith.addf %80, %85 : vector<40x128xf32>
    %c0_90 = arith.constant 0 : index
    %c1_91 = arith.constant 1 : index
    %c0_92 = arith.constant 0 : index
    %87 = vector.load %arg11[%c0_90, %c1_91, %c0_92] : memref<4x60x128xbf16, #tpu.memory_space<vmem>>, vector<1x40x128xbf16>
    %88 = vector.shape_cast %87 : vector<1x40x128xbf16> to vector<40x128xbf16>
    %c2_93 = arith.constant 2 : index
    %c0_94 = arith.constant 0 : index
    %c0_95 = arith.constant 0 : index
    %89 = vector.load %arg6[%c2_93, %c0_94, %c0_95] : memref<16x128x128xbf16, #tpu.memory_space<vmem>>, vector<1x128x128xbf16>
    %90 = vector.shape_cast %89 : vector<1x128x128xbf16> to vector<128x128xbf16>
    %cst_96 = arith.constant dense<0.000000e+00> : vector<40x128xf32>
    %91 = tpu.matmul %88, %90, %cst_96 {dimension_numbers = #tpu.dot_dimension_numbers<[1], [0], [0], [1], [0, 0, 1, 1], [], []>} : vector<40x128xbf16>, vector<128x128xbf16>, vector<40x128xf32> -> vector<40x128xf32>
    %92 = arith.addf %86, %91 : vector<40x128xf32>
    %c1_97 = arith.constant 1 : index
    %c1_98 = arith.constant 1 : index
    %c0_99 = arith.constant 0 : index
    %93 = vector.load %arg11[%c1_97, %c1_98, %c0_99] : memref<4x60x128xbf16, #tpu.memory_space<vmem>>, vector<1x40x128xbf16>
    %94 = vector.shape_cast %93 : vector<1x40x128xbf16> to vector<40x128xbf16>
    %c3_100 = arith.constant 3 : index
    %c0_101 = arith.constant 0 : index
    %c0_102 = arith.constant 0 : index
    %95 = vector.load %arg6[%c3_100, %c0_101, %c0_102] : memref<16x128x128xbf16, #tpu.memory_space<vmem>>, vector<1x128x128xbf16>
    %96 = vector.shape_cast %95 : vector<1x128x128xbf16> to vector<128x128xbf16>
    %cst_103 = arith.constant dense<0.000000e+00> : vector<40x128xf32>
    %97 = tpu.matmul %94, %96, %cst_103 {dimension_numbers = #tpu.dot_dimension_numbers<[1], [0], [0], [1], [0, 0, 1, 1], [], []>} : vector<40x128xbf16>, vector<128x128xbf16>, vector<40x128xf32> -> vector<40x128xf32>
    %98 = arith.addf %92, %97 : vector<40x128xf32>
    %c2_104 = arith.constant 2 : index
    %c0_105 = arith.constant 0 : index
    %c0_106 = arith.constant 0 : index
    %99 = vector.load %arg11[%c2_104, %c0_105, %c0_106] : memref<4x60x128xbf16, #tpu.memory_space<vmem>>, vector<1x40x128xbf16>
    %100 = vector.shape_cast %99 : vector<1x40x128xbf16> to vector<40x128xbf16>
    %c4 = arith.constant 4 : index
    %c0_107 = arith.constant 0 : index
    %c0_108 = arith.constant 0 : index
    %101 = vector.load %arg6[%c4, %c0_107, %c0_108] : memref<16x128x128xbf16, #tpu.memory_space<vmem>>, vector<1x128x128xbf16>
    %102 = vector.shape_cast %101 : vector<1x128x128xbf16> to vector<128x128xbf16>
    %cst_109 = arith.constant dense<0.000000e+00> : vector<40x128xf32>
    %103 = tpu.matmul %100, %102, %cst_109 {dimension_numbers = #tpu.dot_dimension_numbers<[1], [0], [0], [1], [0, 0, 1, 1], [], []>} : vector<40x128xbf16>, vector<128x128xbf16>, vector<40x128xf32> -> vector<40x128xf32>
    %104 = arith.addf %98, %103 : vector<40x128xf32>
    %c3_110 = arith.constant 3 : index
    %c0_111 = arith.constant 0 : index
    %c0_112 = arith.constant 0 : index
    %105 = vector.load %arg11[%c3_110, %c0_111, %c0_112] : memref<4x60x128xbf16, #tpu.memory_space<vmem>>, vector<1x40x128xbf16>
    %106 = vector.shape_cast %105 : vector<1x40x128xbf16> to vector<40x128xbf16>
    %c5 = arith.constant 5 : index
    %c0_113 = arith.constant 0 : index
    %c0_114 = arith.constant 0 : index
    %107 = vector.load %arg6[%c5, %c0_113, %c0_114] : memref<16x128x128xbf16, #tpu.memory_space<vmem>>, vector<1x128x128xbf16>
    %108 = vector.shape_cast %107 : vector<1x128x128xbf16> to vector<128x128xbf16>
    %cst_115 = arith.constant dense<0.000000e+00> : vector<40x128xf32>
    %109 = tpu.matmul %106, %108, %cst_115 {dimension_numbers = #tpu.dot_dimension_numbers<[1], [0], [0], [1], [0, 0, 1, 1], [], []>} : vector<40x128xbf16>, vector<128x128xbf16>, vector<40x128xf32> -> vector<40x128xf32>
    %110 = arith.addf %104, %109 : vector<40x128xf32>
    %c2_116 = arith.constant 2 : index
    %c1_117 = arith.constant 1 : index
    %c0_118 = arith.constant 0 : index
    %111 = vector.load %arg11[%c2_116, %c1_117, %c0_118] : memref<4x60x128xbf16, #tpu.memory_space<vmem>>, vector<1x40x128xbf16>
    %112 = vector.shape_cast %111 : vector<1x40x128xbf16> to vector<40x128xbf16>
    %c6 = arith.constant 6 : index
    %c0_119 = arith.constant 0 : index
    %c0_120 = arith.constant 0 : index
    %113 = vector.load %arg6[%c6, %c0_119, %c0_120] : memref<16x128x128xbf16, #tpu.memory_space<vmem>>, vector<1x128x128xbf16>
    %114 = vector.shape_cast %113 : vector<1x128x128xbf16> to vector<128x128xbf16>
    %cst_121 = arith.constant dense<0.000000e+00> : vector<40x128xf32>
    %115 = tpu.matmul %112, %114, %cst_121 {dimension_numbers = #tpu.dot_dimension_numbers<[1], [0], [0], [1], [0, 0, 1, 1], [], []>} : vector<40x128xbf16>, vector<128x128xbf16>, vector<40x128xf32> -> vector<40x128xf32>
    %116 = arith.addf %110, %115 : vector<40x128xf32>
    %c3_122 = arith.constant 3 : index
    %c1_123 = arith.constant 1 : index
    %c0_124 = arith.constant 0 : index
    %117 = vector.load %arg11[%c3_122, %c1_123, %c0_124] : memref<4x60x128xbf16, #tpu.memory_space<vmem>>, vector<1x40x128xbf16>
    %118 = vector.shape_cast %117 : vector<1x40x128xbf16> to vector<40x128xbf16>
    %c7 = arith.constant 7 : index
    %c0_125 = arith.constant 0 : index
    %c0_126 = arith.constant 0 : index
    %119 = vector.load %arg6[%c7, %c0_125, %c0_126] : memref<16x128x128xbf16, #tpu.memory_space<vmem>>, vector<1x128x128xbf16>
    %120 = vector.shape_cast %119 : vector<1x128x128xbf16> to vector<128x128xbf16>
    %cst_127 = arith.constant dense<0.000000e+00> : vector<40x128xf32>
    %121 = tpu.matmul %118, %120, %cst_127 {dimension_numbers = #tpu.dot_dimension_numbers<[1], [0], [0], [1], [0, 0, 1, 1], [], []>} : vector<40x128xbf16>, vector<128x128xbf16>, vector<40x128xf32> -> vector<40x128xf32>
    %122 = arith.addf %116, %121 : vector<40x128xf32>
    %c0_128 = arith.constant 0 : index
    %c10 = arith.constant 10 : index
    %c0_129 = arith.constant 0 : index
    %123 = vector.load %arg11[%c0_128, %c10, %c0_129] : memref<4x60x128xbf16, #tpu.memory_space<vmem>>, vector<1x40x128xbf16>
    %124 = vector.shape_cast %123 : vector<1x40x128xbf16> to vector<40x128xbf16>
    %c8 = arith.constant 8 : index
    %c0_130 = arith.constant 0 : index
    %c0_131 = arith.constant 0 : index
    %125 = vector.load %arg6[%c8, %c0_130, %c0_131] : memref<16x128x128xbf16, #tpu.memory_space<vmem>>, vector<1x128x128xbf16>
    %126 = vector.shape_cast %125 : vector<1x128x128xbf16> to vector<128x128xbf16>
    %cst_132 = arith.constant dense<0.000000e+00> : vector<40x128xf32>
    %127 = tpu.matmul %124, %126, %cst_132 {dimension_numbers = #tpu.dot_dimension_numbers<[1], [0], [0], [1], [0, 0, 1, 1], [], []>} : vector<40x128xbf16>, vector<128x128xbf16>, vector<40x128xf32> -> vector<40x128xf32>
    %128 = arith.addf %122, %127 : vector<40x128xf32>
    %c1_133 = arith.constant 1 : index
    %c10_134 = arith.constant 10 : index
    %c0_135 = arith.constant 0 : index
    %129 = vector.load %arg11[%c1_133, %c10_134, %c0_135] : memref<4x60x128xbf16, #tpu.memory_space<vmem>>, vector<1x40x128xbf16>
    %130 = vector.shape_cast %129 : vector<1x40x128xbf16> to vector<40x128xbf16>
    %c9 = arith.constant 9 : index
    %c0_136 = arith.constant 0 : index
    %c0_137 = arith.constant 0 : index
    %131 = vector.load %arg6[%c9, %c0_136, %c0_137] : memref<16x128x128xbf16, #tpu.memory_space<vmem>>, vector<1x128x128xbf16>
    %132 = vector.shape_cast %131 : vector<1x128x128xbf16> to vector<128x128xbf16>
    %cst_138 = arith.constant dense<0.000000e+00> : vector<40x128xf32>
    %133 = tpu.matmul %130, %132, %cst_138 {dimension_numbers = #tpu.dot_dimension_numbers<[1], [0], [0], [1], [0, 0, 1, 1], [], []>} : vector<40x128xbf16>, vector<128x128xbf16>, vector<40x128xf32> -> vector<40x128xf32>
    %134 = arith.addf %128, %133 : vector<40x128xf32>
    %c0_139 = arith.constant 0 : index
    %c11 = arith.constant 11 : index
    %c0_140 = arith.constant 0 : index
    %135 = vector.load %arg11[%c0_139, %c11, %c0_140] : memref<4x60x128xbf16, #tpu.memory_space<vmem>>, vector<1x40x128xbf16>
    %136 = vector.shape_cast %135 : vector<1x40x128xbf16> to vector<40x128xbf16>
    %c10_141 = arith.constant 10 : index
    %c0_142 = arith.constant 0 : index
    %c0_143 = arith.constant 0 : index
    %137 = vector.load %arg6[%c10_141, %c0_142, %c0_143] : memref<16x128x128xbf16, #tpu.memory_space<vmem>>, vector<1x128x128xbf16>
    %138 = vector.shape_cast %137 : vector<1x128x128xbf16> to vector<128x128xbf16>
    %cst_144 = arith.constant dense<0.000000e+00> : vector<40x128xf32>
    %139 = tpu.matmul %136, %138, %cst_144 {dimension_numbers = #tpu.dot_dimension_numbers<[1], [0], [0], [1], [0, 0, 1, 1], [], []>} : vector<40x128xbf16>, vector<128x128xbf16>, vector<40x128xf32> -> vector<40x128xf32>
    %140 = arith.addf %134, %139 : vector<40x128xf32>
    %c1_145 = arith.constant 1 : index
    %c11_146 = arith.constant 11 : index
    %c0_147 = arith.constant 0 : index
    %141 = vector.load %arg11[%c1_145, %c11_146, %c0_147] : memref<4x60x128xbf16, #tpu.memory_space<vmem>>, vector<1x40x128xbf16>
    %142 = vector.shape_cast %141 : vector<1x40x128xbf16> to vector<40x128xbf16>
    %c11_148 = arith.constant 11 : index
    %c0_149 = arith.constant 0 : index
    %c0_150 = arith.constant 0 : index
    %143 = vector.load %arg6[%c11_148, %c0_149, %c0_150] : memref<16x128x128xbf16, #tpu.memory_space<vmem>>, vector<1x128x128xbf16>
    %144 = vector.shape_cast %143 : vector<1x128x128xbf16> to vector<128x128xbf16>
    %cst_151 = arith.constant dense<0.000000e+00> : vector<40x128xf32>
    %145 = tpu.matmul %142, %144, %cst_151 {dimension_numbers = #tpu.dot_dimension_numbers<[1], [0], [0], [1], [0, 0, 1, 1], [], []>} : vector<40x128xbf16>, vector<128x128xbf16>, vector<40x128xf32> -> vector<40x128xf32>
    %146 = arith.addf %140, %145 : vector<40x128xf32>
    %c2_152 = arith.constant 2 : index
    %c10_153 = arith.constant 10 : index
    %c0_154 = arith.constant 0 : index
    %147 = vector.load %arg11[%c2_152, %c10_153, %c0_154] : memref<4x60x128xbf16, #tpu.memory_space<vmem>>, vector<1x40x128xbf16>
    %148 = vector.shape_cast %147 : vector<1x40x128xbf16> to vector<40x128xbf16>
    %c12 = arith.constant 12 : index
    %c0_155 = arith.constant 0 : index
    %c0_156 = arith.constant 0 : index
    %149 = vector.load %arg6[%c12, %c0_155, %c0_156] : memref<16x128x128xbf16, #tpu.memory_space<vmem>>, vector<1x128x128xbf16>
    %150 = vector.shape_cast %149 : vector<1x128x128xbf16> to vector<128x128xbf16>
    %cst_157 = arith.constant dense<0.000000e+00> : vector<40x128xf32>
    %151 = tpu.matmul %148, %150, %cst_157 {dimension_numbers = #tpu.dot_dimension_numbers<[1], [0], [0], [1], [0, 0, 1, 1], [], []>} : vector<40x128xbf16>, vector<128x128xbf16>, vector<40x128xf32> -> vector<40x128xf32>
    %152 = arith.addf %146, %151 : vector<40x128xf32>
    %c3_158 = arith.constant 3 : index
    %c10_159 = arith.constant 10 : index
    %c0_160 = arith.constant 0 : index
    %153 = vector.load %arg11[%c3_158, %c10_159, %c0_160] : memref<4x60x128xbf16, #tpu.memory_space<vmem>>, vector<1x40x128xbf16>
    %154 = vector.shape_cast %153 : vector<1x40x128xbf16> to vector<40x128xbf16>
    %c13 = arith.constant 13 : index
    %c0_161 = arith.constant 0 : index
    %c0_162 = arith.constant 0 : index
    %155 = vector.load %arg6[%c13, %c0_161, %c0_162] : memref<16x128x128xbf16, #tpu.memory_space<vmem>>, vector<1x128x128xbf16>
    %156 = vector.shape_cast %155 : vector<1x128x128xbf16> to vector<128x128xbf16>
    %cst_163 = arith.constant dense<0.000000e+00> : vector<40x128xf32>
    %157 = tpu.matmul %154, %156, %cst_163 {dimension_numbers = #tpu.dot_dimension_numbers<[1], [0], [0], [1], [0, 0, 1, 1], [], []>} : vector<40x128xbf16>, vector<128x128xbf16>, vector<40x128xf32> -> vector<40x128xf32>
    %158 = arith.addf %152, %157 : vector<40x128xf32>
    %c2_164 = arith.constant 2 : index
    %c11_165 = arith.constant 11 : index
    %c0_166 = arith.constant 0 : index
    %159 = vector.load %arg11[%c2_164, %c11_165, %c0_166] : memref<4x60x128xbf16, #tpu.memory_space<vmem>>, vector<1x40x128xbf16>
    %160 = vector.shape_cast %159 : vector<1x40x128xbf16> to vector<40x128xbf16>
    %c14 = arith.constant 14 : index
    %c0_167 = arith.constant 0 : index
    %c0_168 = arith.constant 0 : index
    %161 = vector.load %arg6[%c14, %c0_167, %c0_168] : memref<16x128x128xbf16, #tpu.memory_space<vmem>>, vector<1x128x128xbf16>
    %162 = vector.shape_cast %161 : vector<1x128x128xbf16> to vector<128x128xbf16>
    %cst_169 = arith.constant dense<0.000000e+00> : vector<40x128xf32>
    %163 = tpu.matmul %160, %162, %cst_169 {dimension_numbers = #tpu.dot_dimension_numbers<[1], [0], [0], [1], [0, 0, 1, 1], [], []>} : vector<40x128xbf16>, vector<128x128xbf16>, vector<40x128xf32> -> vector<40x128xf32>
    %164 = arith.addf %158, %163 : vector<40x128xf32>
    %c3_170 = arith.constant 3 : index
    %c11_171 = arith.constant 11 : index
    %c0_172 = arith.constant 0 : index
    %165 = vector.load %arg11[%c3_170, %c11_171, %c0_172] : memref<4x60x128xbf16, #tpu.memory_space<vmem>>, vector<1x40x128xbf16>
    %166 = vector.shape_cast %165 : vector<1x40x128xbf16> to vector<40x128xbf16>
    %c15 = arith.constant 15 : index
    %c0_173 = arith.constant 0 : index
    %c0_174 = arith.constant 0 : index
    %167 = vector.load %arg6[%c15, %c0_173, %c0_174] : memref<16x128x128xbf16, #tpu.memory_space<vmem>>, vector<1x128x128xbf16>
    %168 = vector.shape_cast %167 : vector<1x128x128xbf16> to vector<128x128xbf16>
    %cst_175 = arith.constant dense<0.000000e+00> : vector<40x128xf32>
    %169 = tpu.matmul %166, %168, %cst_175 {dimension_numbers = #tpu.dot_dimension_numbers<[1], [0], [0], [1], [0, 0, 1, 1], [], []>} : vector<40x128xbf16>, vector<128x128xbf16>, vector<40x128xf32> -> vector<40x128xf32>
    %170 = arith.addf %164, %169 : vector<40x128xf32>
    %c0_176 = arith.constant 0 : index
    %c0_177 = arith.constant 0 : index
    %c0_178 = arith.constant 0 : index
    %c0_179 = arith.constant 0 : index
    %171 = vector.load %arg10[%c0_176, %c0_177, %c0_178, %c0_179] : memref<1x1x40x128xf32, #tpu.memory_space<vmem>>, vector<1x1x40x128xf32>
    %172 = vector.shape_cast %171 : vector<1x1x40x128xf32> to vector<40x128xf32>
    %173 = vector.shape_cast %170 : vector<40x128xf32> to vector<1x1x40x128xf32>
    tpu.vector_store %arg10[%c0_176, %c0_177, %c0_178, %c0_179], %173 {strides = array<i32>} : memref<1x1x40x128xf32, #tpu.memory_space<vmem>>, vector<1x1x40x128xf32>,
    return
  }
  func.func @transform_0(%arg0: i32, %arg1: i32) -> (i32, i32, i32, i32, i32) {
    %c0_i32 = arith.constant 0 : i32
    %c0_i32_0 = arith.constant 0 : i32
    %c0_i32_1 = arith.constant 0 : i32
    %c0_i32_2 = arith.constant 0 : i32
    return %arg0, %arg1, %c0_i32, %c0_i32_0, %c0_i32_1 : i32, i32, i32, i32, i32
  }
  func.func @transform_1(%arg0: i32, %arg1: i32) -> (i32, i32, i32, i32) {
    %c0_i32 = arith.constant 0 : i32
    %c0_i32_0 = arith.constant 0 : i32
    %c0_i32_1 = arith.constant 0 : i32
    %c0_i32_2 = arith.constant 0 : i32
    return %arg1, %c0_i32, %c0_i32_0, %c0_i32_1 : i32, i32, i32, i32
  }
  func.func @transform_2(%arg0: i32, %arg1: i32) -> (i32, i32) {
    %c0_i32 = arith.constant 0 : i32
    %c0_i32_0 = arith.constant 0 : i32
    %c0_i32_1 = arith.constant 0 : i32
    return %c0_i32, %c0_i32_0 : i32, i32
  }
  func.func @transform_3(%arg0: i32, %arg1: i32) -> (i32, i32) {
    %c0_i32 = arith.constant 0 : i32
    %c0_i32_0 = arith.constant 0 : i32
    %c0_i32_1 = arith.constant 0 : i32
    return %c0_i32, %c0_i32_0 : i32, i32
  }
  func.func @transform_4(%arg0: i32, %arg1: i32) -> (i32, i32, i32) {
    %c0_i32 = arith.constant 0 : i32
    %c0_i32_0 = arith.constant 0 : i32
    %c0_i32_1 = arith.constant 0 : i32
    %c0_i32_2 = arith.constant 0 : i32
    return %c0_i32, %c0_i32_0, %c0_i32_1 : i32, i32, i32
  }
  func.func @transform_5(%arg0: i32, %arg1: i32) -> (i32, i32) {
    %c0_i32 = arith.constant 0 : i32
    %c0_i32_0 = arith.constant 0 : i32
    %c0_i32_1 = arith.constant 0 : i32
    return %c0_i32, %c0_i32_0 : i32, i32
  }
  func.func @transform_6(%arg0: i32, %arg1: i32) -> (i32, i32, i32, i32) {
    %c0_i32 = arith.constant 0 : i32
    %c0_i32_0 = arith.constant 0 : i32
    %c0_i32_1 = arith.constant 0 : i32
    return %arg0, %arg1, %c0_i32, %c0_i32_0 : i32, i32, i32, i32
  }
  func.func @transform_7(%arg0: i32, %arg1: i32) -> (i32, i32) {
    %c0_i32 = arith.constant 0 : i32
    %c0_i32_0 = arith.constant 0 : i32
    %c0_i32_1 = arith.constant 0 : i32
    return %c0_i32, %c0_i32_0 : i32, i32
  }
  func.func @transform_8(%arg0: i32, %arg1: i32) -> (i32, i32, i32, i32) {
    %c0_i32 = arith.constant 0 : i32
    %c0_i32_0 = arith.constant 0 : i32
    %c0_i32_1 = arith.constant 0 : i32
    return %arg0, %arg1, %c0_i32, %c0_i32_0 : i32, i32, i32, i32
  }
}

</mosaic_0001>

<llo_original>
// kernel: tpu_custom_call.1
$region0: #{tpu_custom_call.1}
  #allocation0 [shape = 'u32[]', space=smem, size = 0x4, offset = 0x4, fixed_abs, tag = 'smem constant byte address 0x4 - core index']
  #allocation1 [shape = 'u32[144,128]{1,0:T(1,128)}', space=vmem, size = 0x12000, scoped, tag = 'internal scratch']
  #allocation2 [shape = 'bf16[4,60,128]{2,1,0:T(8,128)(2,1)}', space=vmem, size = 0x10000, scoped, tag = 'scratch operand']
  %s0 = inlined_call_operand.hbm [shape: bf16[2,2,4,60,36], index: 0, kind: input, shape index: {}]
  %s1 = inlined_call_operand.hbm [shape: f32[2,4,60,1], index: 1, kind: input, shape index: {}]
  %s2 = inlined_call_operand.hbm [shape: bf16[36,128], index: 2, kind: input, shape index: {}]
  %s3 = inlined_call_operand.hbm [shape: f32[1,128], index: 3, kind: input, shape index: {}]
  %s4 = inlined_call_operand.hbm [shape: bf16[16,128,128], index: 4, kind: input, shape index: {}]
  %s5 = inlined_call_operand.hbm [shape: f32[1,128], index: 5, kind: input, shape index: {}]
  %s6 = inlined_call_operand.hbm [shape: bf16[2,2,40,16], index: 6, kind: input, shape index: {}]
  %s7 = inlined_call_operand.hbm [shape: bf16[16,128], index: 7, kind: input, shape index: {}]
  %s8 = inlined_call_operand.hbm [shape: f32[2,2,40,128], index: 8, kind: output, shape index: {}]
  %s9 = sld [smem:[#allocation0]]
  $region97: #{tpu_custom_call.1} parent=0
    _
  %s11 = ssub.s32 1, %s9
  %s12 = scalar_select 0, %s11, %s9
  $region1: #{tpu_custom_call.1} parent=0
    #allocation3 [shape = 'u8[131072]{0}', space=vmem, size = 0x20000, scoped, tag = 'input window, operand 0']
    #allocation4 [shape = 's32[2]{0}', space=sflag, size = 0x8, scoped, tag = 'scoped memory for tpu_custom_call.1']
    #allocation5 [shape = 's32[2]{0}', space=sflag, size = 0x8, scoped, tag = 'scoped memory for tpu_custom_call.1']
    #allocation6 [shape = 'u8[262144]{0}', space=vmem, size = 0x40000, scoped, tag = 'input window, operand 1']
    #allocation7 [shape = 's32[2]{0}', space=sflag, size = 0x8, scoped, tag = 'scoped memory for tpu_custom_call.1']
    #allocation8 [shape = 'u8[10240]{0}', space=vmem, size = 0x2800, scoped, tag = 'input window, operand 2, single buffered']
    #allocation9 [shape = 'u8[512]{0}', space=vmem, size = 0x400, scoped, tag = 'input window, operand 3, single buffered']
    #allocation10 [shape = 's32[1]{0}', space=sflag, size = 0x4, scoped, tag = 'scoped memory for tpu_custom_call.1']
    #allocation11 [shape = 'u8[524288]{0}', space=vmem, size = 0x80000, scoped, tag = 'input window, operand 4, single buffered']
    #allocation12 [shape = 'u8[512]{0}', space=vmem, size = 0x400, scoped, tag = 'input window, operand 5, single buffered']
    #allocation13 [shape = 's32[1]{0}', space=sflag, size = 0x4, scoped, tag = 'scoped memory for tpu_custom_call.1']
    #allocation14 [shape = 'u8[20480]{0}', space=vmem, size = 0x5000, scoped, tag = 'input window, operand 6']
    #allocation15 [shape = 'u8[4096]{0}', space=vmem, size = 0x1000, scoped, tag = 'input window, operand 7, single buffered']
    #allocation16 [shape = 'u8[40960]{0}', space=vmem, size = 0xa000, scoped, tag = 'output window, operand 0']
    %13 = vsyncpa [#allocation4], 0
    %s14 = scalar_lea.sflag [#allocation4], 1
    %15 = vsyncpa %s14, 0
    %16 = vsyncpa [#allocation7], 0
    %s17 = scalar_lea.sflag [#allocation7], 1
    %18 = vsyncpa %s17, 0
    %19 = vsyncpa [#allocation10], 0
    %20 = vsyncpa [#allocation13], 0
    %21 = vsyncpa [#allocation5], 0
    %s22 = scalar_lea.sflag [#allocation5], 1
    %23 = vsyncpa %s22, 0
    loop: start=0, step=1, limit=6
    $region2: #{tpu_custom_call.1} parent=1 // loop_pre_header
      _
    $region3: #{tpu_custom_call.1} parent=1 // loop_header
      %s25 = sphi 0, %s29
      %p26 = scmp.ge.s32.totalorder %s25, 6
      %s32 = sphi 0, %s44
      %s33 = sphi 0, %s40
      %s34 = sphi 0, %s32
      %s35 = sphi 0, %s33
      %s36 = sphi 0, %s34
      %s37 = sphi 0, %s35
      %s49 = sphi 0, %s51
      %s52 = sphi 0, %s49
      %s53 = sphi 0, %s52
      %s69 = sphi 0, %s53
      %s75 = sphi 0, %s77
      %s78 = sphi 0, %s75
      %s79 = sphi 0, %s78
      %s95 = sphi 0, %s79
      %s99 = sphi 0, %s99
      %s101 = sphi 0, %s99
      %s102 = sphi 0, %s101
      %s116 = sphi 0, %s102
      %s120 = sphi 0, %s120
      %s122 = sphi 0, %s120
      %s123 = sphi 0, %s122
      %s137 = sphi 0, %s123
      %s141 = sphi 0, %s141
      %s143 = sphi 0, %s141
      %s144 = sphi 0, %s143
      %s158 = sphi 0, %s144
      %s162 = sphi 0, %s162
      %s164 = sphi 0, %s162
      %s165 = sphi 0, %s164
      %s179 = sphi 0, %s165
      %s187 = sphi 0, %s189
      %s190 = sphi 0, %s187
      %s191 = sphi 0, %s190
      %s207 = sphi 0, %s191
      %s211 = sphi 0, %s211
      %s213 = sphi 0, %s211
      %s214 = sphi 0, %s213
      %s228 = sphi 0, %s214
      %s236 = sphi 0, %s238
      %s239 = sphi 0, %s236
      %s240 = sphi 0, %s239
      %s256 = sphi 0, %s240
    $region4: #{tpu_custom_call.1} parent=1 // loop_header_branch
      %28 = sbr.rel (%p26) target = $region8
    $region5: #{tpu_custom_call.1} parent=1 // loop_body
      %s30 = ssub.s32 %s25, 1
      %s31 = ssub.s32 %s25, 2
      %s38 = sadd.s32 1, %s33
      %p39 = scmp.ge.s32.totalorder %s38, 2
      %s40 = scalar_select %p39, 0, %s38
      %s41 = sadd.s32 1, %s32
      %s42 = scalar_select %p39, %s41, %s32
      %p43 = scmp.ge.s32.totalorder %s42, 2
      %s44 = scalar_select %p43, 0, %s42
      %s45 = ssub.s32 %s32, %s44
      %s46 = ssub.s32 %s33, %s40
      %s47 = sor.u32 %s45, %s46
      %p48 = scmp.eq.s32.totalorder %s47, 0
      %s50 = sadd.s32 %s49, 1
      %s51 = scalar_select %p48, %s49, %s50
      %p54 = pneg %p48
      %p55 = scmp.eq.s32.totalorder %s25, 3
      %p56 = por %p54, %p55
      %p57 = scmp.ne.s32.totalorder %s49, %s52
      %p58 = scmp.eq.s32.totalorder %s25, 0
      %p59 = por %p57, %p58
      %p60 = scmp.ne.s32.totalorder %s49, %s52
      %p61 = scmp.eq.s32.totalorder %s30, 3
      %p62 = por %p60, %p61
      %p63 = scmp.ne.s32.totalorder %s52, %s53
      %p64 = scmp.eq.s32.totalorder %s30, 0
      %p65 = por %p63, %p64
      %p66 = scmp.ne.s32.totalorder %s52, %s53
      %p67 = scmp.eq.s32.totalorder %s31, 3
      %p68 = por %p66, %p67
      %p70 = scmp.ne.s32.totalorder %s53, %s69
      %p71 = scmp.eq.s32.totalorder %s31, 0
      %p72 = por %p70, %p71
      %s73 = ssub.s32 %s33, %s40
      %p74 = scmp.eq.s32.totalorder %s73, 0
      %s76 = sadd.s32 %s75, 1
      %s77 = scalar_select %p74, %s75, %s76
      %p80 = pneg %p74
      %p81 = scmp.eq.s32.totalorder %s25, 3
      %p82 = por %p80, %p81
      %p83 = scmp.ne.s32.totalorder %s75, %s78
      %p84 = scmp.eq.s32.totalorder %s25, 0
      %p85 = por %p83, %p84
      %p86 = scmp.ne.s32.totalorder %s75, %s78
      %p87 = scmp.eq.s32.totalorder %s30, 3
      %p88 = por %p86, %p87
      %p89 = scmp.ne.s32.totalorder %s78, %s79
      %p90 = scmp.eq.s32.totalorder %s30, 0
      %p91 = por %p89, %p90
      %p92 = scmp.ne.s32.totalorder %s78, %s79
      %p93 = scmp.eq.s32.totalorder %s31, 3
      %p94 = por %p92, %p93
      %p96 = scmp.ne.s32.totalorder %s79, %s95
      %p97 = scmp.eq.s32.totalorder %s31, 0
      %p98 = por %p96, %p97
      %s100 = sadd.s32 %s99, 1
      %p103 = scmp.eq.s32.totalorder %s25, 3
      %p104 = scmp.ne.s32.totalorder %s99, %s101
      %p105 = scmp.eq.s32.totalorder %s25, 0
      %p106 = por %p104, %p105
      %p107 = scmp.ne.s32.totalorder %s99, %s101
      %p108 = scmp.eq.s32.totalorder %s30, 3
      %p109 = por %p107, %p108
      %p110 = scmp.ne.s32.totalorder %s101, %s102
      %p111 = scmp.eq.s32.totalorder %s30, 0
      %p112 = por %p110, %p111
      %p113 = scmp.ne.s32.totalorder %s101, %s102
      %p114 = scmp.eq.s32.totalorder %s31, 3
      %p115 = por %p113, %p114
      %p117 = scmp.ne.s32.totalorder %s102, %s116
      %p118 = scmp.eq.s32.totalorder %s31, 0
      %p119 = por %p117, %p118
      %s121 = sadd.s32 %s120, 1
      %p124 = scmp.eq.s32.totalorder %s25, 3
      %p125 = scmp.ne.s32.totalorder %s120, %s122
      %p126 = scmp.eq.s32.totalorder %s25, 0
      %p127 = por %p125, %p126
      %p128 = scmp.ne.s32.totalorder %s120, %s122
      %p129 = scmp.eq.s32.totalorder %s30, 3
      %p130 = por %p128, %p129
      %p131 = scmp.ne.s32.totalorder %s122, %s123
      %p132 = scmp.eq.s32.totalorder %s30, 0
      %p133 = por %p131, %p132
      %p134 = scmp.ne.s32.totalorder %s122, %s123
      %p135 = scmp.eq.s32.totalorder %s31, 3
      %p136 = por %p134, %p135
      %p138 = scmp.ne.s32.totalorder %s123, %s137
      %p139 = scmp.eq.s32.totalorder %s31, 0
      %p140 = por %p138, %p139
      %s142 = sadd.s32 %s141, 1
      %p145 = scmp.eq.s32.totalorder %s25, 3
      %p146 = scmp.ne.s32.totalorder %s141, %s143
      %p147 = scmp.eq.s32.totalorder %s25, 0
      %p148 = por %p146, %p147
      %p149 = scmp.ne.s32.totalorder %s141, %s143
      %p150 = scmp.eq.s32.totalorder %s30, 3
      %p151 = por %p149, %p150
      %p152 = scmp.ne.s32.totalorder %s143, %s144
      %p153 = scmp.eq.s32.totalorder %s30, 0
      %p154 = por %p152, %p153
      %p155 = scmp.ne.s32.totalorder %s143, %s144
      %p156 = scmp.eq.s32.totalorder %s31, 3
      %p157 = por %p155, %p156
      %p159 = scmp.ne.s32.totalorder %s144, %s158
      %p160 = scmp.eq.s32.totalorder %s31, 0
      %p161 = por %p159, %p160
      %s163 = sadd.s32 %s162, 1
      %p166 = scmp.eq.s32.totalorder %s25, 3
      %p167 = scmp.ne.s32.totalorder %s162, %s164
      %p168 = scmp.eq.s32.totalorder %s25, 0
      %p169 = por %p167, %p168
      %p170 = scmp.ne.s32.totalorder %s162, %s164
      %p171 = scmp.eq.s32.totalorder %s30, 3
      %p172 = por %p170, %p171
      %p173 = scmp.ne.s32.totalorder %s164, %s165
      %p174 = scmp.eq.s32.totalorder %s30, 0
      %p175 = por %p173, %p174
      %p176 = scmp.ne.s32.totalorder %s164, %s165
      %p177 = scmp.eq.s32.totalorder %s31, 3
      %p178 = por %p176, %p177
      %p180 = scmp.ne.s32.totalorder %s165, %s179
      %p181 = scmp.eq.s32.totalorder %s31, 0
      %p182 = por %p180, %p181
      %s183 = ssub.s32 %s32, %s44
      %s184 = ssub.s32 %s33, %s40
      %s185 = sor.u32 %s183, %s184
      %p186 = scmp.eq.s32.totalorder %s185, 0
      %s188 = sadd.s32 %s187, 1
      %s189 = scalar_select %p186, %s187, %s188
      %p192 = pneg %p186
      %p193 = scmp.eq.s32.totalorder %s25, 3
      %p194 = por %p192, %p193
      %p195 = scmp.ne.s32.totalorder %s187, %s190
      %p196 = scmp.eq.s32.totalorder %s25, 0
      %p197 = por %p195, %p196
      %p198 = scmp.ne.s32.totalorder %s187, %s190
      %p199 = scmp.eq.s32.totalorder %s30, 3
      %p200 = por %p198, %p199
      %p201 = scmp.ne.s32.totalorder %s190, %s191
      %p202 = scmp.eq.s32.totalorder %s30, 0
      %p203 = por %p201, %p202
      %p204 = scmp.ne.s32.totalorder %s190, %s191
      %p205 = scmp.eq.s32.totalorder %s31, 3
      %p206 = por %p204, %p205
      %p208 = scmp.ne.s32.totalorder %s191, %s207
      %p209 = scmp.eq.s32.totalorder %s31, 0
      %p210 = por %p208, %p209
      %s212 = sadd.s32 %s211, 1
      %p215 = scmp.eq.s32.totalorder %s25, 3
      %p216 = scmp.ne.s32.totalorder %s211, %s213
      %p217 = scmp.eq.s32.totalorder %s25, 0
      %p218 = por %p216, %p217
      %p219 = scmp.ne.s32.totalorder %s211, %s213
      %p220 = scmp.eq.s32.totalorder %s30, 3
      %p221 = por %p219, %p220
      %p222 = scmp.ne.s32.totalorder %s213, %s214
      %p223 = scmp.eq.s32.totalorder %s30, 0
      %p224 = por %p222, %p223
      %p225 = scmp.ne.s32.totalorder %s213, %s214
      %p226 = scmp.eq.s32.totalorder %s31, 3
      %p227 = por %p225, %p226
      %p229 = scmp.ne.s32.totalorder %s214, %s228
      %p230 = scmp.eq.s32.totalorder %s31, 0
      %p231 = por %p229, %p230
      %s232 = ssub.s32 %s32, %s44
      %s233 = ssub.s32 %s33, %s40
      %s234 = sor.u32 %s232, %s233
      %p235 = scmp.eq.s32.totalorder %s234, 0
      %s237 = sadd.s32 %s236, 1
      %s238 = scalar_select %p235, %s236, %s237
      %p241 = pneg %p235
      %p242 = scmp.eq.s32.totalorder %s25, 3
      %p243 = por %p241, %p242
      %p244 = scmp.ne.s32.totalorder %s236, %s239
      %p245 = scmp.eq.s32.totalorder %s25, 0
      %p246 = por %p244, %p245
      %p247 = scmp.ne.s32.totalorder %s236, %s239
      %p248 = scmp.eq.s32.totalorder %s30, 3
      %p249 = por %p247, %p248
      %p250 = scmp.ne.s32.totalorder %s239, %s240
      %p251 = scmp.eq.s32.totalorder %s30, 0
      %p252 = por %p250, %p251
      %p253 = scmp.ne.s32.totalorder %s239, %s240
      %p254 = scmp.eq.s32.totalorder %s31, 3
      %p255 = por %p253, %p254
      %p257 = scmp.ne.s32.totalorder %s240, %s256
      %p258 = scmp.eq.s32.totalorder %s31, 0
      %p259 = por %p257, %p258
      %p260 = scmp.le.s32.totalorder 1, %s25
      %p261 = scmp.lt.s32.totalorder %s25, 5
      %p262 = pnand %p260, %p261
      %p263 = pneg %p262
      // Predicated region
      $region9: #{tpu_custom_call.1} parent=5 // pred_check
        _
      $region10: #{tpu_custom_call.1} parent=5 // pred_check_branch
        %265 = sbr.rel (%p262) target = $region12
      $region11: #{tpu_custom_call.1} parent=5 // pred_region
        %s266 = ssub.s32 %s25, 1
        // Predicated region
        $region13: #{tpu_custom_call.1} parent=11 // pred_check
          %p267 = pneg %p112
        $region14: #{tpu_custom_call.1} parent=11 // pred_check_branch
          %269 = sbr.rel (%p267) target = $region16
        $region15: #{tpu_custom_call.1} parent=11 // pred_region
          %s271 = ssub.s32 320, 320
          %272 = vsyncadd [#allocation7], %s271
          %s273 = sshll.u32 [#allocation8], 4
          %s274 = int_to_ptr.vmem [resolvable:$true] %s273
          %279 = dma.hbm_to_vmem [thread:$0]  %s2, 320, %s274, [#allocation7], 64, 64, 4
        $region16: #{tpu_custom_call.1} parent=11 // pred_fallthru
          _
        // Predicated region
        $region17: #{tpu_custom_call.1} parent=11 // pred_check
          %p280 = pneg %p133
        $region18: #{tpu_custom_call.1} parent=11 // pred_check_branch
          %282 = sbr.rel (%p280) target = $region20
        $region19: #{tpu_custom_call.1} parent=11 // pred_region
          %s284 = ssub.s32 16, 16
          %285 = vsyncadd [#allocation10], %s284
          %s287 = sshll.u32 [#allocation9], 4
          %s288 = int_to_ptr.vmem [resolvable:$true] %s287
          %290 = dma.hbm_to_vmem [thread:$0]  %s3, 16, %s288, [#allocation10]
        $region20: #{tpu_custom_call.1} parent=11 // pred_fallthru
          _
        // Predicated region
        $region21: #{tpu_custom_call.1} parent=11 // pred_check
          %p291 = pneg %p154
        $region22: #{tpu_custom_call.1} parent=11 // pred_check_branch
          %293 = sbr.rel (%p291) target = $region24
        $region23: #{tpu_custom_call.1} parent=11 // pred_region
          %s295 = ssub.s32 16384, 16384
          %296 = vsyncadd [#allocation10], %s295
          %s297 = sshll.u32 [#allocation11], 4
          %s298 = int_to_ptr.vmem [resolvable:$true] %s297
          %303 = dma.hbm_to_vmem [thread:$0]  %s4, 16384, %s298, [#allocation10], 64, 64, 4
        $region24: #{tpu_custom_call.1} parent=11 // pred_fallthru
          _
        // Predicated region
        $region25: #{tpu_custom_call.1} parent=11 // pred_check
          %p304 = pneg %p175
        $region26: #{tpu_custom_call.1} parent=11 // pred_check_branch
          %306 = sbr.rel (%p304) target = $region28
        $region27: #{tpu_custom_call.1} parent=11 // pred_region
          %s308 = ssub.s32 16, 16
          %309 = vsyncadd [#allocation13], %s308
          %s311 = sshll.u32 [#allocation12], 4
          %s312 = int_to_ptr.vmem [resolvable:$true] %s311
          %314 = dma.hbm_to_vmem [thread:$0]  %s5, 16, %s312, [#allocation13]
        $region28: #{tpu_custom_call.1} parent=11 // pred_fallthru
          _
        // Predicated region
        $region29: #{tpu_custom_call.1} parent=11 // pred_check
          %p315 = pneg %p224
        $region30: #{tpu_custom_call.1} parent=11 // pred_check_branch
          %317 = sbr.rel (%p315) target = $region32
        $region31: #{tpu_custom_call.1} parent=11 // pred_region
          %s319 = ssub.s32 128, 128
          %320 = vsyncadd [#allocation7], %s319
          %s321 = sshll.u32 [#allocation15], 4
          %s322 = int_to_ptr.vmem [resolvable:$true] %s321
          %327 = dma.hbm_to_vmem [thread:$0]  %s7, 128, %s322, [#allocation7], 64, 64, 4
        $region32: #{tpu_custom_call.1} parent=11 // pred_fallthru
          _
      $region12: #{tpu_custom_call.1} parent=5 // pred_fallthru
        _
      %p328 = scmp.lt.s32.totalorder %s25, 4
      // Predicated region
      $region33: #{tpu_custom_call.1} parent=5 // pred_check
        %p329 = pneg %p328
      $region34: #{tpu_custom_call.1} parent=5 // pred_check_branch
        %331 = sbr.rel (%p329) target = $region36
      $region35: #{tpu_custom_call.1} parent=5 // pred_region
        // Predicated region
        $region37: #{tpu_custom_call.1} parent=35 // pred_check
          %p332 = pneg %p59
        $region38: #{tpu_custom_call.1} parent=35 // pred_check_branch
          %334 = sbr.rel (%p332) target = $region40
        $region39: #{tpu_custom_call.1} parent=35 // pred_region
          %s335 = sand.u32 %s25, 1
          %s336 = scalar_lea.sflag [#allocation4], %s335
          %s337 = sand.u32 %s49, 1
          %s338 = smul.addr %s337, 128
          %s339 = scalar_lea.vmem [#allocation3], %s338
          %s341 = ssub.s32 2048, 2048
          %342 = vsyncadd %s336, %s341
          %s343 = smul.addr %s33, 32
          %s344 = smul.addr %s32, 64
          %s345 = sadd.s32 %s343, %s344
          %s346 = smul.addr %s345, 64
          %s347 = scalar_lea.hbm %s0, %s346
          %s348 = sshll.u32 %s339, 4
          %s349 = int_to_ptr.vmem [resolvable:$true] %s348
          %354 = dma.hbm_to_vmem [thread:$0]  %s347, 2048, %s349, %s336, 64, 64, 4
        $region40: #{tpu_custom_call.1} parent=35 // pred_fallthru
          _
        // Predicated region
        $region41: #{tpu_custom_call.1} parent=35 // pred_check
          %p355 = pneg %p85
        $region42: #{tpu_custom_call.1} parent=35 // pred_check_branch
          %357 = sbr.rel (%p355) target = $region44
        $region43: #{tpu_custom_call.1} parent=35 // pred_region
          %s358 = sand.u32 %s25, 1
          %s359 = scalar_lea.sflag [#allocation7], %s358
          %s360 = sand.u32 %s75, 1
          %s361 = smul.addr %s360, 256
          %s362 = scalar_lea.vmem [#allocation6], %s361
          %s364 = ssub.s32 4096, 4096
          %365 = vsyncadd %s359, %s364
          %s366 = smul.addr %s33, 32
          %s367 = smul.addr %s366, 128
          %s368 = scalar_lea.hbm %s1, %s367
          %s369 = sshll.u32 %s362, 4
          %s370 = int_to_ptr.vmem [resolvable:$true] %s369
          %375 = dma.hbm_to_vmem [thread:$0]  %s368, 4096, %s370, %s359, 128, 128, 8
        $region44: #{tpu_custom_call.1} parent=35 // pred_fallthru
          _
        // Predicated region
        $region45: #{tpu_custom_call.1} parent=35 // pred_check
          %p376 = pneg %p197
        $region46: #{tpu_custom_call.1} parent=35 // pred_check_branch
          %378 = sbr.rel (%p376) target = $region48
        $region47: #{tpu_custom_call.1} parent=35 // pred_region
          %s379 = sand.u32 %s25, 1
          %s380 = scalar_lea.sflag [#allocation4], %s379
          %s381 = sand.u32 %s187, 1
          %s382 = smul.addr %s381, 20
          %s383 = scalar_lea.vmem [#allocation14], %s382
          %s385 = ssub.s32 320, 320
          %386 = vsyncadd %s380, %s385
          %s387 = smul.addr %s33, 5
          %s388 = smul.addr %s32, 10
          %s389 = sadd.s32 %s387, %s388
          %s390 = smul.addr %s389, 64
          %s391 = scalar_lea.hbm %s6, %s390
          %s392 = sshll.u32 %s383, 4
          %s393 = int_to_ptr.vmem [resolvable:$true] %s392
          %398 = dma.hbm_to_vmem [thread:$0]  %s391, 320, %s393, %s380, 64, 64, 4
        $region48: #{tpu_custom_call.1} parent=35 // pred_fallthru
          _
      $region36: #{tpu_custom_call.1} parent=5 // pred_fallthru
        _
      %p399 = scmp.le.s32.totalorder 1, %s25
      %p400 = scmp.lt.s32.totalorder %s25, 5
      %p401 = pnand %p399, %p400
      %p402 = pneg %p401
      // Predicated region
      $region49: #{tpu_custom_call.1} parent=5 // pred_check
        _
      $region50: #{tpu_custom_call.1} parent=5 // pred_check_branch
        %404 = sbr.rel (%p401) target = $region52
      $region51: #{tpu_custom_call.1} parent=5 // pred_region
        %s405 = ssub.s32 %s25, 1
        %s406 = sand.u32 %s30, 1
        %s407 = scalar_lea.sflag [#allocation4], %s406
        %s408 = sand.u32 %s52, 1
        %s409 = smul.addr %s408, 128
        %s410 = scalar_lea.vmem [#allocation3], %s409
        // Predicated region
        $region53: #{tpu_custom_call.1} parent=51 // pred_check
          %p411 = pneg %p65
        $region54: #{tpu_custom_call.1} parent=51 // pred_check_branch
          %413 = sbr.rel (%p411) target = $region56
        $region55: #{tpu_custom_call.1} parent=51 // pred_region
          %414 = dma.done %s407, 2048
        $region56: #{tpu_custom_call.1} parent=51 // pred_fallthru
          _
        %s415 = sand.u32 %s30, 1
        %s416 = scalar_lea.sflag [#allocation7], %s415
        %s417 = sand.u32 %s78, 1
        %s418 = smul.addr %s417, 256
        %s419 = scalar_lea.vmem [#allocation6], %s418
        // Predicated region
        $region57: #{tpu_custom_call.1} parent=51 // pred_check
          %p420 = pneg %p91
        $region58: #{tpu_custom_call.1} parent=51 // pred_check_branch
          %422 = sbr.rel (%p420) target = $region60
        $region59: #{tpu_custom_call.1} parent=51 // pred_region
          %423 = dma.done %s416, 4096
        $region60: #{tpu_custom_call.1} parent=51 // pred_fallthru
          _
        // Predicated region
        $region61: #{tpu_custom_call.1} parent=51 // pred_check
          %p424 = pneg %p112
        $region62: #{tpu_custom_call.1} parent=51 // pred_check_branch
          %426 = sbr.rel (%p424) target = $region64
        $region63: #{tpu_custom_call.1} parent=51 // pred_region
          %427 = dma.done [#allocation7], 320
        $region64: #{tpu_custom_call.1} parent=51 // pred_fallthru
          _
        // Predicated region
        $region65: #{tpu_custom_call.1} parent=51 // pred_check
          %p428 = pneg %p133
        $region66: #{tpu_custom_call.1} parent=51 // pred_check_branch
          %430 = sbr.rel (%p428) target = $region68
        $region67: #{tpu_custom_call.1} parent=51 // pred_region
          %431 = dma.done [#allocation10], 16
        $region68: #{tpu_custom_call.1} parent=51 // pred_fallthru
          _
        // Predicated region
        $region69: #{tpu_custom_call.1} parent=51 // pred_check
          %p432 = pneg %p154
        $region70: #{tpu_custom_call.1} parent=51 // pred_check_branch
          %434 = sbr.rel (%p432) target = $region72
        $region71: #{tpu_custom_call.1} parent=51 // pred_region
          %435 = dma.done [#allocation10], 16384
        $region72: #{tpu_custom_call.1} parent=51 // pred_fallthru
          _
        // Predicated region
        $region73: #{tpu_custom_call.1} parent=51 // pred_check
          %p436 = pneg %p175
        $region74: #{tpu_custom_call.1} parent=51 // pred_check_branch
          %438 = sbr.rel (%p436) target = $region76
        $region75: #{tpu_custom_call.1} parent=51 // pred_region
          %439 = dma.done [#allocation13], 16
        $region76: #{tpu_custom_call.1} parent=51 // pred_fallthru
          _
        %s440 = sand.u32 %s30, 1
        %s441 = scalar_lea.sflag [#allocation4], %s440
        %s442 = sand.u32 %s190, 1
        %s443 = smul.addr %s442, 20
        %s444 = scalar_lea.vmem [#allocation14], %s443
        // Predicated region
        $region77: #{tpu_custom_call.1} parent=51 // pred_check
          %p445 = pneg %p203
        $region78: #{tpu_custom_call.1} parent=51 // pred_check_branch
          %447 = sbr.rel (%p445) target = $region80
        $region79: #{tpu_custom_call.1} parent=51 // pred_region
          %448 = dma.done %s441, 320
        $region80: #{tpu_custom_call.1} parent=51 // pred_fallthru
          _
        // Predicated region
        $region81: #{tpu_custom_call.1} parent=51 // pred_check
          %p449 = pneg %p224
        $region82: #{tpu_custom_call.1} parent=51 // pred_check_branch
          %451 = sbr.rel (%p449) target = $region84
        $region83: #{tpu_custom_call.1} parent=51 // pred_region
          %452 = dma.done [#allocation7], 128
        $region84: #{tpu_custom_call.1} parent=51 // pred_fallthru
          _
        %s453 = sand.u32 %s30, 1
        %s454 = scalar_lea.sflag [#allocation4], %s453
        %s455 = sand.u32 %s52, 1
        %s456 = smul.addr %s455, 128
        %s457 = scalar_lea.vmem [#allocation3], %s456
        %p458 = pneg %p65
        %p459 = pneg %p62
        %s460 = sand.u32 %s30, 1
        %s461 = scalar_lea.sflag [#allocation7], %s460
        %s462 = sand.u32 %s78, 1
        %s463 = smul.addr %s462, 256
        %s464 = scalar_lea.vmem [#allocation6], %s463
        %p465 = pneg %p91
        %p466 = pneg %p88
        %p467 = pneg %p112
        %p468 = pneg %p109
        %p469 = pneg %p133
        %p470 = pneg %p130
        %p471 = pneg %p154
        %p472 = pneg %p151
        %p473 = pneg %p175
        %p474 = pneg %p172
        %s475 = sand.u32 %s30, 1
        %s476 = scalar_lea.sflag [#allocation4], %s475
        %s477 = sand.u32 %s190, 1
        %s478 = smul.addr %s477, 20
        %s479 = scalar_lea.vmem [#allocation14], %s478
        %p480 = pneg %p203
        %p481 = pneg %p200
        %p482 = pneg %p224
        %p483 = pneg %p221
        %p484 = pneg %p252
        %p485 = pneg %p249
        %s486 = sand.u32 %s239, 1
        %s487 = scalar_lea.sflag [#allocation5], %s486
        %s488 = sand.u32 %s239, 1
        %s489 = smul.addr %s488, 40
        %s490 = scalar_lea.vmem [#allocation16], %s489
        %v492 = vld [vmem:[%s410] sm:$0xf]
        %v493 = vld [vmem:[%s410 + $0x4] sm:$0xf]
        %v494 = vld [vmem:[%s410 + $0x8] sm:$0xf]
        %v495 = vld [vmem:[%s410 + $0xc] sm:$0xf]
        %v496 = vld [vmem:[%s410 + $0x10] sm:$0xf]
        %v497 = vld [vmem:[%s410 + $0x14] sm:$0xf]
        %v498 = vld [vmem:[%s410 + $0x18] sm:$0xf]
        %v499 = vld [vmem:[%s410 + $0x1c] sm:$0x3]
        %v500 = vld [vmem:[#allocation8] sm:$0xf]
        %v501 = vld [vmem:[#allocation8 + $0x4] sm:$0xf]
        %v502 = vld [vmem:[#allocation8 + $0x8] sm:$0xf]
        %v503 = vld [vmem:[#allocation8 + $0xc] sm:$0xf]
        %v504 = vld [vmem:[#allocation8 + $0x10] sm:$0x3]
        %v505 = vld [vmem:[#allocation9] sm:$0x1]
        %v507 = vlaneseq
        %v508 = vshrl.u32 %v507, 7
        %v509 = vsub.s32 0, %v508
        %v510 = vrot.slane %v505, %v509
        %v520 = vunpack.c.l.b16 %v492
        %v521 = vunpack.c.l.b16 %v493
        %v522 = vunpack.c.l.b16 %v494
        %v523 = vunpack.c.l.b16 %v495
        %v524 = vunpack.c.l.b16 %v496
        %v525 = vunpack.c.l.b16 %v497
        %v526 = vunpack.c.l.b16 %v498
        %v527 = vunpack.c.l.b16 %v499
        %v528 = vpack.c.b16 %v521, %v520
        %v529 = vpack.c.b16 %v523, %v522
        %v530 = vpack.c.b16 %v525, %v524
        %v531 = vpack.c.b16 %v527, %v526
        %v537 = vunpack.c.l.b16 %v500
        %v538 = vunpack.c.l.b16 %v501
        %v539 = vunpack.c.l.b16 %v502
        %v540 = vunpack.c.l.b16 %v503
        %v541 = vunpack.c.l.b16 %v504
        %v542 = vpack.c.b16 %v538, %v537
        %v543 = vpack.c.b16 %v540, %v539
        %v544 = vpack.c.b16 %v541, %v541
        %vm547 = vcmask 293888
        %v549 = vsel %vm547, %v528, 0
        %v552 = vsel %vm547, %v529, 0
        %v555 = vsel %vm547, %v530, 0
        %v558 = vsel %vm547, %v531, 0
        %vm560 = vcmask 1041408
        %v562 = vsel %vm560, %v544, 0
        %564 = vmatprep.subr.bf16.mxu0 0
        %565 = vmatpush1.bf16.msra.mxu0 %v542
        %566 = vmatprep.subr.bf16.mxu0 0
        %567 = vmatpush1.bf16.msra.mxu0 %v543
        %568 = vmatprep.subr.bf16.mxu0 0
        %569 = vmatpush1.bf16.msra.mxu0 %v562
        %570 = vmatprep.subr.bf16.mxu0 0
        %571 = vmatpush1.bf16.msra.mxu0 0
        %572 = vmatprep.subr.bf16.mxu0 0
        %573 = vmatpush1.bf16.msra.mxu0 0
        %574 = vmatprep.subr.bf16.mxu0 0
        %575 = vmatpush1.bf16.msra.mxu0 0
        %576 = vmatprep.subr.bf16.mxu0 0
        %577 = vmatpush1.bf16.msra.mxu0 0
        %578 = vmatprep.subr.bf16.mxu0 0
        %579 = vmatpush1.bf16.msra.mxu0 0
        %580 = vmatprep.subr.bf16.mxu0 0
        %581 = vmatpush1.bf16.msra.mxu0 0
        %582 = vmatprep.subr.bf16.mxu0 0
        %583 = vmatpush1.bf16.msra.mxu0 0
        %584 = vmatprep.subr.bf16.mxu0 0
        %585 = vmatpush1.bf16.msra.mxu0 0
        %586 = vmatprep.subr.bf16.mxu0 0
        %587 = vmatpush1.bf16.msra.mxu0 0
        %588 = vmatprep.subr.bf16.mxu0 0
        %589 = vmatpush1.bf16.msra.mxu0 0
        %590 = vmatprep.subr.bf16.mxu0 0
        %591 = vmatpush1.bf16.msra.mxu0 0
        %592 = vmatprep.subr.bf16.mxu0 0
        %593 = vmatpush1.bf16.msra.mxu0 0
        %594 = vmatprep.subr.bf16.mxu0 0
        %595 = vmatpush1.bf16.msra.mxu0 0
        %596 = vmatprep.mubr.bf16.mxu0 0
        %597 = vmatmul.mubr.bf16.gmra.mrb[0].mxu0 %v549
        %v598 = vpop.f32.mrb[0].mxu0
        %v599 = vadd.f32 %v510, %v598
        %v600 = vpop.f32.mrb[0].mxu0
        %v601 = vpop.f32.mrb[0].mxu0
        %v602 = vadd.f32 %v510, %v601
        %v603 = vpop.f32.mrb[0].mxu0
        %604 = vmatprep.mubr.bf16.mxu0 0
        %605 = vmatmul.mubr.bf16.gmra.mrb[0].mxu0 %v552
        %v606 = vpop.f32.mrb[0].mxu0
        %v607 = vadd.f32 %v510, %v606
        %v608 = vpop.f32.mrb[0].mxu0
        %v609 = vpop.f32.mrb[0].mxu0
        %v610 = vadd.f32 %v510, %v609
        %v611 = vpop.f32.mrb[0].mxu0
        %612 = vmatprep.mubr.bf16.mxu0 0
        %613 = vmatmul.mubr.bf16.gmra.mrb[0].mxu0 %v555
        %v614 = vpop.f32.mrb[0].mxu0
        %v615 = vadd.f32 %v510, %v614
        %v616 = vpop.f32.mrb[0].mxu0
        %v617 = vpop.f32.mrb[0].mxu0
        %v618 = vadd.f32 %v510, %v617
        %v619 = vpop.f32.mrb[0].mxu0
        %620 = vmatprep.mubr.bf16.mxu0 0
        %621 = vmatmul.mubr.bf16.gmra.mrb[0].mxu0 %v558
        %v622 = vpop.f32.mrb[0].mxu0
        %v623 = vadd.f32 %v510, %v622
        %v624 = vpop.f32.mrb[0].mxu0
        %v625 = vpop.f32.mrb[0].mxu0
        %v626 = vadd.f32 %v510, %v625
        %v627 = vpop.f32.mrb[0].mxu0
        %628 = vdwg.mxu0
        %v629 = vld [vmem:[%s419] sm:$0xff]
        %v630 = vld [vmem:[%s419 + $0x8] sm:$0xff]
        %v631 = vld [vmem:[%s419 + $0x10] sm:$0xff]
        %v632 = vld [vmem:[%s419 + $0x18] sm:$0xff]
        %v633 = vld [vmem:[%s419 + $0x20] sm:$0xff]
        %v634 = vld [vmem:[%s419 + $0x28] sm:$0xff]
        %v635 = vld [vmem:[%s419 + $0x30] sm:$0xff]
        %v636 = vld [vmem:[%s419 + $0x38] sm:$0xf]
        %638 = vset.pattern.permute.xlu0 0
        %639 = vperm.xlu0 %638, %v629
        %v640 = vpop.permute.xlu0 %639
        %643 = vset.pattern.permute.xlu0 0
        %644 = vperm.xlu0 %643, %v630
        %v645 = vpop.permute.xlu0 %644
        %648 = vset.pattern.permute.xlu0 0
        %649 = vperm.xlu0 %648, %v631
        %v650 = vpop.permute.xlu0 %649
        %653 = vset.pattern.permute.xlu0 0
        %654 = vperm.xlu0 %653, %v632
        %v655 = vpop.permute.xlu0 %654
        %658 = vset.pattern.permute.xlu0 0
        %659 = vperm.xlu0 %658, %v633
        %v660 = vpop.permute.xlu0 %659
        %663 = vset.pattern.permute.xlu0 0
        %664 = vperm.xlu0 %663, %v634
        %v665 = vpop.permute.xlu0 %664
        %668 = vset.pattern.permute.xlu0 0
        %669 = vperm.xlu0 %668, %v635
        %v670 = vpop.permute.xlu0 %669
        %673 = vset.pattern.permute.xlu0 0
        %674 = vperm.xlu0 %673, %v636
        %v675 = vpop.permute.xlu0 %674
        %v677 = vadd.f32 %v599, %v640
        %v678 = vadd.f32 %v602, %v645
        %v679 = vadd.f32 %v607, %v650
        %v680 = vadd.f32 %v610, %v655
        %v681 = vadd.f32 %v615, %v660
        %v682 = vadd.f32 %v618, %v665
        %v683 = vadd.f32 %v623, %v670
        %v684 = vadd.f32 %v626, %v675
        %v685 = vmax.f32 %v677, 0.0
        %v686 = vmax.f32 %v678, 0.0
        %v687 = vmax.f32 %v679, 0.0
        %v688 = vmax.f32 %v680, 0.0
        %v689 = vmax.f32 %v681, 0.0
        %v690 = vmax.f32 %v682, 0.0
        %v691 = vmax.f32 %v683, 0.0
        %v692 = vmax.f32 %v684, 0.0
        %v693 = vpack.c.bf16 %v686, %v685
        %v694 = vpack.c.bf16 %v688, %v687
        %v695 = vpack.c.bf16 %v690, %v689
        %v696 = vpack.c.bf16 %v692, %v691
        %v701 = vunpack.c.l.b16 %v693
        %v702 = vunpack.c.h.b16 %v693
        %v703 = vunpack.c.l.b16 %v694
        %v704 = vunpack.c.h.b16 %v694
        %v705 = vunpack.c.l.b16 %v695
        %v706 = vunpack.c.h.b16 %v695
        %v707 = vunpack.c.l.b16 %v696
        %v708 = vunpack.c.h.b16 %v696
        %v709 = vpack.c.b16 %v701, %v701
        %v710 = vpack.c.b16 %v702, %v702
        %v711 = vpack.c.b16 %v703, %v703
        %v712 = vpack.c.b16 %v704, %v704
        %v713 = vpack.c.b16 %v705, %v705
        %v714 = vpack.c.b16 %v706, %v706
        %v715 = vpack.c.b16 %v707, %v707
        %v716 = vpack.c.b16 %v708, %v708
        %725 = vst [vmem:[#allocation2] sm:$0xf] %v709
        %726 = vst [vmem:[#allocation2 + $0x4] sm:$0xf] %v710
        %727 = vst [vmem:[#allocation2 + $0x8] sm:$0xf] %v711
        %728 = vst [vmem:[#allocation2 + $0xc] sm:$0xf] %v712
        %729 = vst [vmem:[#allocation2 + $0x10] sm:$0xf] %v713
        %730 = vst [vmem:[#allocation2 + $0x14] sm:$0xf] %v714
        %731 = vst [vmem:[#allocation2 + $0x18] sm:$0xf] %v715
        %732 = vst [vmem:[#allocation2 + $0x1c] sm:$0x3] %v716
        %s733 = scalar_lea.vmem %s410, 32 [#allocation3]
        %v734 = vld [vmem:[%s733] sm:$0xf]
        %v735 = vld [vmem:[%s733 + $0x4] sm:$0xf]
        %v736 = vld [vmem:[%s733 + $0x8] sm:$0xf]
        %v737 = vld [vmem:[%s733 + $0xc] sm:$0xf]
        %v738 = vld [vmem:[%s733 + $0x10] sm:$0xf]
        %v739 = vld [vmem:[%s733 + $0x14] sm:$0xf]
        %v740 = vld [vmem:[%s733 + $0x18] sm:$0xf]
        %v741 = vld [vmem:[%s733 + $0x1c] sm:$0x3]
        %v742 = vld [vmem:[#allocation8] sm:$0xf]
        %v743 = vld [vmem:[#allocation8 + $0x4] sm:$0xf]
        %v744 = vld [vmem:[#allocation8 + $0x8] sm:$0xf]
        %v745 = vld [vmem:[#allocation8 + $0xc] sm:$0xf]
        %v746 = vld [vmem:[#allocation8 + $0x10] sm:$0x3]
        %v747 = vld [vmem:[#allocation9] sm:$0x1]
        %v749 = vlaneseq
        %v750 = vshrl.u32 %v749, 7
        %v751 = vsub.s32 0, %v750
        %v752 = vrot.slane %v747, %v751
        %v762 = vunpack.c.l.b16 %v734
        %v763 = vunpack.c.l.b16 %v735
        %v764 = vunpack.c.l.b16 %v736
        %v765 = vunpack.c.l.b16 %v737
        %v766 = vunpack.c.l.b16 %v738
        %v767 = vunpack.c.l.b16 %v739
        %v768 = vunpack.c.l.b16 %v740
        %v769 = vunpack.c.l.b16 %v741
        %v770 = vpack.c.b16 %v763, %v762
        %v771 = vpack.c.b16 %v765, %v764
        %v772 = vpack.c.b16 %v767, %v766
        %v773 = vpack.c.b16 %v769, %v768
        %v779 = vunpack.c.l.b16 %v742
        %v780 = vunpack.c.l.b16 %v743
        %v781 = vunpack.c.l.b16 %v744
        %v782 = vunpack.c.l.b16 %v745
        %v783 = vunpack.c.l.b16 %v746
        %v784 = vpack.c.b16 %v780, %v779
        %v785 = vpack.c.b16 %v782, %v781
        %v786 = vpack.c.b16 %v783, %v783
        %v790 = vsel %vm547, %v770, 0
        %v793 = vsel %vm547, %v771, 0
        %v796 = vsel %vm547, %v772, 0
        %v799 = vsel %vm547, %v773, 0
        %v802 = vsel %vm560, %v786, 0
        %804 = vmatprep.subr.bf16.mxu0 0
        %805 = vmatpush1.bf16.msra.mxu0 %v784
        %806 = vmatprep.subr.bf16.mxu0 0
        %807 = vmatpush1.bf16.msra.mxu0 %v785
        %808 = vmatprep.subr.bf16.mxu0 0
        %809 = vmatpush1.bf16.msra.mxu0 %v802
        %810 = vmatprep.subr.bf16.mxu0 0
        %811 = vmatpush1.bf16.msra.mxu0 0
        %812 = vmatprep.subr.bf16.mxu0 0
        %813 = vmatpush1.bf16.msra.mxu0 0
        %814 = vmatprep.subr.bf16.mxu0 0
        %815 = vmatpush1.bf16.msra.mxu0 0
        %816 = vmatprep.subr.bf16.mxu0 0
        %817 = vmatpush1.bf16.msra.mxu0 0
        %818 = vmatprep.subr.bf16.mxu0 0
        %819 = vmatpush1.bf16.msra.mxu0 0
        %820 = vmatprep.subr.bf16.mxu0 0
        %821 = vmatpush1.bf16.msra.mxu0 0
        %822 = vmatprep.subr.bf16.mxu0 0
        %823 = vmatpush1.bf16.msra.mxu0 0
        %824 = vmatprep.subr.bf16.mxu0 0
        %825 = vmatpush1.bf16.msra.mxu0 0
        %826 = vmatprep.subr.bf16.mxu0 0
        %827 = vmatpush1.bf16.msra.mxu0 0
        %828 = vmatprep.subr.bf16.mxu0 0
        %829 = vmatpush1.bf16.msra.mxu0 0
        %830 = vmatprep.subr.bf16.mxu0 0
        %831 = vmatpush1.bf16.msra.mxu0 0
        %832 = vmatprep.subr.bf16.mxu0 0
        %833 = vmatpush1.bf16.msra.mxu0 0
        %834 = vmatprep.subr.bf16.mxu0 0
        %835 = vmatpush1.bf16.msra.mxu0 0
        %836 = vmatprep.mubr.bf16.mxu0 0
        %837 = vmatmul.mubr.bf16.gmra.mrb[0].mxu0 %v790
        %v838 = vpop.f32.mrb[0].mxu0
        %v839 = vadd.f32 %v752, %v838
        %v840 = vpop.f32.mrb[0].mxu0
        %v841 = vpop.f32.mrb[0].mxu0
        %v842 = vadd.f32 %v752, %v841
        %v843 = vpop.f32.mrb[0].mxu0
        %844 = vmatprep.mubr.bf16.mxu0 0
        %845 = vmatmul.mubr.bf16.gmra.mrb[0].mxu0 %v793
        %v846 = vpop.f32.mrb[0].mxu0
        %v847 = vadd.f32 %v752, %v846
        %v848 = vpop.f32.mrb[0].mxu0
        %v849 = vpop.f32.mrb[0].mxu0
        %v850 = vadd.f32 %v752, %v849
        %v851 = vpop.f32.mrb[0].mxu0
        %852 = vmatprep.mubr.bf16.mxu0 0
        %853 = vmatmul.mubr.bf16.gmra.mrb[0].mxu0 %v796
        %v854 = vpop.f32.mrb[0].mxu0
        %v855 = vadd.f32 %v752, %v854
        %v856 = vpop.f32.mrb[0].mxu0
        %v857 = vpop.f32.mrb[0].mxu0
        %v858 = vadd.f32 %v752, %v857
        %v859 = vpop.f32.mrb[0].mxu0
        %860 = vmatprep.mubr.bf16.mxu0 0
        %861 = vmatmul.mubr.bf16.gmra.mrb[0].mxu0 %v799
        %v862 = vpop.f32.mrb[0].mxu0
        %v863 = vadd.f32 %v752, %v862
        %v864 = vpop.f32.mrb[0].mxu0
        %v865 = vpop.f32.mrb[0].mxu0
        %v866 = vadd.f32 %v752, %v865
        %v867 = vpop.f32.mrb[0].mxu0
        %868 = vdwg.mxu0
        %s869 = scalar_lea.vmem %s419, 64 [#allocation6]
        %v870 = vld [vmem:[%s869] sm:$0xff]
        %v871 = vld [vmem:[%s869 + $0x8] sm:$0xff]
        %v872 = vld [vmem:[%s869 + $0x10] sm:$0xff]
        %v873 = vld [vmem:[%s869 + $0x18] sm:$0xff]
        %v874 = vld [vmem:[%s869 + $0x20] sm:$0xff]
        %v875 = vld [vmem:[%s869 + $0x28] sm:$0xff]
        %v876 = vld [vmem:[%s869 + $0x30] sm:$0xff]
        %v877 = vld [vmem:[%s869 + $0x38] sm:$0xf]
        %879 = vset.pattern.permute.xlu0 0
        %880 = vperm.xlu0 %879, %v870
        %v881 = vpop.permute.xlu0 %880
        %884 = vset.pattern.permute.xlu0 0
        %885 = vperm.xlu0 %884, %v871
        %v886 = vpop.permute.xlu0 %885
        %889 = vset.pattern.permute.xlu0 0
        %890 = vperm.xlu0 %889, %v872
        %v891 = vpop.permute.xlu0 %890
        %894 = vset.pattern.permute.xlu0 0
        %895 = vperm.xlu0 %894, %v873
        %v896 = vpop.permute.xlu0 %895
        %899 = vset.pattern.permute.xlu0 0
        %900 = vperm.xlu0 %899, %v874
        %v901 = vpop.permute.xlu0 %900
        %904 = vset.pattern.permute.xlu0 0
        %905 = vperm.xlu0 %904, %v875
        %v906 = vpop.permute.xlu0 %905
        %909 = vset.pattern.permute.xlu0 0
        %910 = vperm.xlu0 %909, %v876
        %v911 = vpop.permute.xlu0 %910
        %914 = vset.pattern.permute.xlu0 0
        %915 = vperm.xlu0 %914, %v877
        %v916 = vpop.permute.xlu0 %915
        %v918 = vadd.f32 %v839, %v881
        %v919 = vadd.f32 %v842, %v886
        %v920 = vadd.f32 %v847, %v891
        %v921 = vadd.f32 %v850, %v896
        %v922 = vadd.f32 %v855, %v901
        %v923 = vadd.f32 %v858, %v906
        %v924 = vadd.f32 %v863, %v911
        %v925 = vadd.f32 %v866, %v916
        %v926 = vmax.f32 %v918, 0.0
        %v927 = vmax.f32 %v919, 0.0
        %v928 = vmax.f32 %v920, 0.0
        %v929 = vmax.f32 %v921, 0.0
        %v930 = vmax.f32 %v922, 0.0
        %v931 = vmax.f32 %v923, 0.0
        %v932 = vmax.f32 %v924, 0.0
        %v933 = vmax.f32 %v925, 0.0
        %v934 = vpack.c.bf16 %v927, %v926
        %v935 = vpack.c.bf16 %v929, %v928
        %v936 = vpack.c.bf16 %v931, %v930
        %v937 = vpack.c.bf16 %v933, %v932
        %v942 = vunpack.c.l.b16 %v934
        %v943 = vunpack.c.h.b16 %v934
        %v944 = vunpack.c.l.b16 %v935
        %v945 = vunpack.c.h.b16 %v935
        %v946 = vunpack.c.l.b16 %v936
        %v947 = vunpack.c.h.b16 %v936
        %v948 = vunpack.c.l.b16 %v937
        %v949 = vunpack.c.h.b16 %v937
        %v950 = vpack.c.b16 %v942, %v942
        %v951 = vpack.c.b16 %v943, %v943
        %v952 = vpack.c.b16 %v944, %v944
        %v953 = vpack.c.b16 %v945, %v945
        %v954 = vpack.c.b16 %v946, %v946
        %v955 = vpack.c.b16 %v947, %v947
        %v956 = vpack.c.b16 %v948, %v948
        %v957 = vpack.c.b16 %v949, %v949
        %s966 = scalar_lea.vmem [#allocation2], 32
        %967 = vst [vmem:[%s966] sm:$0xf] %v950
        %968 = vst [vmem:[%s966 + $0x4] sm:$0xf] %v951
        %969 = vst [vmem:[%s966 + $0x8] sm:$0xf] %v952
        %970 = vst [vmem:[%s966 + $0xc] sm:$0xf] %v953
        %971 = vst [vmem:[%s966 + $0x10] sm:$0xf] %v954
        %972 = vst [vmem:[%s966 + $0x14] sm:$0xf] %v955
        %973 = vst [vmem:[%s966 + $0x18] sm:$0xf] %v956
        %974 = vst [vmem:[%s966 + $0x1c] sm:$0x3] %v957
        %s975 = scalar_lea.vmem %s410, 64 [#allocation3]
        %v976 = vld [vmem:[%s975] sm:$0xf]
        %v977 = vld [vmem:[%s975 + $0x4] sm:$0xf]
        %v978 = vld [vmem:[%s975 + $0x8] sm:$0xf]
        %v979 = vld [vmem:[%s975 + $0xc] sm:$0xf]
        %v980 = vld [vmem:[%s975 + $0x10] sm:$0xf]
        %v981 = vld [vmem:[%s975 + $0x14] sm:$0xf]
        %v982 = vld [vmem:[%s975 + $0x18] sm:$0xf]
        %v983 = vld [vmem:[%s975 + $0x1c] sm:$0x3]
        %v984 = vld [vmem:[#allocation8] sm:$0xf]
        %v985 = vld [vmem:[#allocation8 + $0x4] sm:$0xf]
        %v986 = vld [vmem:[#allocation8 + $0x8] sm:$0xf]
        %v987 = vld [vmem:[#allocation8 + $0xc] sm:$0xf]
        %v988 = vld [vmem:[#allocation8 + $0x10] sm:$0x3]
        %v989 = vld [vmem:[#allocation9] sm:$0x1]
        %v991 = vlaneseq
        %v992 = vshrl.u32 %v991, 7
        %v993 = vsub.s32 0, %v992
        %v994 = vrot.slane %v989, %v993
        %v1004 = vunpack.c.l.b16 %v976
        %v1005 = vunpack.c.l.b16 %v977
        %v1006 = vunpack.c.l.b16 %v978
        %v1007 = vunpack.c.l.b16 %v979
        %v1008 = vunpack.c.l.b16 %v980
        %v1009 = vunpack.c.l.b16 %v981
        %v1010 = vunpack.c.l.b16 %v982
        %v1011 = vunpack.c.l.b16 %v983
        %v1012 = vpack.c.b16 %v1005, %v1004
        %v1013 = vpack.c.b16 %v1007, %v1006
        %v1014 = vpack.c.b16 %v1009, %v1008
        %v1015 = vpack.c.b16 %v1011, %v1010
        %v1021 = vunpack.c.l.b16 %v984
        %v1022 = vunpack.c.l.b16 %v985
        %v1023 = vunpack.c.l.b16 %v986
        %v1024 = vunpack.c.l.b16 %v987
        %v1025 = vunpack.c.l.b16 %v988
        %v1026 = vpack.c.b16 %v1022, %v1021
        %v1027 = vpack.c.b16 %v1024, %v1023
        %v1028 = vpack.c.b16 %v1025, %v1025
        %v1032 = vsel %vm547, %v1012, 0
        %v1035 = vsel %vm547, %v1013, 0
        %v1038 = vsel %vm547, %v1014, 0
        %v1041 = vsel %vm547, %v1015, 0
        %v1044 = vsel %vm560, %v1028, 0
        %1046 = vmatprep.subr.bf16.mxu0 0
        %1047 = vmatpush1.bf16.msra.mxu0 %v1026
        %1048 = vmatprep.subr.bf16.mxu0 0
        %1049 = vmatpush1.bf16.msra.mxu0 %v1027
        %1050 = vmatprep.subr.bf16.mxu0 0
        %1051 = vmatpush1.bf16.msra.mxu0 %v1044
        %1052 = vmatprep.subr.bf16.mxu0 0
        %1053 = vmatpush1.bf16.msra.mxu0 0
        %1054 = vmatprep.subr.bf16.mxu0 0
        %1055 = vmatpush1.bf16.msra.mxu0 0
        %1056 = vmatprep.subr.bf16.mxu0 0
        %1057 = vmatpush1.bf16.msra.mxu0 0
        %1058 = vmatprep.subr.bf16.mxu0 0
        %1059 = vmatpush1.bf16.msra.mxu0 0
        %1060 = vmatprep.subr.bf16.mxu0 0
        %1061 = vmatpush1.bf16.msra.mxu0 0
        %1062 = vmatprep.subr.bf16.mxu0 0
        %1063 = vmatpush1.bf16.msra.mxu0 0
        %1064 = vmatprep.subr.bf16.mxu0 0
        %1065 = vmatpush1.bf16.msra.mxu0 0
        %1066 = vmatprep.subr.bf16.mxu0 0
        %1067 = vmatpush1.bf16.msra.mxu0 0
        %1068 = vmatprep.subr.bf16.mxu0 0
        %1069 = vmatpush1.bf16.msra.mxu0 0
        %1070 = vmatprep.subr.bf16.mxu0 0
        %1071 = vmatpush1.bf16.msra.mxu0 0
        %1072 = vmatprep.subr.bf16.mxu0 0
        %1073 = vmatpush1.bf16.msra.mxu0 0
        %1074 = vmatprep.subr.bf16.mxu0 0
        %1075 = vmatpush1.bf16.msra.mxu0 0
        %1076 = vmatprep.subr.bf16.mxu0 0
        %1077 = vmatpush1.bf16.msra.mxu0 0
        %1078 = vmatprep.mubr.bf16.mxu0 0
        %1079 = vmatmul.mubr.bf16.gmra.mrb[0].mxu0 %v1032
        %v1080 = vpop.f32.mrb[0].mxu0
        %v1081 = vadd.f32 %v994, %v1080
        %v1082 = vpop.f32.mrb[0].mxu0
        %v1083 = vpop.f32.mrb[0].mxu0
        %v1084 = vadd.f32 %v994, %v1083
        %v1085 = vpop.f32.mrb[0].mxu0
        %1086 = vmatprep.mubr.bf16.mxu0 0
        %1087 = vmatmul.mubr.bf16.gmra.mrb[0].mxu0 %v1035
        %v1088 = vpop.f32.mrb[0].mxu0
        %v1089 = vadd.f32 %v994, %v1088
        %v1090 = vpop.f32.mrb[0].mxu0
        %v1091 = vpop.f32.mrb[0].mxu0
        %v1092 = vadd.f32 %v994, %v1091
        %v1093 = vpop.f32.mrb[0].mxu0
        %1094 = vmatprep.mubr.bf16.mxu0 0
        %1095 = vmatmul.mubr.bf16.gmra.mrb[0].mxu0 %v1038
        %v1096 = vpop.f32.mrb[0].mxu0
        %v1097 = vadd.f32 %v994, %v1096
        %v1098 = vpop.f32.mrb[0].mxu0
        %v1099 = vpop.f32.mrb[0].mxu0
        %v1100 = vadd.f32 %v994, %v1099
        %v1101 = vpop.f32.mrb[0].mxu0
        %1102 = vmatprep.mubr.bf16.mxu0 0
        %1103 = vmatmul.mubr.bf16.gmra.mrb[0].mxu0 %v1041
        %v1104 = vpop.f32.mrb[0].mxu0
        %v1105 = vadd.f32 %v994, %v1104
        %v1106 = vpop.f32.mrb[0].mxu0
        %v1107 = vpop.f32.mrb[0].mxu0
        %v1108 = vadd.f32 %v994, %v1107
        %v1109 = vpop.f32.mrb[0].mxu0
        %1110 = vdwg.mxu0
        %s1111 = scalar_lea.vmem %s419, 128 [#allocation6]
        %v1112 = vld [vmem:[%s1111] sm:$0xff]
        %v1113 = vld [vmem:[%s1111 + $0x8] sm:$0xff]
        %v1114 = vld [vmem:[%s1111 + $0x10] sm:$0xff]
        %v1115 = vld [vmem:[%s1111 + $0x18] sm:$0xff]
        %v1116 = vld [vmem:[%s1111 + $0x20] sm:$0xff]
        %v1117 = vld [vmem:[%s1111 + $0x28] sm:$0xff]
        %v1118 = vld [vmem:[%s1111 + $0x30] sm:$0xff]
        %v1119 = vld [vmem:[%s1111 + $0x38] sm:$0xf]
        %1121 = vset.pattern.permute.xlu0 0
        %1122 = vperm.xlu0 %1121, %v1112
        %v1123 = vpop.permute.xlu0 %1122
        %1126 = vset.pattern.permute.xlu0 0
        %1127 = vperm.xlu0 %1126, %v1113
        %v1128 = vpop.permute.xlu0 %1127
        %1131 = vset.pattern.permute.xlu0 0
        %1132 = vperm.xlu0 %1131, %v1114
        %v1133 = vpop.permute.xlu0 %1132
        %1136 = vset.pattern.permute.xlu0 0
        %1137 = vperm.xlu0 %1136, %v1115
        %v1138 = vpop.permute.xlu0 %1137
        %1141 = vset.pattern.permute.xlu0 0
        %1142 = vperm.xlu0 %1141, %v1116
        %v1143 = vpop.permute.xlu0 %1142
        %1146 = vset.pattern.permute.xlu0 0
        %1147 = vperm.xlu0 %1146, %v1117
        %v1148 = vpop.permute.xlu0 %1147
        %1151 = vset.pattern.permute.xlu0 0
        %1152 = vperm.xlu0 %1151, %v1118
        %v1153 = vpop.permute.xlu0 %1152
        %1156 = vset.pattern.permute.xlu0 0
        %1157 = vperm.xlu0 %1156, %v1119
        %v1158 = vpop.permute.xlu0 %1157
        %v1160 = vadd.f32 %v1081, %v1123
        %v1161 = vadd.f32 %v1084, %v1128
        %v1162 = vadd.f32 %v1089, %v1133
        %v1163 = vadd.f32 %v1092, %v1138
        %v1164 = vadd.f32 %v1097, %v1143
        %v1165 = vadd.f32 %v1100, %v1148
        %v1166 = vadd.f32 %v1105, %v1153
        %v1167 = vadd.f32 %v1108, %v1158
        %v1168 = vmax.f32 %v1160, 0.0
        %v1169 = vmax.f32 %v1161, 0.0
        %v1170 = vmax.f32 %v1162, 0.0
        %v1171 = vmax.f32 %v1163, 0.0
        %v1172 = vmax.f32 %v1164, 0.0
        %v1173 = vmax.f32 %v1165, 0.0
        %v1174 = vmax.f32 %v1166, 0.0
        %v1175 = vmax.f32 %v1167, 0.0
        %v1176 = vpack.c.bf16 %v1169, %v1168
        %v1177 = vpack.c.bf16 %v1171, %v1170
        %v1178 = vpack.c.bf16 %v1173, %v1172
        %v1179 = vpack.c.bf16 %v1175, %v1174
        %v1184 = vunpack.c.l.b16 %v1176
        %v1185 = vunpack.c.h.b16 %v1176
        %v1186 = vunpack.c.l.b16 %v1177
        %v1187 = vunpack.c.h.b16 %v1177
        %v1188 = vunpack.c.l.b16 %v1178
        %v1189 = vunpack.c.h.b16 %v1178
        %v1190 = vunpack.c.l.b16 %v1179
        %v1191 = vunpack.c.h.b16 %v1179
        %v1192 = vpack.c.b16 %v1184, %v1184
        %v1193 = vpack.c.b16 %v1185, %v1185
        %v1194 = vpack.c.b16 %v1186, %v1186
        %v1195 = vpack.c.b16 %v1187, %v1187
        %v1196 = vpack.c.b16 %v1188, %v1188
        %v1197 = vpack.c.b16 %v1189, %v1189
        %v1198 = vpack.c.b16 %v1190, %v1190
        %v1199 = vpack.c.b16 %v1191, %v1191
        %s1208 = scalar_lea.vmem [#allocation2], 64
        %1209 = vst [vmem:[%s1208] sm:$0xf] %v1192
        %1210 = vst [vmem:[%s1208 + $0x4] sm:$0xf] %v1193
        %1211 = vst [vmem:[%s1208 + $0x8] sm:$0xf] %v1194
        %1212 = vst [vmem:[%s1208 + $0xc] sm:$0xf] %v1195
        %1213 = vst [vmem:[%s1208 + $0x10] sm:$0xf] %v1196
        %1214 = vst [vmem:[%s1208 + $0x14] sm:$0xf] %v1197
        %1215 = vst [vmem:[%s1208 + $0x18] sm:$0xf] %v1198
        %1216 = vst [vmem:[%s1208 + $0x1c] sm:$0x3] %v1199
        %s1217 = scalar_lea.vmem %s410, 96 [#allocation3]
        %v1218 = vld [vmem:[%s1217] sm:$0xf]
        %v1219 = vld [vmem:[%s1217 + $0x4] sm:$0xf]
        %v1220 = vld [vmem:[%s1217 + $0x8] sm:$0xf]
        %v1221 = vld [vmem:[%s1217 + $0xc] sm:$0xf]
        %v1222 = vld [vmem:[%s1217 + $0x10] sm:$0xf]
        %v1223 = vld [vmem:[%s1217 + $0x14] sm:$0xf]
        %v1224 = vld [vmem:[%s1217 + $0x18] sm:$0xf]
        %v1225 = vld [vmem:[%s1217 + $0x1c] sm:$0x3]
        %v1226 = vld [vmem:[#allocation8] sm:$0xf]
        %v1227 = vld [vmem:[#allocation8 + $0x4] sm:$0xf]
        %v1228 = vld [vmem:[#allocation8 + $0x8] sm:$0xf]
        %v1229 = vld [vmem:[#allocation8 + $0xc] sm:$0xf]
        %v1230 = vld [vmem:[#allocation8 + $0x10] sm:$0x3]
        %v1231 = vld [vmem:[#allocation9] sm:$0x1]
        %v1233 = vlaneseq
        %v1234 = vshrl.u32 %v1233, 7
        %v1235 = vsub.s32 0, %v1234
        %v1236 = vrot.slane %v1231, %v1235
        %v1246 = vunpack.c.l.b16 %v1218
        %v1247 = vunpack.c.l.b16 %v1219
        %v1248 = vunpack.c.l.b16 %v1220
        %v1249 = vunpack.c.l.b16 %v1221
        %v1250 = vunpack.c.l.b16 %v1222
        %v1251 = vunpack.c.l.b16 %v1223
        %v1252 = vunpack.c.l.b16 %v1224
        %v1253 = vunpack.c.l.b16 %v1225
        %v1254 = vpack.c.b16 %v1247, %v1246
        %v1255 = vpack.c.b16 %v1249, %v1248
        %v1256 = vpack.c.b16 %v1251, %v1250
        %v1257 = vpack.c.b16 %v1253, %v1252
        %v1263 = vunpack.c.l.b16 %v1226
        %v1264 = vunpack.c.l.b16 %v1227
        %v1265 = vunpack.c.l.b16 %v1228
        %v1266 = vunpack.c.l.b16 %v1229
        %v1267 = vunpack.c.l.b16 %v1230
        %v1268 = vpack.c.b16 %v1264, %v1263
        %v1269 = vpack.c.b16 %v1266, %v1265
        %v1270 = vpack.c.b16 %v1267, %v1267
        %v1274 = vsel %vm547, %v1254, 0
        %v1277 = vsel %vm547, %v1255, 0
        %v1280 = vsel %vm547, %v1256, 0
        %v1283 = vsel %vm547, %v1257, 0
        %v1286 = vsel %vm560, %v1270, 0
        %1288 = vmatprep.subr.bf16.mxu0 0
        %1289 = vmatpush1.bf16.msra.mxu0 %v1268
        %1290 = vmatprep.subr.bf16.mxu0 0
        %1291 = vmatpush1.bf16.msra.mxu0 %v1269
        %1292 = vmatprep.subr.bf16.mxu0 0
        %1293 = vmatpush1.bf16.msra.mxu0 %v1286
        %1294 = vmatprep.subr.bf16.mxu0 0
        %1295 = vmatpush1.bf16.msra.mxu0 0
        %1296 = vmatprep.subr.bf16.mxu0 0
        %1297 = vmatpush1.bf16.msra.mxu0 0
        %1298 = vmatprep.subr.bf16.mxu0 0
        %1299 = vmatpush1.bf16.msra.mxu0 0
        %1300 = vmatprep.subr.bf16.mxu0 0
        %1301 = vmatpush1.bf16.msra.mxu0 0
        %1302 = vmatprep.subr.bf16.mxu0 0
        %1303 = vmatpush1.bf16.msra.mxu0 0
        %1304 = vmatprep.subr.bf16.mxu0 0
        %1305 = vmatpush1.bf16.msra.mxu0 0
        %1306 = vmatprep.subr.bf16.mxu0 0
        %1307 = vmatpush1.bf16.msra.mxu0 0
        %1308 = vmatprep.subr.bf16.mxu0 0
        %1309 = vmatpush1.bf16.msra.mxu0 0
        %1310 = vmatprep.subr.bf16.mxu0 0
        %1311 = vmatpush1.bf16.msra.mxu0 0
        %1312 = vmatprep.subr.bf16.mxu0 0
        %1313 = vmatpush1.bf16.msra.mxu0 0
        %1314 = vmatprep.subr.bf16.mxu0 0
        %1315 = vmatpush1.bf16.msra.mxu0 0
        %1316 = vmatprep.subr.bf16.mxu0 0
        %1317 = vmatpush1.bf16.msra.mxu0 0
        %1318 = vmatprep.subr.bf16.mxu0 0
        %1319 = vmatpush1.bf16.msra.mxu0 0
        %1320 = vmatprep.mubr.bf16.mxu0 0
        %1321 = vmatmul.mubr.bf16.gmra.mrb[0].mxu0 %v1274
        %v1322 = vpop.f32.mrb[0].mxu0
        %v1323 = vadd.f32 %v1236, %v1322
        %v1324 = vpop.f32.mrb[0].mxu0
        %v1325 = vpop.f32.mrb[0].mxu0
        %v1326 = vadd.f32 %v1236, %v1325
        %v1327 = vpop.f32.mrb[0].mxu0
        %1328 = vmatprep.mubr.bf16.mxu0 0
        %1329 = vmatmul.mubr.bf16.gmra.mrb[0].mxu0 %v1277
        %v1330 = vpop.f32.mrb[0].mxu0
        %v1331 = vadd.f32 %v1236, %v1330
        %v1332 = vpop.f32.mrb[0].mxu0
        %v1333 = vpop.f32.mrb[0].mxu0
        %v1334 = vadd.f32 %v1236, %v1333
        %v1335 = vpop.f32.mrb[0].mxu0
        %1336 = vmatprep.mubr.bf16.mxu0 0
        %1337 = vmatmul.mubr.bf16.gmra.mrb[0].mxu0 %v1280
        %v1338 = vpop.f32.mrb[0].mxu0
        %v1339 = vadd.f32 %v1236, %v1338
        %v1340 = vpop.f32.mrb[0].mxu0
        %v1341 = vpop.f32.mrb[0].mxu0
        %v1342 = vadd.f32 %v1236, %v1341
        %v1343 = vpop.f32.mrb[0].mxu0
        %1344 = vmatprep.mubr.bf16.mxu0 0
        %1345 = vmatmul.mubr.bf16.gmra.mrb[0].mxu0 %v1283
        %v1346 = vpop.f32.mrb[0].mxu0
        %v1347 = vadd.f32 %v1236, %v1346
        %v1348 = vpop.f32.mrb[0].mxu0
        %v1349 = vpop.f32.mrb[0].mxu0
        %v1350 = vadd.f32 %v1236, %v1349
        %v1351 = vpop.f32.mrb[0].mxu0
        %1352 = vdwg.mxu0
        %s1353 = scalar_lea.vmem %s419, 192 [#allocation6]
        %v1354 = vld [vmem:[%s1353] sm:$0xff]
        %v1355 = vld [vmem:[%s1353 + $0x8] sm:$0xff]
        %v1356 = vld [vmem:[%s1353 + $0x10] sm:$0xff]
        %v1357 = vld [vmem:[%s1353 + $0x18] sm:$0xff]
        %v1358 = vld [vmem:[%s1353 + $0x20] sm:$0xff]
        %v1359 = vld [vmem:[%s1353 + $0x28] sm:$0xff]
        %v1360 = vld [vmem:[%s1353 + $0x30] sm:$0xff]
        %v1361 = vld [vmem:[%s1353 + $0x38] sm:$0xf]
        %1363 = vset.pattern.permute.xlu0 0
        %1364 = vperm.xlu0 %1363, %v1354
        %v1365 = vpop.permute.xlu0 %1364
        %1368 = vset.pattern.permute.xlu0 0
        %1369 = vperm.xlu0 %1368, %v1355
        %v1370 = vpop.permute.xlu0 %1369
        %1373 = vset.pattern.permute.xlu0 0
        %1374 = vperm.xlu0 %1373, %v1356
        %v1375 = vpop.permute.xlu0 %1374
        %1378 = vset.pattern.permute.xlu0 0
        %1379 = vperm.xlu0 %1378, %v1357
        %v1380 = vpop.permute.xlu0 %1379
        %1383 = vset.pattern.permute.xlu0 0
        %1384 = vperm.xlu0 %1383, %v1358
        %v1385 = vpop.permute.xlu0 %1384
        %1388 = vset.pattern.permute.xlu0 0
        %1389 = vperm.xlu0 %1388, %v1359
        %v1390 = vpop.permute.xlu0 %1389
        %1393 = vset.pattern.permute.xlu0 0
        %1394 = vperm.xlu0 %1393, %v1360
        %v1395 = vpop.permute.xlu0 %1394
        %1398 = vset.pattern.permute.xlu0 0
        %1399 = vperm.xlu0 %1398, %v1361
        %v1400 = vpop.permute.xlu0 %1399
        %v1402 = vadd.f32 %v1323, %v1365
        %v1403 = vadd.f32 %v1326, %v1370
        %v1404 = vadd.f32 %v1331, %v1375
        %v1405 = vadd.f32 %v1334, %v1380
        %v1406 = vadd.f32 %v1339, %v1385
        %v1407 = vadd.f32 %v1342, %v1390
        %v1408 = vadd.f32 %v1347, %v1395
        %v1409 = vadd.f32 %v1350, %v1400
        %v1410 = vmax.f32 %v1402, 0.0
        %v1411 = vmax.f32 %v1403, 0.0
        %v1412 = vmax.f32 %v1404, 0.0
        %v1413 = vmax.f32 %v1405, 0.0
        %v1414 = vmax.f32 %v1406, 0.0
        %v1415 = vmax.f32 %v1407, 0.0
        %v1416 = vmax.f32 %v1408, 0.0
        %v1417 = vmax.f32 %v1409, 0.0
        %v1418 = vpack.c.bf16 %v1411, %v1410
        %v1419 = vpack.c.bf16 %v1413, %v1412
        %v1420 = vpack.c.bf16 %v1415, %v1414
        %v1421 = vpack.c.bf16 %v1417, %v1416
        %v1426 = vunpack.c.l.b16 %v1418
        %v1427 = vunpack.c.h.b16 %v1418
        %v1428 = vunpack.c.l.b16 %v1419
        %v1429 = vunpack.c.h.b16 %v1419
        %v1430 = vunpack.c.l.b16 %v1420
        %v1431 = vunpack.c.h.b16 %v1420
        %v1432 = vunpack.c.l.b16 %v1421
        %v1433 = vunpack.c.h.b16 %v1421
        %v1434 = vpack.c.b16 %v1426, %v1426
        %v1435 = vpack.c.b16 %v1427, %v1427
        %v1436 = vpack.c.b16 %v1428, %v1428
        %v1437 = vpack.c.b16 %v1429, %v1429
        %v1438 = vpack.c.b16 %v1430, %v1430
        %v1439 = vpack.c.b16 %v1431, %v1431
        %v1440 = vpack.c.b16 %v1432, %v1432
        %v1441 = vpack.c.b16 %v1433, %v1433
        %s1450 = scalar_lea.vmem [#allocation2], 96
        %1451 = vst [vmem:[%s1450] sm:$0xf] %v1434
        %1452 = vst [vmem:[%s1450 + $0x4] sm:$0xf] %v1435
        %1453 = vst [vmem:[%s1450 + $0x8] sm:$0xf] %v1436
        %1454 = vst [vmem:[%s1450 + $0xc] sm:$0xf] %v1437
        %1455 = vst [vmem:[%s1450 + $0x10] sm:$0xf] %v1438
        %1456 = vst [vmem:[%s1450 + $0x14] sm:$0xf] %v1439
        %1457 = vst [vmem:[%s1450 + $0x18] sm:$0xf] %v1440
        %1458 = vst [vmem:[%s1450 + $0x1c] sm:$0x3] %v1441
        %v1459 = vld [vmem:[%s444] sm:$0xf]
        %v1460 = vld [vmem:[%s444 + $0x4] sm:$0xf]
        %v1461 = vld [vmem:[%s444 + $0x8] sm:$0xf]
        %v1462 = vld [vmem:[%s444 + $0xc] sm:$0xf]
        %v1463 = vld [vmem:[%s444 + $0x10] sm:$0xf]
        %v1464 = vld [vmem:[#allocation15] sm:$0xf]
        %v1465 = vld [vmem:[#allocation15 + $0x4] sm:$0xf]
        %v1466 = vld [vmem:[#allocation12] sm:$0x1]
        %v1468 = vlaneseq
        %v1469 = vshrl.u32 %v1468, 7
        %v1470 = vsub.s32 0, %v1469
        %v1471 = vrot.slane %v1466, %v1470
        %v1478 = vunpack.c.l.b16 %v1459
        %v1479 = vunpack.c.l.b16 %v1460
        %v1480 = vunpack.c.l.b16 %v1461
        %v1481 = vunpack.c.l.b16 %v1462
        %v1482 = vunpack.c.l.b16 %v1463
        %v1483 = vpack.c.b16 %v1479, %v1478
        %v1484 = vpack.c.b16 %v1481, %v1480
        %v1485 = vpack.c.b16 %v1482, %v1482
        %v1488 = vunpack.c.l.b16 %v1464
        %v1489 = vunpack.c.l.b16 %v1465
        %v1490 = vpack.c.b16 %v1489, %v1488
        %vm1492 = vcmask 130048
        %v1494 = vsel %vm1492, %v1483, 0
        %v1497 = vsel %vm1492, %v1484, 0
        %v1500 = vsel %vm1492, %v1485, 0
        %1502 = vmatprep.subr.bf16.mxu0 0
        %1503 = vmatpush1.bf16.msra.mxu0 %v1490
        %1504 = vmatprep.subr.bf16.mxu0 0
        %1505 = vmatpush1.bf16.msra.mxu0 0
        %1506 = vmatprep.subr.bf16.mxu0 0
        %1507 = vmatpush1.bf16.msra.mxu0 0
        %1508 = vmatprep.subr.bf16.mxu0 0
        %1509 = vmatpush1.bf16.msra.mxu0 0
        %1510 = vmatprep.subr.bf16.mxu0 0
        %1511 = vmatpush1.bf16.msra.mxu0 0
        %1512 = vmatprep.subr.bf16.mxu0 0
        %1513 = vmatpush1.bf16.msra.mxu0 0
        %1514 = vmatprep.subr.bf16.mxu0 0
        %1515 = vmatpush1.bf16.msra.mxu0 0
        %1516 = vmatprep.subr.bf16.mxu0 0
        %1517 = vmatpush1.bf16.msra.mxu0 0
        %1518 = vmatprep.subr.bf16.mxu0 0
        %1519 = vmatpush1.bf16.msra.mxu0 0
        %1520 = vmatprep.subr.bf16.mxu0 0
        %1521 = vmatpush1.bf16.msra.mxu0 0
        %1522 = vmatprep.subr.bf16.mxu0 0
        %1523 = vmatpush1.bf16.msra.mxu0 0
        %1524 = vmatprep.subr.bf16.mxu0 0
        %1525 = vmatpush1.bf16.msra.mxu0 0
        %1526 = vmatprep.subr.bf16.mxu0 0
        %1527 = vmatpush1.bf16.msra.mxu0 0
        %1528 = vmatprep.subr.bf16.mxu0 0
        %1529 = vmatpush1.bf16.msra.mxu0 0
        %1530 = vmatprep.subr.bf16.mxu0 0
        %1531 = vmatpush1.bf16.msra.mxu0 0
        %1532 = vmatprep.subr.bf16.mxu0 0
        %1533 = vmatpush1.bf16.msra.mxu0 0
        %1534 = vmatprep.mubr.bf16.mxu0 0
        %1535 = vmatmul.mubr.bf16.gmra.mrb[0].mxu0 %v1494
        %v1536 = vpop.f32.mrb[0].mxu0
        %v1537 = vadd.f32 %v1471, %v1536
        %v1538 = vpop.f32.mrb[0].mxu0
        %v1539 = vpop.f32.mrb[0].mxu0
        %v1540 = vadd.f32 %v1471, %v1539
        %v1541 = vpop.f32.mrb[0].mxu0
        %1542 = vmatprep.mubr.bf16.mxu0 0
        %1543 = vmatmul.mubr.bf16.gmra.mrb[0].mxu0 %v1497
        %v1544 = vpop.f32.mrb[0].mxu0
        %v1545 = vadd.f32 %v1471, %v1544
        %v1546 = vpop.f32.mrb[0].mxu0
        %v1547 = vpop.f32.mrb[0].mxu0
        %v1548 = vadd.f32 %v1471, %v1547
        %v1549 = vpop.f32.mrb[0].mxu0
        %1550 = vmatprep.mubr.bf16.mxu0 0
        %1551 = vmatmul.mubr.bf16.gmra.mrb[0].mxu0 %v1500
        %v1552 = vpop.f32.mrb[0].mxu0
        %v1553 = vadd.f32 %v1471, %v1552
        %v1554 = vpop.f32.mrb[0].mxu0
        %v1555 = vpop.f32.mrb[0].mxu0
        %v1556 = vpop.f32.mrb[0].mxu0
        %1557 = vdwg.mxu0
        %v1558 = vld [vmem:[#allocation2] sm:$0xf]
        %v1559 = vld [vmem:[#allocation2 + $0x4] sm:$0xf]
        %v1560 = vld [vmem:[#allocation2 + $0x8] sm:$0xf]
        %v1561 = vld [vmem:[#allocation2 + $0xc] sm:$0xf]
        %v1562 = vld [vmem:[#allocation2 + $0x10] sm:$0xf]
        %v1563 = vld [vmem:[#allocation11] sm:$0xf]
        %v1564 = vld [vmem:[#allocation11 + $0x4] sm:$0xf]
        %v1565 = vld [vmem:[#allocation11 + $0x8] sm:$0xf]
        %v1566 = vld [vmem:[#allocation11 + $0xc] sm:$0xf]
        %v1567 = vld [vmem:[#allocation11 + $0x10] sm:$0xf]
        %v1568 = vld [vmem:[#allocation11 + $0x14] sm:$0xf]
        %v1569 = vld [vmem:[#allocation11 + $0x18] sm:$0xf]
        %v1570 = vld [vmem:[#allocation11 + $0x1c] sm:$0xf]
        %v1571 = vld [vmem:[#allocation11 + $0x20] sm:$0xf]
        %v1572 = vld [vmem:[#allocation11 + $0x24] sm:$0xf]
        %v1573 = vld [vmem:[#allocation11 + $0x28] sm:$0xf]
        %v1574 = vld [vmem:[#allocation11 + $0x2c] sm:$0xf]
        %v1575 = vld [vmem:[#allocation11 + $0x30] sm:$0xf]
        %v1576 = vld [vmem:[#allocation11 + $0x34] sm:$0xf]
        %v1577 = vld [vmem:[#allocation11 + $0x38] sm:$0xf]
        %v1578 = vld [vmem:[#allocation11 + $0x3c] sm:$0xf]
        %v1584 = vunpack.c.l.b16 %v1558
        %v1585 = vunpack.c.l.b16 %v1559
        %v1586 = vunpack.c.l.b16 %v1560
        %v1587 = vunpack.c.l.b16 %v1561
        %v1588 = vunpack.c.l.b16 %v1562
        %v1589 = vpack.c.b16 %v1585, %v1584
        %v1590 = vpack.c.b16 %v1587, %v1586
        %v1591 = vpack.c.b16 %v1588, %v1588
        %v1611 = vunpack.c.l.b16 %v1563
        %v1612 = vunpack.c.l.b16 %v1564
        %v1613 = vunpack.c.l.b16 %v1565
        %v1614 = vunpack.c.l.b16 %v1566
        %v1615 = vunpack.c.l.b16 %v1567
        %v1616 = vunpack.c.l.b16 %v1568
        %v1617 = vunpack.c.l.b16 %v1569
        %v1618 = vunpack.c.l.b16 %v1570
        %v1619 = vunpack.c.l.b16 %v1571
        %v1620 = vunpack.c.l.b16 %v1572
        %v1621 = vunpack.c.l.b16 %v1573
        %v1622 = vunpack.c.l.b16 %v1574
        %v1623 = vunpack.c.l.b16 %v1575
        %v1624 = vunpack.c.l.b16 %v1576
        %v1625 = vunpack.c.l.b16 %v1577
        %v1626 = vunpack.c.l.b16 %v1578
        %v1627 = vpack.c.b16 %v1612, %v1611
        %v1628 = vpack.c.b16 %v1614, %v1613
        %v1629 = vpack.c.b16 %v1616, %v1615
        %v1630 = vpack.c.b16 %v1618, %v1617
        %v1631 = vpack.c.b16 %v1620, %v1619
        %v1632 = vpack.c.b16 %v1622, %v1621
        %v1633 = vpack.c.b16 %v1624, %v1623
        %v1634 = vpack.c.b16 %v1626, %v1625
        %1643 = vmatprep.subr.bf16.mxu0 0
        %1644 = vmatpush1.bf16.msra.mxu0 %v1627
        %1645 = vmatprep.subr.bf16.mxu0 0
        %1646 = vmatpush1.bf16.msra.mxu0 %v1628
        %1647 = vmatprep.subr.bf16.mxu0 0
        %1648 = vmatpush1.bf16.msra.mxu0 %v1629
        %1649 = vmatprep.subr.bf16.mxu0 0
        %1650 = vmatpush1.bf16.msra.mxu0 %v1630
        %1651 = vmatprep.subr.bf16.mxu0 0
        %1652 = vmatpush1.bf16.msra.mxu0 %v1631
        %1653 = vmatprep.subr.bf16.mxu0 0
        %1654 = vmatpush1.bf16.msra.mxu0 %v1632
        %1655 = vmatprep.subr.bf16.mxu0 0
        %1656 = vmatpush1.bf16.msra.mxu0 %v1633
        %1657 = vmatprep.subr.bf16.mxu0 0
        %1658 = vmatpush1.bf16.msra.mxu0 %v1634
        %1659 = vmatprep.subr.bf16.mxu0 0
        %1660 = vmatpush1.bf16.msra.mxu0 0
        %1661 = vmatprep.subr.bf16.mxu0 0
        %1662 = vmatpush1.bf16.msra.mxu0 0
        %1663 = vmatprep.subr.bf16.mxu0 0
        %1664 = vmatpush1.bf16.msra.mxu0 0
        %1665 = vmatprep.subr.bf16.mxu0 0
        %1666 = vmatpush1.bf16.msra.mxu0 0
        %1667 = vmatprep.subr.bf16.mxu0 0
        %1668 = vmatpush1.bf16.msra.mxu0 0
        %1669 = vmatprep.subr.bf16.mxu0 0
        %1670 = vmatpush1.bf16.msra.mxu0 0
        %1671 = vmatprep.subr.bf16.mxu0 0
        %1672 = vmatpush1.bf16.msra.mxu0 0
        %1673 = vmatprep.subr.bf16.mxu0 0
        %1674 = vmatpush1.bf16.msra.mxu0 0
        %1675 = vmatprep.mubr.bf16.mxu0 0
        %1676 = vmatmul.mubr.bf16.gmra.mrb[0].mxu0 %v1589
        %v1677 = vpop.f32.mrb[0].mxu0
        %v1678 = vadd.f32 0.0, %v1677
        %v1679 = vpop.f32.mrb[0].mxu0
        %v1680 = vpop.f32.mrb[0].mxu0
        %v1681 = vadd.f32 0.0, %v1680
        %v1682 = vpop.f32.mrb[0].mxu0
        %1683 = vmatprep.mubr.bf16.mxu0 0
        %1684 = vmatmul.mubr.bf16.gmra.mrb[0].mxu0 %v1590
        %v1685 = vpop.f32.mrb[0].mxu0
        %v1686 = vadd.f32 0.0, %v1685
        %v1687 = vpop.f32.mrb[0].mxu0
        %v1688 = vpop.f32.mrb[0].mxu0
        %v1689 = vadd.f32 0.0, %v1688
        %v1690 = vpop.f32.mrb[0].mxu0
        %1691 = vmatprep.mubr.bf16.mxu0 0
        %1692 = vmatmul.mubr.bf16.gmra.mrb[0].mxu0 %v1591
        %v1693 = vpop.f32.mrb[0].mxu0
        %v1694 = vadd.f32 0.0, %v1693
        %v1695 = vpop.f32.mrb[0].mxu0
        %v1696 = vpop.f32.mrb[0].mxu0
        %v1697 = vpop.f32.mrb[0].mxu0
        %1698 = vdwg.mxu0
        %v1699 = vadd.f32 %v1537, %v1678
        %v1700 = vadd.f32 %v1540, %v1681
        %v1701 = vadd.f32 %v1545, %v1686
        %v1702 = vadd.f32 %v1548, %v1689
        %v1703 = vadd.f32 %v1553, %v1694
        %v1704 = vld [vmem:[%s966] sm:$0xf]
        %v1705 = vld [vmem:[%s966 + $0x4] sm:$0xf]
        %v1706 = vld [vmem:[%s966 + $0x8] sm:$0xf]
        %v1707 = vld [vmem:[%s966 + $0xc] sm:$0xf]
        %v1708 = vld [vmem:[%s966 + $0x10] sm:$0xf]
        %s1709 = scalar_lea.vmem [#allocation11], 64
        %v1710 = vld [vmem:[%s1709] sm:$0xf]
        %v1711 = vld [vmem:[%s1709 + $0x4] sm:$0xf]
        %v1712 = vld [vmem:[%s1709 + $0x8] sm:$0xf]
        %v1713 = vld [vmem:[%s1709 + $0xc] sm:$0xf]
        %v1714 = vld [vmem:[%s1709 + $0x10] sm:$0xf]
        %v1715 = vld [vmem:[%s1709 + $0x14] sm:$0xf]
        %v1716 = vld [vmem:[%s1709 + $0x18] sm:$0xf]
        %v1717 = vld [vmem:[%s1709 + $0x1c] sm:$0xf]
        %v1718 = vld [vmem:[%s1709 + $0x20] sm:$0xf]
        %v1719 = vld [vmem:[%s1709 + $0x24] sm:$0xf]
        %v1720 = vld [vmem:[%s1709 + $0x28] sm:$0xf]
        %v1721 = vld [vmem:[%s1709 + $0x2c] sm:$0xf]
        %v1722 = vld [vmem:[%s1709 + $0x30] sm:$0xf]
        %v1723 = vld [vmem:[%s1709 + $0x34] sm:$0xf]
        %v1724 = vld [vmem:[%s1709 + $0x38] sm:$0xf]
        %v1725 = vld [vmem:[%s1709 + $0x3c] sm:$0xf]
        %v1731 = vunpack.c.l.b16 %v1704
        %v1732 = vunpack.c.l.b16 %v1705
        %v1733 = vunpack.c.l.b16 %v1706
        %v1734 = vunpack.c.l.b16 %v1707
        %v1735 = vunpack.c.l.b16 %v1708
        %v1736 = vpack.c.b16 %v1732, %v1731
        %v1737 = vpack.c.b16 %v1734, %v1733
        %v1738 = vpack.c.b16 %v1735, %v1735
        %v1758 = vunpack.c.l.b16 %v1710
        %v1759 = vunpack.c.l.b16 %v1711
        %v1760 = vunpack.c.l.b16 %v1712
        %v1761 = vunpack.c.l.b16 %v1713
        %v1762 = vunpack.c.l.b16 %v1714
        %v1763 = vunpack.c.l.b16 %v1715
        %v1764 = vunpack.c.l.b16 %v1716
        %v1765 = vunpack.c.l.b16 %v1717
        %v1766 = vunpack.c.l.b16 %v1718
        %v1767 = vunpack.c.l.b16 %v1719
        %v1768 = vunpack.c.l.b16 %v1720
        %v1769 = vunpack.c.l.b16 %v1721
        %v1770 = vunpack.c.l.b16 %v1722
        %v1771 = vunpack.c.l.b16 %v1723
        %v1772 = vunpack.c.l.b16 %v1724
        %v1773 = vunpack.c.l.b16 %v1725
        %v1774 = vpack.c.b16 %v1759, %v1758
        %v1775 = vpack.c.b16 %v1761, %v1760
        %v1776 = vpack.c.b16 %v1763, %v1762
        %v1777 = vpack.c.b16 %v1765, %v1764
        %v1778 = vpack.c.b16 %v1767, %v1766
        %v1779 = vpack.c.b16 %v1769, %v1768
        %v1780 = vpack.c.b16 %v1771, %v1770
        %v1781 = vpack.c.b16 %v1773, %v1772
        %1790 = vmatprep.subr.bf16.mxu0 0
        %1791 = vmatpush1.bf16.msra.mxu0 %v1774
        %1792 = vmatprep.subr.bf16.mxu0 0
        %1793 = vmatpush1.bf16.msra.mxu0 %v1775
        %1794 = vmatprep.subr.bf16.mxu0 0
        %1795 = vmatpush1.bf16.msra.mxu0 %v1776
        %1796 = vmatprep.subr.bf16.mxu0 0
        %1797 = vmatpush1.bf16.msra.mxu0 %v1777
        %1798 = vmatprep.subr.bf16.mxu0 0
        %1799 = vmatpush1.bf16.msra.mxu0 %v1778
        %1800 = vmatprep.subr.bf16.mxu0 0
        %1801 = vmatpush1.bf16.msra.mxu0 %v1779
        %1802 = vmatprep.subr.bf16.mxu0 0
        %1803 = vmatpush1.bf16.msra.mxu0 %v1780
        %1804 = vmatprep.subr.bf16.mxu0 0
        %1805 = vmatpush1.bf16.msra.mxu0 %v1781
        %1806 = vmatprep.subr.bf16.mxu0 0
        %1807 = vmatpush1.bf16.msra.mxu0 0
        %1808 = vmatprep.subr.bf16.mxu0 0
        %1809 = vmatpush1.bf16.msra.mxu0 0
        %1810 = vmatprep.subr.bf16.mxu0 0
        %1811 = vmatpush1.bf16.msra.mxu0 0
        %1812 = vmatprep.subr.bf16.mxu0 0
        %1813 = vmatpush1.bf16.msra.mxu0 0
        %1814 = vmatprep.subr.bf16.mxu0 0
        %1815 = vmatpush1.bf16.msra.mxu0 0
        %1816 = vmatprep.subr.bf16.mxu0 0
        %1817 = vmatpush1.bf16.msra.mxu0 0
        %1818 = vmatprep.subr.bf16.mxu0 0
        %1819 = vmatpush1.bf16.msra.mxu0 0
        %1820 = vmatprep.subr.bf16.mxu0 0
        %1821 = vmatpush1.bf16.msra.mxu0 0
        %1822 = vmatprep.mubr.bf16.mxu0 0
        %1823 = vmatmul.mubr.bf16.gmra.mrb[0].mxu0 %v1736
        %v1824 = vpop.f32.mrb[0].mxu0
        %v1825 = vadd.f32 0.0, %v1824
        %v1826 = vpop.f32.mrb[0].mxu0
        %v1827 = vpop.f32.mrb[0].mxu0
        %v1828 = vadd.f32 0.0, %v1827
        %v1829 = vpop.f32.mrb[0].mxu0
        %1830 = vmatprep.mubr.bf16.mxu0 0
        %1831 = vmatmul.mubr.bf16.gmra.mrb[0].mxu0 %v1737
        %v1832 = vpop.f32.mrb[0].mxu0
        %v1833 = vadd.f32 0.0, %v1832
        %v1834 = vpop.f32.mrb[0].mxu0
        %v1835 = vpop.f32.mrb[0].mxu0
        %v1836 = vadd.f32 0.0, %v1835
        %v1837 = vpop.f32.mrb[0].mxu0
        %1838 = vmatprep.mubr.bf16.mxu0 0
        %1839 = vmatmul.mubr.bf16.gmra.mrb[0].mxu0 %v1738
        %v1840 = vpop.f32.mrb[0].mxu0
        %v1841 = vadd.f32 0.0, %v1840
        %v1842 = vpop.f32.mrb[0].mxu0
        %v1843 = vpop.f32.mrb[0].mxu0
        %v1844 = vpop.f32.mrb[0].mxu0
        %1845 = vdwg.mxu0
        %v1846 = vadd.f32 %v1699, %v1825
        %v1847 = vadd.f32 %v1700, %v1828
        %v1848 = vadd.f32 %v1701, %v1833
        %v1849 = vadd.f32 %v1702, %v1836
        %v1850 = vadd.f32 %v1703, %v1841
        %v1851 = vld [vmem:[#allocation2] sm:$0xf]
        %v1852 = vld [vmem:[#allocation2 + $0x4] sm:$0xf]
        %v1853 = vld [vmem:[#allocation2 + $0x8] sm:$0xf]
        %v1854 = vld [vmem:[#allocation2 + $0xc] sm:$0xf]
        %v1855 = vld [vmem:[#allocation2 + $0x10] sm:$0xf]
        %v1856 = vld [vmem:[#allocation2 + $0x14] sm:$0x1]
        %s1857 = scalar_lea.vmem [#allocation11], 128
        %v1858 = vld [vmem:[%s1857] sm:$0xf]
        %v1859 = vld [vmem:[%s1857 + $0x4] sm:$0xf]
        %v1860 = vld [vmem:[%s1857 + $0x8] sm:$0xf]
        %v1861 = vld [vmem:[%s1857 + $0xc] sm:$0xf]
        %v1862 = vld [vmem:[%s1857 + $0x10] sm:$0xf]
        %v1863 = vld [vmem:[%s1857 + $0x14] sm:$0xf]
        %v1864 = vld [vmem:[%s1857 + $0x18] sm:$0xf]
        %v1865 = vld [vmem:[%s1857 + $0x1c] sm:$0xf]
        %v1866 = vld [vmem:[%s1857 + $0x20] sm:$0xf]
        %v1867 = vld [vmem:[%s1857 + $0x24] sm:$0xf]
        %v1868 = vld [vmem:[%s1857 + $0x28] sm:$0xf]
        %v1869 = vld [vmem:[%s1857 + $0x2c] sm:$0xf]
        %v1870 = vld [vmem:[%s1857 + $0x30] sm:$0xf]
        %v1871 = vld [vmem:[%s1857 + $0x34] sm:$0xf]
        %v1872 = vld [vmem:[%s1857 + $0x38] sm:$0xf]
        %v1873 = vld [vmem:[%s1857 + $0x3c] sm:$0xf]
        %v1880 = vunpack.c.l.b16 %v1851
        %v1881 = vunpack.c.l.b16 %v1852
        %v1882 = vunpack.c.l.b16 %v1853
        %v1883 = vunpack.c.l.b16 %v1854
        %v1884 = vunpack.c.l.b16 %v1855
        %v1885 = vunpack.c.l.b16 %v1856
        %v1886 = vpack.c.b16 %v1881, %v1880
        %v1887 = vpack.c.b16 %v1883, %v1882
        %v1888 = vpack.c.b16 %v1885, %v1884
        %vm1889 = vsmask.f32 7424
        %v1891 = vshrl.u32 %v1886, 16
        %v1893 = vshll.u32 %v1886, 16
        %v1895 = vrot.slane %v1893, 1
        %v1896 = vor.u32 %v1891, %v1895
        %v1898 = vshll.u32 %v1887, 16
        %v1900 = vrot.slane %v1898, 1
        %v1901 = vsel %vm1889, %v1896, %v1900
        %v1902 = vshrl.u32 %v1887, 16
        %v1904 = vor.u32 %v1902, %v1900
        %v1906 = vshll.u32 %v1888, 16
        %v1908 = vrot.slane %v1906, 1
        %v1909 = vsel %vm1889, %v1904, %v1908
        %v1910 = vshrl.u32 %v1888, 16
        %v1912 = vor.u32 %v1910, %v1908
        %v1932 = vunpack.c.l.b16 %v1858
        %v1933 = vunpack.c.l.b16 %v1859
        %v1934 = vunpack.c.l.b16 %v1860
        %v1935 = vunpack.c.l.b16 %v1861
        %v1936 = vunpack.c.l.b16 %v1862
        %v1937 = vunpack.c.l.b16 %v1863
        %v1938 = vunpack.c.l.b16 %v1864
        %v1939 = vunpack.c.l.b16 %v1865
        %v1940 = vunpack.c.l.b16 %v1866
        %v1941 = vunpack.c.l.b16 %v1867
        %v1942 = vunpack.c.l.b16 %v1868
        %v1943 = vunpack.c.l.b16 %v1869
        %v1944 = vunpack.c.l.b16 %v1870
        %v1945 = vunpack.c.l.b16 %v1871
        %v1946 = vunpack.c.l.b16 %v1872
        %v1947 = vunpack.c.l.b16 %v1873
        %v1948 = vpack.c.b16 %v1933, %v1932
        %v1949 = vpack.c.b16 %v1935, %v1934
        %v1950 = vpack.c.b16 %v1937, %v1936
        %v1951 = vpack.c.b16 %v1939, %v1938
        %v1952 = vpack.c.b16 %v1941, %v1940
        %v1953 = vpack.c.b16 %v1943, %v1942
        %v1954 = vpack.c.b16 %v1945, %v1944
        %v1955 = vpack.c.b16 %v1947, %v1946
        %1964 = vmatprep.subr.bf16.mxu0 0
        %1965 = vmatpush1.bf16.msra.mxu0 %v1948
        %1966 = vmatprep.subr.bf16.mxu0 0
        %1967 = vmatpush1.bf16.msra.mxu0 %v1949
        %1968 = vmatprep.subr.bf16.mxu0 0
        %1969 = vmatpush1.bf16.msra.mxu0 %v1950
        %1970 = vmatprep.subr.bf16.mxu0 0
        %1971 = vmatpush1.bf16.msra.mxu0 %v1951
        %1972 = vmatprep.subr.bf16.mxu0 0
        %1973 = vmatpush1.bf16.msra.mxu0 %v1952
        %1974 = vmatprep.subr.bf16.mxu0 0
        %1975 = vmatpush1.bf16.msra.mxu0 %v1953
        %1976 = vmatprep.subr.bf16.mxu0 0
        %1977 = vmatpush1.bf16.msra.mxu0 %v1954
        %1978 = vmatprep.subr.bf16.mxu0 0
        %1979 = vmatpush1.bf16.msra.mxu0 %v1955
        %1980 = vmatprep.subr.bf16.mxu0 0
        %1981 = vmatpush1.bf16.msra.mxu0 0
        %1982 = vmatprep.subr.bf16.mxu0 0
        %1983 = vmatpush1.bf16.msra.mxu0 0
        %1984 = vmatprep.subr.bf16.mxu0 0
        %1985 = vmatpush1.bf16.msra.mxu0 0
        %1986 = vmatprep.subr.bf16.mxu0 0
        %1987 = vmatpush1.bf16.msra.mxu0 0
        %1988 = vmatprep.subr.bf16.mxu0 0
        %1989 = vmatpush1.bf16.msra.mxu0 0
        %1990 = vmatprep.subr.bf16.mxu0 0
        %1991 = vmatpush1.bf16.msra.mxu0 0
        %1992 = vmatprep.subr.bf16.mxu0 0
        %1993 = vmatpush1.bf16.msra.mxu0 0
        %1994 = vmatprep.subr.bf16.mxu0 0
        %1995 = vmatpush1.bf16.msra.mxu0 0
        %1996 = vmatprep.mubr.bf16.mxu0 0
        %1997 = vmatmul.mubr.bf16.gmra.mrb[0].mxu0 %v1901
        %v1998 = vpop.f32.mrb[0].mxu0
        %v1999 = vadd.f32 0.0, %v1998
        %v2000 = vpop.f32.mrb[0].mxu0
        %v2001 = vpop.f32.mrb[0].mxu0
        %v2002 = vadd.f32 0.0, %v2001
        %v2003 = vpop.f32.mrb[0].mxu0
        %2004 = vmatprep.mubr.bf16.mxu0 0
        %2005 = vmatmul.mubr.bf16.gmra.mrb[0].mxu0 %v1909
        %v2006 = vpop.f32.mrb[0].mxu0
        %v2007 = vadd.f32 0.0, %v2006
        %v2008 = vpop.f32.mrb[0].mxu0
        %v2009 = vpop.f32.mrb[0].mxu0
        %v2010 = vadd.f32 0.0, %v2009
        %v2011 = vpop.f32.mrb[0].mxu0
        %2012 = vmatprep.mubr.bf16.mxu0 0
        %2013 = vmatmul.mubr.bf16.gmra.mrb[0].mxu0 %v1912
        %v2014 = vpop.f32.mrb[0].mxu0
        %v2015 = vadd.f32 0.0, %v2014
        %v2016 = vpop.f32.mrb[0].mxu0
        %v2017 = vpop.f32.mrb[0].mxu0
        %v2018 = vpop.f32.mrb[0].mxu0
        %2019 = vdwg.mxu0
        %v2020 = vadd.f32 %v1846, %v1999
        %v2021 = vadd.f32 %v1847, %v2002
        %v2022 = vadd.f32 %v1848, %v2007
        %v2023 = vadd.f32 %v1849, %v2010
        %v2024 = vadd.f32 %v1850, %v2015
        %v2025 = vld [vmem:[%s966] sm:$0xf]
        %v2026 = vld [vmem:[%s966 + $0x4] sm:$0xf]
        %v2027 = vld [vmem:[%s966 + $0x8] sm:$0xf]
        %v2028 = vld [vmem:[%s966 + $0xc] sm:$0xf]
        %v2029 = vld [vmem:[%s966 + $0x10] sm:$0xf]
        %v2030 = vld [vmem:[%s966 + $0x14] sm:$0x1]
        %s2031 = scalar_lea.vmem [#allocation11], 192
        %v2032 = vld [vmem:[%s2031] sm:$0xf]
        %v2033 = vld [vmem:[%s2031 + $0x4] sm:$0xf]
        %v2034 = vld [vmem:[%s2031 + $0x8] sm:$0xf]
        %v2035 = vld [vmem:[%s2031 + $0xc] sm:$0xf]
        %v2036 = vld [vmem:[%s2031 + $0x10] sm:$0xf]
        %v2037 = vld [vmem:[%s2031 + $0x14] sm:$0xf]
        %v2038 = vld [vmem:[%s2031 + $0x18] sm:$0xf]
        %v2039 = vld [vmem:[%s2031 + $0x1c] sm:$0xf]
        %v2040 = vld [vmem:[%s2031 + $0x20] sm:$0xf]
        %v2041 = vld [vmem:[%s2031 + $0x24] sm:$0xf]
        %v2042 = vld [vmem:[%s2031 + $0x28] sm:$0xf]
        %v2043 = vld [vmem:[%s2031 + $0x2c] sm:$0xf]
        %v2044 = vld [vmem:[%s2031 + $0x30] sm:$0xf]
        %v2045 = vld [vmem:[%s2031 + $0x34] sm:$0xf]
        %v2046 = vld [vmem:[%s2031 + $0x38] sm:$0xf]
        %v2047 = vld [vmem:[%s2031 + $0x3c] sm:$0xf]
        %v2054 = vunpack.c.l.b16 %v2025
        %v2055 = vunpack.c.l.b16 %v2026
        %v2056 = vunpack.c.l.b16 %v2027
        %v2057 = vunpack.c.l.b16 %v2028
        %v2058 = vunpack.c.l.b16 %v2029
        %v2059 = vunpack.c.l.b16 %v2030
        %v2060 = vpack.c.b16 %v2055, %v2054
        %v2061 = vpack.c.b16 %v2057, %v2056
        %v2062 = vpack.c.b16 %v2059, %v2058
        %v2064 = vshrl.u32 %v2060, 16
        %v2066 = vshll.u32 %v2060, 16
        %v2068 = vrot.slane %v2066, 1
        %v2069 = vor.u32 %v2064, %v2068
        %v2071 = vshll.u32 %v2061, 16
        %v2073 = vrot.slane %v2071, 1
        %v2074 = vsel %vm1889, %v2069, %v2073
        %v2075 = vshrl.u32 %v2061, 16
        %v2077 = vor.u32 %v2075, %v2073
        %v2079 = vshll.u32 %v2062, 16
        %v2081 = vrot.slane %v2079, 1
        %v2082 = vsel %vm1889, %v2077, %v2081
        %v2083 = vshrl.u32 %v2062, 16
        %v2085 = vor.u32 %v2083, %v2081
        %v2105 = vunpack.c.l.b16 %v2032
        %v2106 = vunpack.c.l.b16 %v2033
        %v2107 = vunpack.c.l.b16 %v2034
        %v2108 = vunpack.c.l.b16 %v2035
        %v2109 = vunpack.c.l.b16 %v2036
        %v2110 = vunpack.c.l.b16 %v2037
        %v2111 = vunpack.c.l.b16 %v2038
        %v2112 = vunpack.c.l.b16 %v2039
        %v2113 = vunpack.c.l.b16 %v2040
        %v2114 = vunpack.c.l.b16 %v2041
        %v2115 = vunpack.c.l.b16 %v2042
        %v2116 = vunpack.c.l.b16 %v2043
        %v2117 = vunpack.c.l.b16 %v2044
        %v2118 = vunpack.c.l.b16 %v2045
        %v2119 = vunpack.c.l.b16 %v2046
        %v2120 = vunpack.c.l.b16 %v2047
        %v2121 = vpack.c.b16 %v2106, %v2105
        %v2122 = vpack.c.b16 %v2108, %v2107
        %v2123 = vpack.c.b16 %v2110, %v2109
        %v2124 = vpack.c.b16 %v2112, %v2111
        %v2125 = vpack.c.b16 %v2114, %v2113
        %v2126 = vpack.c.b16 %v2116, %v2115
        %v2127 = vpack.c.b16 %v2118, %v2117
        %v2128 = vpack.c.b16 %v2120, %v2119
        %2137 = vmatprep.subr.bf16.mxu0 0
        %2138 = vmatpush1.bf16.msra.mxu0 %v2121
        %2139 = vmatprep.subr.bf16.mxu0 0
        %2140 = vmatpush1.bf16.msra.mxu0 %v2122
        %2141 = vmatprep.subr.bf16.mxu0 0
        %2142 = vmatpush1.bf16.msra.mxu0 %v2123
        %2143 = vmatprep.subr.bf16.mxu0 0
        %2144 = vmatpush1.bf16.msra.mxu0 %v2124
        %2145 = vmatprep.subr.bf16.mxu0 0
        %2146 = vmatpush1.bf16.msra.mxu0 %v2125
        %2147 = vmatprep.subr.bf16.mxu0 0
        %2148 = vmatpush1.bf16.msra.mxu0 %v2126
        %2149 = vmatprep.subr.bf16.mxu0 0
        %2150 = vmatpush1.bf16.msra.mxu0 %v2127
        %2151 = vmatprep.subr.bf16.mxu0 0
        %2152 = vmatpush1.bf16.msra.mxu0 %v2128
        %2153 = vmatprep.subr.bf16.mxu0 0
        %2154 = vmatpush1.bf16.msra.mxu0 0
        %2155 = vmatprep.subr.bf16.mxu0 0
        %2156 = vmatpush1.bf16.msra.mxu0 0
        %2157 = vmatprep.subr.bf16.mxu0 0
        %2158 = vmatpush1.bf16.msra.mxu0 0
        %2159 = vmatprep.subr.bf16.mxu0 0
        %2160 = vmatpush1.bf16.msra.mxu0 0
        %2161 = vmatprep.subr.bf16.mxu0 0
        %2162 = vmatpush1.bf16.msra.mxu0 0
        %2163 = vmatprep.subr.bf16.mxu0 0
        %2164 = vmatpush1.bf16.msra.mxu0 0
        %2165 = vmatprep.subr.bf16.mxu0 0
        %2166 = vmatpush1.bf16.msra.mxu0 0
        %2167 = vmatprep.subr.bf16.mxu0 0
        %2168 = vmatpush1.bf16.msra.mxu0 0
        %2169 = vmatprep.mubr.bf16.mxu0 0
        %2170 = vmatmul.mubr.bf16.gmra.mrb[0].mxu0 %v2074
        %v2171 = vpop.f32.mrb[0].mxu0
        %v2172 = vadd.f32 0.0, %v2171
        %v2173 = vpop.f32.mrb[0].mxu0
        %v2174 = vpop.f32.mrb[0].mxu0
        %v2175 = vadd.f32 0.0, %v2174
        %v2176 = vpop.f32.mrb[0].mxu0
        %2177 = vmatprep.mubr.bf16.mxu0 0
        %2178 = vmatmul.mubr.bf16.gmra.mrb[0].mxu0 %v2082
        %v2179 = vpop.f32.mrb[0].mxu0
        %v2180 = vadd.f32 0.0, %v2179
        %v2181 = vpop.f32.mrb[0].mxu0
        %v2182 = vpop.f32.mrb[0].mxu0
        %v2183 = vadd.f32 0.0, %v2182
        %v2184 = vpop.f32.mrb[0].mxu0
        %2185 = vmatprep.mubr.bf16.mxu0 0
        %2186 = vmatmul.mubr.bf16.gmra.mrb[0].mxu0 %v2085
        %v2187 = vpop.f32.mrb[0].mxu0
        %v2188 = vadd.f32 0.0, %v2187
        %v2189 = vpop.f32.mrb[0].mxu0
        %v2190 = vpop.f32.mrb[0].mxu0
        %v2191 = vpop.f32.mrb[0].mxu0
        %2192 = vdwg.mxu0
        %v2193 = vadd.f32 %v2020, %v2172
        %v2194 = vadd.f32 %v2021, %v2175
        %v2195 = vadd.f32 %v2022, %v2180
        %v2196 = vadd.f32 %v2023, %v2183
        %v2197 = vadd.f32 %v2024, %v2188
        %v2198 = vld [vmem:[%s1208] sm:$0xf]
        %v2199 = vld [vmem:[%s1208 + $0x4] sm:$0xf]
        %v2200 = vld [vmem:[%s1208 + $0x8] sm:$0xf]
        %v2201 = vld [vmem:[%s1208 + $0xc] sm:$0xf]
        %v2202 = vld [vmem:[%s1208 + $0x10] sm:$0xf]
        %s2203 = scalar_lea.vmem [#allocation11], 256
        %v2204 = vld [vmem:[%s2203] sm:$0xf]
        %v2205 = vld [vmem:[%s2203 + $0x4] sm:$0xf]
        %v2206 = vld [vmem:[%s2203 + $0x8] sm:$0xf]
        %v2207 = vld [vmem:[%s2203 + $0xc] sm:$0xf]
        %v2208 = vld [vmem:[%s2203 + $0x10] sm:$0xf]
        %v2209 = vld [vmem:[%s2203 + $0x14] sm:$0xf]
        %v2210 = vld [vmem:[%s2203 + $0x18] sm:$0xf]
        %v2211 = vld [vmem:[%s2203 + $0x1c] sm:$0xf]
        %v2212 = vld [vmem:[%s2203 + $0x20] sm:$0xf]
        %v2213 = vld [vmem:[%s2203 + $0x24] sm:$0xf]
        %v2214 = vld [vmem:[%s2203 + $0x28] sm:$0xf]
        %v2215 = vld [vmem:[%s2203 + $0x2c] sm:$0xf]
        %v2216 = vld [vmem:[%s2203 + $0x30] sm:$0xf]
        %v2217 = vld [vmem:[%s2203 + $0x34] sm:$0xf]
        %v2218 = vld [vmem:[%s2203 + $0x38] sm:$0xf]
        %v2219 = vld [vmem:[%s2203 + $0x3c] sm:$0xf]
        %v2225 = vunpack.c.l.b16 %v2198
        %v2226 = vunpack.c.l.b16 %v2199
        %v2227 = vunpack.c.l.b16 %v2200
        %v2228 = vunpack.c.l.b16 %v2201
        %v2229 = vunpack.c.l.b16 %v2202
        %v2230 = vpack.c.b16 %v2226, %v2225
        %v2231 = vpack.c.b16 %v2228, %v2227
        %v2232 = vpack.c.b16 %v2229, %v2229
        %v2252 = vunpack.c.l.b16 %v2204
        %v2253 = vunpack.c.l.b16 %v2205
        %v2254 = vunpack.c.l.b16 %v2206
        %v2255 = vunpack.c.l.b16 %v2207
        %v2256 = vunpack.c.l.b16 %v2208
        %v2257 = vunpack.c.l.b16 %v2209
        %v2258 = vunpack.c.l.b16 %v2210
        %v2259 = vunpack.c.l.b16 %v2211
        %v2260 = vunpack.c.l.b16 %v2212
        %v2261 = vunpack.c.l.b16 %v2213
        %v2262 = vunpack.c.l.b16 %v2214
        %v2263 = vunpack.c.l.b16 %v2215
        %v2264 = vunpack.c.l.b16 %v2216
        %v2265 = vunpack.c.l.b16 %v2217
        %v2266 = vunpack.c.l.b16 %v2218
        %v2267 = vunpack.c.l.b16 %v2219
        %v2268 = vpack.c.b16 %v2253, %v2252
        %v2269 = vpack.c.b16 %v2255, %v2254
        %v2270 = vpack.c.b16 %v2257, %v2256
        %v2271 = vpack.c.b16 %v2259, %v2258
        %v2272 = vpack.c.b16 %v2261, %v2260
        %v2273 = vpack.c.b16 %v2263, %v2262
        %v2274 = vpack.c.b16 %v2265, %v2264
        %v2275 = vpack.c.b16 %v2267, %v2266
        %2284 = vmatprep.subr.bf16.mxu0 0
        %2285 = vmatpush1.bf16.msra.mxu0 %v2268
        %2286 = vmatprep.subr.bf16.mxu0 0
        %2287 = vmatpush1.bf16.msra.mxu0 %v2269
        %2288 = vmatprep.subr.bf16.mxu0 0
        %2289 = vmatpush1.bf16.msra.mxu0 %v2270
        %2290 = vmatprep.subr.bf16.mxu0 0
        %2291 = vmatpush1.bf16.msra.mxu0 %v2271
        %2292 = vmatprep.subr.bf16.mxu0 0
        %2293 = vmatpush1.bf16.msra.mxu0 %v2272
        %2294 = vmatprep.subr.bf16.mxu0 0
        %2295 = vmatpush1.bf16.msra.mxu0 %v2273
        %2296 = vmatprep.subr.bf16.mxu0 0
        %2297 = vmatpush1.bf16.msra.mxu0 %v2274
        %2298 = vmatprep.subr.bf16.mxu0 0
        %2299 = vmatpush1.bf16.msra.mxu0 %v2275
        %2300 = vmatprep.subr.bf16.mxu0 0
        %2301 = vmatpush1.bf16.msra.mxu0 0
        %2302 = vmatprep.subr.bf16.mxu0 0
        %2303 = vmatpush1.bf16.msra.mxu0 0
        %2304 = vmatprep.subr.bf16.mxu0 0
        %2305 = vmatpush1.bf16.msra.mxu0 0
        %2306 = vmatprep.subr.bf16.mxu0 0
        %2307 = vmatpush1.bf16.msra.mxu0 0
        %2308 = vmatprep.subr.bf16.mxu0 0
        %2309 = vmatpush1.bf16.msra.mxu0 0
        %2310 = vmatprep.subr.bf16.mxu0 0
        %2311 = vmatpush1.bf16.msra.mxu0 0
        %2312 = vmatprep.subr.bf16.mxu0 0
        %2313 = vmatpush1.bf16.msra.mxu0 0
        %2314 = vmatprep.subr.bf16.mxu0 0
        %2315 = vmatpush1.bf16.msra.mxu0 0
        %2316 = vmatprep.mubr.bf16.mxu0 0
        %2317 = vmatmul.mubr.bf16.gmra.mrb[0].mxu0 %v2230
        %v2318 = vpop.f32.mrb[0].mxu0
        %v2319 = vadd.f32 0.0, %v2318
        %v2320 = vpop.f32.mrb[0].mxu0
        %v2321 = vpop.f32.mrb[0].mxu0
        %v2322 = vadd.f32 0.0, %v2321
        %v2323 = vpop.f32.mrb[0].mxu0
        %2324 = vmatprep.mubr.bf16.mxu0 0
        %2325 = vmatmul.mubr.bf16.gmra.mrb[0].mxu0 %v2231
        %v2326 = vpop.f32.mrb[0].mxu0
        %v2327 = vadd.f32 0.0, %v2326
        %v2328 = vpop.f32.mrb[0].mxu0
        %v2329 = vpop.f32.mrb[0].mxu0
        %v2330 = vadd.f32 0.0, %v2329
        %v2331 = vpop.f32.mrb[0].mxu0
        %2332 = vmatprep.mubr.bf16.mxu0 0
        %2333 = vmatmul.mubr.bf16.gmra.mrb[0].mxu0 %v2232
        %v2334 = vpop.f32.mrb[0].mxu0
        %v2335 = vadd.f32 0.0, %v2334
        %v2336 = vpop.f32.mrb[0].mxu0
        %v2337 = vpop.f32.mrb[0].mxu0
        %v2338 = vpop.f32.mrb[0].mxu0
        %2339 = vdwg.mxu0
        %v2340 = vadd.f32 %v2193, %v2319
        %v2341 = vadd.f32 %v2194, %v2322
        %v2342 = vadd.f32 %v2195, %v2327
        %v2343 = vadd.f32 %v2196, %v2330
        %v2344 = vadd.f32 %v2197, %v2335
        %v2345 = vld [vmem:[%s1450] sm:$0xf]
        %v2346 = vld [vmem:[%s1450 + $0x4] sm:$0xf]
        %v2347 = vld [vmem:[%s1450 + $0x8] sm:$0xf]
        %v2348 = vld [vmem:[%s1450 + $0xc] sm:$0xf]
        %v2349 = vld [vmem:[%s1450 + $0x10] sm:$0xf]
        %s2350 = scalar_lea.vmem [#allocation11], 320
        %v2351 = vld [vmem:[%s2350] sm:$0xf]
        %v2352 = vld [vmem:[%s2350 + $0x4] sm:$0xf]
        %v2353 = vld [vmem:[%s2350 + $0x8] sm:$0xf]
        %v2354 = vld [vmem:[%s2350 + $0xc] sm:$0xf]
        %v2355 = vld [vmem:[%s2350 + $0x10] sm:$0xf]
        %v2356 = vld [vmem:[%s2350 + $0x14] sm:$0xf]
        %v2357 = vld [vmem:[%s2350 + $0x18] sm:$0xf]
        %v2358 = vld [vmem:[%s2350 + $0x1c] sm:$0xf]
        %v2359 = vld [vmem:[%s2350 + $0x20] sm:$0xf]
        %v2360 = vld [vmem:[%s2350 + $0x24] sm:$0xf]
        %v2361 = vld [vmem:[%s2350 + $0x28] sm:$0xf]
        %v2362 = vld [vmem:[%s2350 + $0x2c] sm:$0xf]
        %v2363 = vld [vmem:[%s2350 + $0x30] sm:$0xf]
        %v2364 = vld [vmem:[%s2350 + $0x34] sm:$0xf]
        %v2365 = vld [vmem:[%s2350 + $0x38] sm:$0xf]
        %v2366 = vld [vmem:[%s2350 + $0x3c] sm:$0xf]
        %v2372 = vunpack.c.l.b16 %v2345
        %v2373 = vunpack.c.l.b16 %v2346
        %v2374 = vunpack.c.l.b16 %v2347
        %v2375 = vunpack.c.l.b16 %v2348
        %v2376 = vunpack.c.l.b16 %v2349
        %v2377 = vpack.c.b16 %v2373, %v2372
        %v2378 = vpack.c.b16 %v2375, %v2374
        %v2379 = vpack.c.b16 %v2376, %v2376
        %v2399 = vunpack.c.l.b16 %v2351
        %v2400 = vunpack.c.l.b16 %v2352
        %v2401 = vunpack.c.l.b16 %v2353
        %v2402 = vunpack.c.l.b16 %v2354
        %v2403 = vunpack.c.l.b16 %v2355
        %v2404 = vunpack.c.l.b16 %v2356
        %v2405 = vunpack.c.l.b16 %v2357
        %v2406 = vunpack.c.l.b16 %v2358
        %v2407 = vunpack.c.l.b16 %v2359
        %v2408 = vunpack.c.l.b16 %v2360
        %v2409 = vunpack.c.l.b16 %v2361
        %v2410 = vunpack.c.l.b16 %v2362
        %v2411 = vunpack.c.l.b16 %v2363
        %v2412 = vunpack.c.l.b16 %v2364
        %v2413 = vunpack.c.l.b16 %v2365
        %v2414 = vunpack.c.l.b16 %v2366
        %v2415 = vpack.c.b16 %v2400, %v2399
        %v2416 = vpack.c.b16 %v2402, %v2401
        %v2417 = vpack.c.b16 %v2404, %v2403
        %v2418 = vpack.c.b16 %v2406, %v2405
        %v2419 = vpack.c.b16 %v2408, %v2407
        %v2420 = vpack.c.b16 %v2410, %v2409
        %v2421 = vpack.c.b16 %v2412, %v2411
        %v2422 = vpack.c.b16 %v2414, %v2413
        %2431 = vmatprep.subr.bf16.mxu0 0
        %2432 = vmatpush1.bf16.msra.mxu0 %v2415
        %2433 = vmatprep.subr.bf16.mxu0 0
        %2434 = vmatpush1.bf16.msra.mxu0 %v2416
        %2435 = vmatprep.subr.bf16.mxu0 0
        %2436 = vmatpush1.bf16.msra.mxu0 %v2417
        %2437 = vmatprep.subr.bf16.mxu0 0
        %2438 = vmatpush1.bf16.msra.mxu0 %v2418
        %2439 = vmatprep.subr.bf16.mxu0 0
        %2440 = vmatpush1.bf16.msra.mxu0 %v2419
        %2441 = vmatprep.subr.bf16.mxu0 0
        %2442 = vmatpush1.bf16.msra.mxu0 %v2420
        %2443 = vmatprep.subr.bf16.mxu0 0
        %2444 = vmatpush1.bf16.msra.mxu0 %v2421
        %2445 = vmatprep.subr.bf16.mxu0 0
        %2446 = vmatpush1.bf16.msra.mxu0 %v2422
        %2447 = vmatprep.subr.bf16.mxu0 0
        %2448 = vmatpush1.bf16.msra.mxu0 0
        %2449 = vmatprep.subr.bf16.mxu0 0
        %2450 = vmatpush1.bf16.msra.mxu0 0
        %2451 = vmatprep.subr.bf16.mxu0 0
        %2452 = vmatpush1.bf16.msra.mxu0 0
        %2453 = vmatprep.subr.bf16.mxu0 0
        %2454 = vmatpush1.bf16.msra.mxu0 0
        %2455 = vmatprep.subr.bf16.mxu0 0
        %2456 = vmatpush1.bf16.msra.mxu0 0
        %2457 = vmatprep.subr.bf16.mxu0 0
        %2458 = vmatpush1.bf16.msra.mxu0 0
        %2459 = vmatprep.subr.bf16.mxu0 0
        %2460 = vmatpush1.bf16.msra.mxu0 0
        %2461 = vmatprep.subr.bf16.mxu0 0
        %2462 = vmatpush1.bf16.msra.mxu0 0
        %2463 = vmatprep.mubr.bf16.mxu0 0
        %2464 = vmatmul.mubr.bf16.gmra.mrb[0].mxu0 %v2377
        %v2465 = vpop.f32.mrb[0].mxu0
        %v2466 = vadd.f32 0.0, %v2465
        %v2467 = vpop.f32.mrb[0].mxu0
        %v2468 = vpop.f32.mrb[0].mxu0
        %v2469 = vadd.f32 0.0, %v2468
        %v2470 = vpop.f32.mrb[0].mxu0
        %2471 = vmatprep.mubr.bf16.mxu0 0
        %2472 = vmatmul.mubr.bf16.gmra.mrb[0].mxu0 %v2378
        %v2473 = vpop.f32.mrb[0].mxu0
        %v2474 = vadd.f32 0.0, %v2473
        %v2475 = vpop.f32.mrb[0].mxu0
        %v2476 = vpop.f32.mrb[0].mxu0
        %v2477 = vadd.f32 0.0, %v2476
        %v2478 = vpop.f32.mrb[0].mxu0
        %2479 = vmatprep.mubr.bf16.mxu0 0
        %2480 = vmatmul.mubr.bf16.gmra.mrb[0].mxu0 %v2379
        %v2481 = vpop.f32.mrb[0].mxu0
        %v2482 = vadd.f32 0.0, %v2481
        %v2483 = vpop.f32.mrb[0].mxu0
        %v2484 = vpop.f32.mrb[0].mxu0
        %v2485 = vpop.f32.mrb[0].mxu0
        %2486 = vdwg.mxu0
        %v2487 = vadd.f32 %v2340, %v2466
        %v2488 = vadd.f32 %v2341, %v2469
        %v2489 = vadd.f32 %v2342, %v2474
        %v2490 = vadd.f32 %v2343, %v2477
        %v2491 = vadd.f32 %v2344, %v2482
        %v2492 = vld [vmem:[%s1208] sm:$0xf]
        %v2493 = vld [vmem:[%s1208 + $0x4] sm:$0xf]
        %v2494 = vld [vmem:[%s1208 + $0x8] sm:$0xf]
        %v2495 = vld [vmem:[%s1208 + $0xc] sm:$0xf]
        %v2496 = vld [vmem:[%s1208 + $0x10] sm:$0xf]
        %v2497 = vld [vmem:[%s1208 + $0x14] sm:$0x1]
        %s2498 = scalar_lea.vmem [#allocation11], 384
        %v2499 = vld [vmem:[%s2498] sm:$0xf]
        %v2500 = vld [vmem:[%s2498 + $0x4] sm:$0xf]
        %v2501 = vld [vmem:[%s2498 + $0x8] sm:$0xf]
        %v2502 = vld [vmem:[%s2498 + $0xc] sm:$0xf]
        %v2503 = vld [vmem:[%s2498 + $0x10] sm:$0xf]
        %v2504 = vld [vmem:[%s2498 + $0x14] sm:$0xf]
        %v2505 = vld [vmem:[%s2498 + $0x18] sm:$0xf]
        %v2506 = vld [vmem:[%s2498 + $0x1c] sm:$0xf]
        %v2507 = vld [vmem:[%s2498 + $0x20] sm:$0xf]
        %v2508 = vld [vmem:[%s2498 + $0x24] sm:$0xf]
        %v2509 = vld [vmem:[%s2498 + $0x28] sm:$0xf]
        %v2510 = vld [vmem:[%s2498 + $0x2c] sm:$0xf]
        %v2511 = vld [vmem:[%s2498 + $0x30] sm:$0xf]
        %v2512 = vld [vmem:[%s2498 + $0x34] sm:$0xf]
        %v2513 = vld [vmem:[%s2498 + $0x38] sm:$0xf]
        %v2514 = vld [vmem:[%s2498 + $0x3c] sm:$0xf]
        %v2521 = vunpack.c.l.b16 %v2492
        %v2522 = vunpack.c.l.b16 %v2493
        %v2523 = vunpack.c.l.b16 %v2494
        %v2524 = vunpack.c.l.b16 %v2495
        %v2525 = vunpack.c.l.b16 %v2496
        %v2526 = vunpack.c.l.b16 %v2497
        %v2527 = vpack.c.b16 %v2522, %v2521
        %v2528 = vpack.c.b16 %v2524, %v2523
        %v2529 = vpack.c.b16 %v2526, %v2525
        %v2531 = vshrl.u32 %v2527, 16
        %v2533 = vshll.u32 %v2527, 16
        %v2535 = vrot.slane %v2533, 1
        %v2536 = vor.u32 %v2531, %v2535
        %v2538 = vshll.u32 %v2528, 16
        %v2540 = vrot.slane %v2538, 1
        %v2541 = vsel %vm1889, %v2536, %v2540
        %v2542 = vshrl.u32 %v2528, 16
        %v2544 = vor.u32 %v2542, %v2540
        %v2546 = vshll.u32 %v2529, 16
        %v2548 = vrot.slane %v2546, 1
        %v2549 = vsel %vm1889, %v2544, %v2548
        %v2550 = vshrl.u32 %v2529, 16
        %v2552 = vor.u32 %v2550, %v2548
        %v2572 = vunpack.c.l.b16 %v2499
        %v2573 = vunpack.c.l.b16 %v2500
        %v2574 = vunpack.c.l.b16 %v2501
        %v2575 = vunpack.c.l.b16 %v2502
        %v2576 = vunpack.c.l.b16 %v2503
        %v2577 = vunpack.c.l.b16 %v2504
        %v2578 = vunpack.c.l.b16 %v2505
        %v2579 = vunpack.c.l.b16 %v2506
        %v2580 = vunpack.c.l.b16 %v2507
        %v2581 = vunpack.c.l.b16 %v2508
        %v2582 = vunpack.c.l.b16 %v2509
        %v2583 = vunpack.c.l.b16 %v2510
        %v2584 = vunpack.c.l.b16 %v2511
        %v2585 = vunpack.c.l.b16 %v2512
        %v2586 = vunpack.c.l.b16 %v2513
        %v2587 = vunpack.c.l.b16 %v2514
        %v2588 = vpack.c.b16 %v2573, %v2572
        %v2589 = vpack.c.b16 %v2575, %v2574
        %v2590 = vpack.c.b16 %v2577, %v2576
        %v2591 = vpack.c.b16 %v2579, %v2578
        %v2592 = vpack.c.b16 %v2581, %v2580
        %v2593 = vpack.c.b16 %v2583, %v2582
        %v2594 = vpack.c.b16 %v2585, %v2584
        %v2595 = vpack.c.b16 %v2587, %v2586
        %2604 = vmatprep.subr.bf16.mxu0 0
        %2605 = vmatpush1.bf16.msra.mxu0 %v2588
        %2606 = vmatprep.subr.bf16.mxu0 0
        %2607 = vmatpush1.bf16.msra.mxu0 %v2589
        %2608 = vmatprep.subr.bf16.mxu0 0
        %2609 = vmatpush1.bf16.msra.mxu0 %v2590
        %2610 = vmatprep.subr.bf16.mxu0 0
        %2611 = vmatpush1.bf16.msra.mxu0 %v2591
        %2612 = vmatprep.subr.bf16.mxu0 0
        %2613 = vmatpush1.bf16.msra.mxu0 %v2592
        %2614 = vmatprep.subr.bf16.mxu0 0
        %2615 = vmatpush1.bf16.msra.mxu0 %v2593
        %2616 = vmatprep.subr.bf16.mxu0 0
        %2617 = vmatpush1.bf16.msra.mxu0 %v2594
        %2618 = vmatprep.subr.bf16.mxu0 0
        %2619 = vmatpush1.bf16.msra.mxu0 %v2595
        %2620 = vmatprep.subr.bf16.mxu0 0
        %2621 = vmatpush1.bf16.msra.mxu0 0
        %2622 = vmatprep.subr.bf16.mxu0 0
        %2623 = vmatpush1.bf16.msra.mxu0 0
        %2624 = vmatprep.subr.bf16.mxu0 0
        %2625 = vmatpush1.bf16.msra.mxu0 0
        %2626 = vmatprep.subr.bf16.mxu0 0
        %2627 = vmatpush1.bf16.msra.mxu0 0
        %2628 = vmatprep.subr.bf16.mxu0 0
        %2629 = vmatpush1.bf16.msra.mxu0 0
        %2630 = vmatprep.subr.bf16.mxu0 0
        %2631 = vmatpush1.bf16.msra.mxu0 0
        %2632 = vmatprep.subr.bf16.mxu0 0
        %2633 = vmatpush1.bf16.msra.mxu0 0
        %2634 = vmatprep.subr.bf16.mxu0 0
        %2635 = vmatpush1.bf16.msra.mxu0 0
        %2636 = vmatprep.mubr.bf16.mxu0 0
        %2637 = vmatmul.mubr.bf16.gmra.mrb[0].mxu0 %v2541
        %v2638 = vpop.f32.mrb[0].mxu0
        %v2639 = vadd.f32 0.0, %v2638
        %v2640 = vpop.f32.mrb[0].mxu0
        %v2641 = vpop.f32.mrb[0].mxu0
        %v2642 = vadd.f32 0.0, %v2641
        %v2643 = vpop.f32.mrb[0].mxu0
        %2644 = vmatprep.mubr.bf16.mxu0 0
        %2645 = vmatmul.mubr.bf16.gmra.mrb[0].mxu0 %v2549
        %v2646 = vpop.f32.mrb[0].mxu0
        %v2647 = vadd.f32 0.0, %v2646
        %v2648 = vpop.f32.mrb[0].mxu0
        %v2649 = vpop.f32.mrb[0].mxu0
        %v2650 = vadd.f32 0.0, %v2649
        %v2651 = vpop.f32.mrb[0].mxu0
        %2652 = vmatprep.mubr.bf16.mxu0 0
        %2653 = vmatmul.mubr.bf16.gmra.mrb[0].mxu0 %v2552
        %v2654 = vpop.f32.mrb[0].mxu0
        %v2655 = vadd.f32 0.0, %v2654
        %v2656 = vpop.f32.mrb[0].mxu0
        %v2657 = vpop.f32.mrb[0].mxu0
        %v2658 = vpop.f32.mrb[0].mxu0
        %2659 = vdwg.mxu0
        %v2660 = vadd.f32 %v2487, %v2639
        %v2661 = vadd.f32 %v2488, %v2642
        %v2662 = vadd.f32 %v2489, %v2647
        %v2663 = vadd.f32 %v2490, %v2650
        %v2664 = vadd.f32 %v2491, %v2655
        %v2665 = vld [vmem:[%s1450] sm:$0xf]
        %v2666 = vld [vmem:[%s1450 + $0x4] sm:$0xf]
        %v2667 = vld [vmem:[%s1450 + $0x8] sm:$0xf]
        %v2668 = vld [vmem:[%s1450 + $0xc] sm:$0xf]
        %v2669 = vld [vmem:[%s1450 + $0x10] sm:$0xf]
        %v2670 = vld [vmem:[%s1450 + $0x14] sm:$0x1]
        %s2671 = scalar_lea.vmem [#allocation11], 448
        %v2672 = vld [vmem:[%s2671] sm:$0xf]
        %v2673 = vld [vmem:[%s2671 + $0x4] sm:$0xf]
        %v2674 = vld [vmem:[%s2671 + $0x8] sm:$0xf]
        %v2675 = vld [vmem:[%s2671 + $0xc] sm:$0xf]
        %v2676 = vld [vmem:[%s2671 + $0x10] sm:$0xf]
        %v2677 = vld [vmem:[%s2671 + $0x14] sm:$0xf]
        %v2678 = vld [vmem:[%s2671 + $0x18] sm:$0xf]
        %v2679 = vld [vmem:[%s2671 + $0x1c] sm:$0xf]
        %v2680 = vld [vmem:[%s2671 + $0x20] sm:$0xf]
        %v2681 = vld [vmem:[%s2671 + $0x24] sm:$0xf]
        %v2682 = vld [vmem:[%s2671 + $0x28] sm:$0xf]
        %v2683 = vld [vmem:[%s2671 + $0x2c] sm:$0xf]
        %v2684 = vld [vmem:[%s2671 + $0x30] sm:$0xf]
        %v2685 = vld [vmem:[%s2671 + $0x34] sm:$0xf]
        %v2686 = vld [vmem:[%s2671 + $0x38] sm:$0xf]
        %v2687 = vld [vmem:[%s2671 + $0x3c] sm:$0xf]
        %v2694 = vunpack.c.l.b16 %v2665
        %v2695 = vunpack.c.l.b16 %v2666
        %v2696 = vunpack.c.l.b16 %v2667
        %v2697 = vunpack.c.l.b16 %v2668
        %v2698 = vunpack.c.l.b16 %v2669
        %v2699 = vunpack.c.l.b16 %v2670
        %v2700 = vpack.c.b16 %v2695, %v2694
        %v2701 = vpack.c.b16 %v2697, %v2696
        %v2702 = vpack.c.b16 %v2699, %v2698
        %v2704 = vshrl.u32 %v2700, 16
        %v2706 = vshll.u32 %v2700, 16
        %v2708 = vrot.slane %v2706, 1
        %v2709 = vor.u32 %v2704, %v2708
        %v2711 = vshll.u32 %v2701, 16
        %v2713 = vrot.slane %v2711, 1
        %v2714 = vsel %vm1889, %v2709, %v2713
        %v2715 = vshrl.u32 %v2701, 16
        %v2717 = vor.u32 %v2715, %v2713
        %v2719 = vshll.u32 %v2702, 16
        %v2721 = vrot.slane %v2719, 1
        %v2722 = vsel %vm1889, %v2717, %v2721
        %v2723 = vshrl.u32 %v2702, 16
        %v2725 = vor.u32 %v2723, %v2721
        %v2745 = vunpack.c.l.b16 %v2672
        %v2746 = vunpack.c.l.b16 %v2673
        %v2747 = vunpack.c.l.b16 %v2674
        %v2748 = vunpack.c.l.b16 %v2675
        %v2749 = vunpack.c.l.b16 %v2676
        %v2750 = vunpack.c.l.b16 %v2677
        %v2751 = vunpack.c.l.b16 %v2678
        %v2752 = vunpack.c.l.b16 %v2679
        %v2753 = vunpack.c.l.b16 %v2680
        %v2754 = vunpack.c.l.b16 %v2681
        %v2755 = vunpack.c.l.b16 %v2682
        %v2756 = vunpack.c.l.b16 %v2683
        %v2757 = vunpack.c.l.b16 %v2684
        %v2758 = vunpack.c.l.b16 %v2685
        %v2759 = vunpack.c.l.b16 %v2686
        %v2760 = vunpack.c.l.b16 %v2687
        %v2761 = vpack.c.b16 %v2746, %v2745
        %v2762 = vpack.c.b16 %v2748, %v2747
        %v2763 = vpack.c.b16 %v2750, %v2749
        %v2764 = vpack.c.b16 %v2752, %v2751
        %v2765 = vpack.c.b16 %v2754, %v2753
        %v2766 = vpack.c.b16 %v2756, %v2755
        %v2767 = vpack.c.b16 %v2758, %v2757
        %v2768 = vpack.c.b16 %v2760, %v2759
        %2777 = vmatprep.subr.bf16.mxu0 0
        %2778 = vmatpush1.bf16.msra.mxu0 %v2761
        %2779 = vmatprep.subr.bf16.mxu0 0
        %2780 = vmatpush1.bf16.msra.mxu0 %v2762
        %2781 = vmatprep.subr.bf16.mxu0 0
        %2782 = vmatpush1.bf16.msra.mxu0 %v2763
        %2783 = vmatprep.subr.bf16.mxu0 0
        %2784 = vmatpush1.bf16.msra.mxu0 %v2764
        %2785 = vmatprep.subr.bf16.mxu0 0
        %2786 = vmatpush1.bf16.msra.mxu0 %v2765
        %2787 = vmatprep.subr.bf16.mxu0 0
        %2788 = vmatpush1.bf16.msra.mxu0 %v2766
        %2789 = vmatprep.subr.bf16.mxu0 0
        %2790 = vmatpush1.bf16.msra.mxu0 %v2767
        %2791 = vmatprep.subr.bf16.mxu0 0
        %2792 = vmatpush1.bf16.msra.mxu0 %v2768
        %2793 = vmatprep.subr.bf16.mxu0 0
        %2794 = vmatpush1.bf16.msra.mxu0 0
        %2795 = vmatprep.subr.bf16.mxu0 0
        %2796 = vmatpush1.bf16.msra.mxu0 0
        %2797 = vmatprep.subr.bf16.mxu0 0
        %2798 = vmatpush1.bf16.msra.mxu0 0
        %2799 = vmatprep.subr.bf16.mxu0 0
        %2800 = vmatpush1.bf16.msra.mxu0 0
        %2801 = vmatprep.subr.bf16.mxu0 0
        %2802 = vmatpush1.bf16.msra.mxu0 0
        %2803 = vmatprep.subr.bf16.mxu0 0
        %2804 = vmatpush1.bf16.msra.mxu0 0
        %2805 = vmatprep.subr.bf16.mxu0 0
        %2806 = vmatpush1.bf16.msra.mxu0 0
        %2807 = vmatprep.subr.bf16.mxu0 0
        %2808 = vmatpush1.bf16.msra.mxu0 0
        %2809 = vmatprep.mubr.bf16.mxu0 0
        %2810 = vmatmul.mubr.bf16.gmra.mrb[0].mxu0 %v2714
        %v2811 = vpop.f32.mrb[0].mxu0
        %v2812 = vadd.f32 0.0, %v2811
        %v2813 = vpop.f32.mrb[0].mxu0
        %v2814 = vpop.f32.mrb[0].mxu0
        %v2815 = vadd.f32 0.0, %v2814
        %v2816 = vpop.f32.mrb[0].mxu0
        %2817 = vmatprep.mubr.bf16.mxu0 0
        %2818 = vmatmul.mubr.bf16.gmra.mrb[0].mxu0 %v2722
        %v2819 = vpop.f32.mrb[0].mxu0
        %v2820 = vadd.f32 0.0, %v2819
        %v2821 = vpop.f32.mrb[0].mxu0
        %v2822 = vpop.f32.mrb[0].mxu0
        %v2823 = vadd.f32 0.0, %v2822
        %v2824 = vpop.f32.mrb[0].mxu0
        %2825 = vmatprep.mubr.bf16.mxu0 0
        %2826 = vmatmul.mubr.bf16.gmra.mrb[0].mxu0 %v2725
        %v2827 = vpop.f32.mrb[0].mxu0
        %v2828 = vadd.f32 0.0, %v2827
        %v2829 = vpop.f32.mrb[0].mxu0
        %v2830 = vpop.f32.mrb[0].mxu0
        %v2831 = vpop.f32.mrb[0].mxu0
        %2832 = vdwg.mxu0
        %v2833 = vadd.f32 %v2660, %v2812
        %v2834 = vadd.f32 %v2661, %v2815
        %v2835 = vadd.f32 %v2662, %v2820
        %v2836 = vadd.f32 %v2663, %v2823
        %v2837 = vadd.f32 %v2664, %v2828
        %v2838 = vld [vmem:[#allocation2 + $0x4] sm:$0xe]
        %v2839 = vld [vmem:[#allocation2 + $0x8] sm:$0xf]
        %v2840 = vld [vmem:[#allocation2 + $0xc] sm:$0xf]
        %v2841 = vld [vmem:[#allocation2 + $0x10] sm:$0xf]
        %v2842 = vld [vmem:[#allocation2 + $0x14] sm:$0xf]
        %v2843 = vld [vmem:[#allocation2 + $0x18] sm:$0x1]
        %s2844 = scalar_lea.vmem [#allocation11], 512
        %v2845 = vld [vmem:[%s2844] sm:$0xf]
        %v2846 = vld [vmem:[%s2844 + $0x4] sm:$0xf]
        %v2847 = vld [vmem:[%s2844 + $0x8] sm:$0xf]
        %v2848 = vld [vmem:[%s2844 + $0xc] sm:$0xf]
        %v2849 = vld [vmem:[%s2844 + $0x10] sm:$0xf]
        %v2850 = vld [vmem:[%s2844 + $0x14] sm:$0xf]
        %v2851 = vld [vmem:[%s2844 + $0x18] sm:$0xf]
        %v2852 = vld [vmem:[%s2844 + $0x1c] sm:$0xf]
        %v2853 = vld [vmem:[%s2844 + $0x20] sm:$0xf]
        %v2854 = vld [vmem:[%s2844 + $0x24] sm:$0xf]
        %v2855 = vld [vmem:[%s2844 + $0x28] sm:$0xf]
        %v2856 = vld [vmem:[%s2844 + $0x2c] sm:$0xf]
        %v2857 = vld [vmem:[%s2844 + $0x30] sm:$0xf]
        %v2858 = vld [vmem:[%s2844 + $0x34] sm:$0xf]
        %v2859 = vld [vmem:[%s2844 + $0x38] sm:$0xf]
        %v2860 = vld [vmem:[%s2844 + $0x3c] sm:$0xf]
        %v2867 = vunpack.c.l.b16 %v2838
        %v2868 = vunpack.c.l.b16 %v2839
        %v2869 = vunpack.c.l.b16 %v2840
        %v2870 = vunpack.c.l.b16 %v2841
        %v2871 = vunpack.c.l.b16 %v2842
        %v2872 = vunpack.c.l.b16 %v2843
        %v2873 = vpack.c.b16 %v2868, %v2867
        %v2874 = vpack.c.b16 %v2870, %v2869
        %v2875 = vpack.c.b16 %v2872, %v2871
        %vm2876 = vcmask 1046528
        %v2877 = vrot.slane %v2873, 1
        %v2878 = vrot.slane %v2874, 1
        %v2879 = vsel %vm2876, %v2877, %v2878
        %v2880 = vrot.slane %v2875, 1
        %v2881 = vsel %vm2876, %v2878, %v2880
        %v2901 = vunpack.c.l.b16 %v2845
        %v2902 = vunpack.c.l.b16 %v2846
        %v2903 = vunpack.c.l.b16 %v2847
        %v2904 = vunpack.c.l.b16 %v2848
        %v2905 = vunpack.c.l.b16 %v2849
        %v2906 = vunpack.c.l.b16 %v2850
        %v2907 = vunpack.c.l.b16 %v2851
        %v2908 = vunpack.c.l.b16 %v2852
        %v2909 = vunpack.c.l.b16 %v2853
        %v2910 = vunpack.c.l.b16 %v2854
        %v2911 = vunpack.c.l.b16 %v2855
        %v2912 = vunpack.c.l.b16 %v2856
        %v2913 = vunpack.c.l.b16 %v2857
        %v2914 = vunpack.c.l.b16 %v2858
        %v2915 = vunpack.c.l.b16 %v2859
        %v2916 = vunpack.c.l.b16 %v2860
        %v2917 = vpack.c.b16 %v2902, %v2901
        %v2918 = vpack.c.b16 %v2904, %v2903
        %v2919 = vpack.c.b16 %v2906, %v2905
        %v2920 = vpack.c.b16 %v2908, %v2907
        %v2921 = vpack.c.b16 %v2910, %v2909
        %v2922 = vpack.c.b16 %v2912, %v2911
        %v2923 = vpack.c.b16 %v2914, %v2913
        %v2924 = vpack.c.b16 %v2916, %v2915
        %2933 = vmatprep.subr.bf16.mxu0 0
        %2934 = vmatpush1.bf16.msra.mxu0 %v2917
        %2935 = vmatprep.subr.bf16.mxu0 0
        %2936 = vmatpush1.bf16.msra.mxu0 %v2918
        %2937 = vmatprep.subr.bf16.mxu0 0
        %2938 = vmatpush1.bf16.msra.mxu0 %v2919
        %2939 = vmatprep.subr.bf16.mxu0 0
        %2940 = vmatpush1.bf16.msra.mxu0 %v2920
        %2941 = vmatprep.subr.bf16.mxu0 0
        %2942 = vmatpush1.bf16.msra.mxu0 %v2921
        %2943 = vmatprep.subr.bf16.mxu0 0
        %2944 = vmatpush1.bf16.msra.mxu0 %v2922
        %2945 = vmatprep.subr.bf16.mxu0 0
        %2946 = vmatpush1.bf16.msra.mxu0 %v2923
        %2947 = vmatprep.subr.bf16.mxu0 0
        %2948 = vmatpush1.bf16.msra.mxu0 %v2924
        %2949 = vmatprep.subr.bf16.mxu0 0
        %2950 = vmatpush1.bf16.msra.mxu0 0
        %2951 = vmatprep.subr.bf16.mxu0 0
        %2952 = vmatpush1.bf16.msra.mxu0 0
        %2953 = vmatprep.subr.bf16.mxu0 0
        %2954 = vmatpush1.bf16.msra.mxu0 0
        %2955 = vmatprep.subr.bf16.mxu0 0
        %2956 = vmatpush1.bf16.msra.mxu0 0
        %2957 = vmatprep.subr.bf16.mxu0 0
        %2958 = vmatpush1.bf16.msra.mxu0 0
        %2959 = vmatprep.subr.bf16.mxu0 0
        %2960 = vmatpush1.bf16.msra.mxu0 0
        %2961 = vmatprep.subr.bf16.mxu0 0
        %2962 = vmatpush1.bf16.msra.mxu0 0
        %2963 = vmatprep.subr.bf16.mxu0 0
        %2964 = vmatpush1.bf16.msra.mxu0 0
        %2965 = vmatprep.mubr.bf16.mxu0 0
        %2966 = vmatmul.mubr.bf16.gmra.mrb[0].mxu0 %v2879
        %v2967 = vpop.f32.mrb[0].mxu0
        %v2968 = vadd.f32 0.0, %v2967
        %v2969 = vpop.f32.mrb[0].mxu0
        %v2970 = vpop.f32.mrb[0].mxu0
        %v2971 = vadd.f32 0.0, %v2970
        %v2972 = vpop.f32.mrb[0].mxu0
        %2973 = vmatprep.mubr.bf16.mxu0 0
        %2974 = vmatmul.mubr.bf16.gmra.mrb[0].mxu0 %v2881
        %v2975 = vpop.f32.mrb[0].mxu0
        %v2976 = vadd.f32 0.0, %v2975
        %v2977 = vpop.f32.mrb[0].mxu0
        %v2978 = vpop.f32.mrb[0].mxu0
        %v2979 = vadd.f32 0.0, %v2978
        %v2980 = vpop.f32.mrb[0].mxu0
        %2981 = vmatprep.mubr.bf16.mxu0 0
        %2982 = vmatmul.mubr.bf16.gmra.mrb[0].mxu0 %v2880
        %v2983 = vpop.f32.mrb[0].mxu0
        %v2984 = vadd.f32 0.0, %v2983
        %v2985 = vpop.f32.mrb[0].mxu0
        %v2986 = vpop.f32.mrb[0].mxu0
        %v2987 = vpop.f32.mrb[0].mxu0
        %2988 = vdwg.mxu0
        %v2989 = vadd.f32 %v2833, %v2968
        %v2990 = vadd.f32 %v2834, %v2971
        %v2991 = vadd.f32 %v2835, %v2976
        %v2992 = vadd.f32 %v2836, %v2979
        %v2993 = vadd.f32 %v2837, %v2984
        %v2994 = vld [vmem:[%s966 + $0x4] sm:$0xe]
        %v2995 = vld [vmem:[%s966 + $0x8] sm:$0xf]
        %v2996 = vld [vmem:[%s966 + $0xc] sm:$0xf]
        %v2997 = vld [vmem:[%s966 + $0x10] sm:$0xf]
        %v2998 = vld [vmem:[%s966 + $0x14] sm:$0xf]
        %v2999 = vld [vmem:[%s966 + $0x18] sm:$0x1]
        %s3000 = scalar_lea.vmem [#allocation11], 576
        %v3001 = vld [vmem:[%s3000] sm:$0xf]
        %v3002 = vld [vmem:[%s3000 + $0x4] sm:$0xf]
        %v3003 = vld [vmem:[%s3000 + $0x8] sm:$0xf]
        %v3004 = vld [vmem:[%s3000 + $0xc] sm:$0xf]
        %v3005 = vld [vmem:[%s3000 + $0x10] sm:$0xf]
        %v3006 = vld [vmem:[%s3000 + $0x14] sm:$0xf]
        %v3007 = vld [vmem:[%s3000 + $0x18] sm:$0xf]
        %v3008 = vld [vmem:[%s3000 + $0x1c] sm:$0xf]
        %v3009 = vld [vmem:[%s3000 + $0x20] sm:$0xf]
        %v3010 = vld [vmem:[%s3000 + $0x24] sm:$0xf]
        %v3011 = vld [vmem:[%s3000 + $0x28] sm:$0xf]
        %v3012 = vld [vmem:[%s3000 + $0x2c] sm:$0xf]
        %v3013 = vld [vmem:[%s3000 + $0x30] sm:$0xf]
        %v3014 = vld [vmem:[%s3000 + $0x34] sm:$0xf]
        %v3015 = vld [vmem:[%s3000 + $0x38] sm:$0xf]
        %v3016 = vld [vmem:[%s3000 + $0x3c] sm:$0xf]
        %v3023 = vunpack.c.l.b16 %v2994
        %v3024 = vunpack.c.l.b16 %v2995
        %v3025 = vunpack.c.l.b16 %v2996
        %v3026 = vunpack.c.l.b16 %v2997
        %v3027 = vunpack.c.l.b16 %v2998
        %v3028 = vunpack.c.l.b16 %v2999
        %v3029 = vpack.c.b16 %v3024, %v3023
        %v3030 = vpack.c.b16 %v3026, %v3025
        %v3031 = vpack.c.b16 %v3028, %v3027
        %v3032 = vrot.slane %v3029, 1
        %v3033 = vrot.slane %v3030, 1
        %v3034 = vsel %vm2876, %v3032, %v3033
        %v3035 = vrot.slane %v3031, 1
        %v3036 = vsel %vm2876, %v3033, %v3035
        %v3056 = vunpack.c.l.b16 %v3001
        %v3057 = vunpack.c.l.b16 %v3002
        %v3058 = vunpack.c.l.b16 %v3003
        %v3059 = vunpack.c.l.b16 %v3004
        %v3060 = vunpack.c.l.b16 %v3005
        %v3061 = vunpack.c.l.b16 %v3006
        %v3062 = vunpack.c.l.b16 %v3007
        %v3063 = vunpack.c.l.b16 %v3008
        %v3064 = vunpack.c.l.b16 %v3009
        %v3065 = vunpack.c.l.b16 %v3010
        %v3066 = vunpack.c.l.b16 %v3011
        %v3067 = vunpack.c.l.b16 %v3012
        %v3068 = vunpack.c.l.b16 %v3013
        %v3069 = vunpack.c.l.b16 %v3014
        %v3070 = vunpack.c.l.b16 %v3015
        %v3071 = vunpack.c.l.b16 %v3016
        %v3072 = vpack.c.b16 %v3057, %v3056
        %v3073 = vpack.c.b16 %v3059, %v3058
        %v3074 = vpack.c.b16 %v3061, %v3060
        %v3075 = vpack.c.b16 %v3063, %v3062
        %v3076 = vpack.c.b16 %v3065, %v3064
        %v3077 = vpack.c.b16 %v3067, %v3066
        %v3078 = vpack.c.b16 %v3069, %v3068
        %v3079 = vpack.c.b16 %v3071, %v3070
        %3088 = vmatprep.subr.bf16.mxu0 0
        %3089 = vmatpush1.bf16.msra.mxu0 %v3072
        %3090 = vmatprep.subr.bf16.mxu0 0
        %3091 = vmatpush1.bf16.msra.mxu0 %v3073
        %3092 = vmatprep.subr.bf16.mxu0 0
        %3093 = vmatpush1.bf16.msra.mxu0 %v3074
        %3094 = vmatprep.subr.bf16.mxu0 0
        %3095 = vmatpush1.bf16.msra.mxu0 %v3075
        %3096 = vmatprep.subr.bf16.mxu0 0
        %3097 = vmatpush1.bf16.msra.mxu0 %v3076
        %3098 = vmatprep.subr.bf16.mxu0 0
        %3099 = vmatpush1.bf16.msra.mxu0 %v3077
        %3100 = vmatprep.subr.bf16.mxu0 0
        %3101 = vmatpush1.bf16.msra.mxu0 %v3078
        %3102 = vmatprep.subr.bf16.mxu0 0
        %3103 = vmatpush1.bf16.msra.mxu0 %v3079
        %3104 = vmatprep.subr.bf16.mxu0 0
        %3105 = vmatpush1.bf16.msra.mxu0 0
        %3106 = vmatprep.subr.bf16.mxu0 0
        %3107 = vmatpush1.bf16.msra.mxu0 0
        %3108 = vmatprep.subr.bf16.mxu0 0
        %3109 = vmatpush1.bf16.msra.mxu0 0
        %3110 = vmatprep.subr.bf16.mxu0 0
        %3111 = vmatpush1.bf16.msra.mxu0 0
        %3112 = vmatprep.subr.bf16.mxu0 0
        %3113 = vmatpush1.bf16.msra.mxu0 0
        %3114 = vmatprep.subr.bf16.mxu0 0
        %3115 = vmatpush1.bf16.msra.mxu0 0
        %3116 = vmatprep.subr.bf16.mxu0 0
        %3117 = vmatpush1.bf16.msra.mxu0 0
        %3118 = vmatprep.subr.bf16.mxu0 0
        %3119 = vmatpush1.bf16.msra.mxu0 0
        %3120 = vmatprep.mubr.bf16.mxu0 0
        %3121 = vmatmul.mubr.bf16.gmra.mrb[0].mxu0 %v3034
        %v3122 = vpop.f32.mrb[0].mxu0
        %v3123 = vadd.f32 0.0, %v3122
        %v3124 = vpop.f32.mrb[0].mxu0
        %v3125 = vpop.f32.mrb[0].mxu0
        %v3126 = vadd.f32 0.0, %v3125
        %v3127 = vpop.f32.mrb[0].mxu0
        %3128 = vmatprep.mubr.bf16.mxu0 0
        %3129 = vmatmul.mubr.bf16.gmra.mrb[0].mxu0 %v3036
        %v3130 = vpop.f32.mrb[0].mxu0
        %v3131 = vadd.f32 0.0, %v3130
        %v3132 = vpop.f32.mrb[0].mxu0
        %v3133 = vpop.f32.mrb[0].mxu0
        %v3134 = vadd.f32 0.0, %v3133
        %v3135 = vpop.f32.mrb[0].mxu0
        %3136 = vmatprep.mubr.bf16.mxu0 0
        %3137 = vmatmul.mubr.bf16.gmra.mrb[0].mxu0 %v3035
        %v3138 = vpop.f32.mrb[0].mxu0
        %v3139 = vadd.f32 0.0, %v3138
        %v3140 = vpop.f32.mrb[0].mxu0
        %v3141 = vpop.f32.mrb[0].mxu0
        %v3142 = vpop.f32.mrb[0].mxu0
        %3143 = vdwg.mxu0
        %v3144 = vadd.f32 %v2989, %v3123
        %v3145 = vadd.f32 %v2990, %v3126
        %v3146 = vadd.f32 %v2991, %v3131
        %v3147 = vadd.f32 %v2992, %v3134
        %v3148 = vadd.f32 %v2993, %v3139
        %v3149 = vld [vmem:[#allocation2 + $0x18] sm:$0x3]
        %s3150 = scalar_lea.vmem [#allocation11], 640
        %v3151 = vld [vmem:[%s3150] sm:$0xf]
        %v3152 = vld [vmem:[%s3150 + $0x4] sm:$0xf]
        %v3153 = vld [vmem:[%s3150 + $0x8] sm:$0xf]
        %v3154 = vld [vmem:[%s3150 + $0xc] sm:$0xf]
        %v3155 = vld [vmem:[%s3150 + $0x10] sm:$0xf]
        %v3156 = vld [vmem:[%s3150 + $0x14] sm:$0xf]
        %v3157 = vld [vmem:[%s3150 + $0x18] sm:$0xf]
        %v3158 = vld [vmem:[%s3150 + $0x1c] sm:$0xf]
        %v3159 = vld [vmem:[%s3150 + $0x20] sm:$0xf]
        %v3160 = vld [vmem:[%s3150 + $0x24] sm:$0xf]
        %v3161 = vld [vmem:[%s3150 + $0x28] sm:$0xf]
        %v3162 = vld [vmem:[%s3150 + $0x2c] sm:$0xf]
        %v3163 = vld [vmem:[%s3150 + $0x30] sm:$0xf]
        %v3164 = vld [vmem:[%s3150 + $0x34] sm:$0xf]
        %v3165 = vld [vmem:[%s3150 + $0x38] sm:$0xf]
        %v3166 = vld [vmem:[%s3150 + $0x3c] sm:$0xf]
        %v3168 = vunpack.c.l.b16 %v3149
        %v3169 = vpack.c.b16 %v3168, %v2871
        %vm3170 = vsmask.f32 6400
        %v3172 = vshrl.u32 %v2873, 16
        %v3174 = vrot.slane %v3172, 1
        %v3175 = vshll.u32 %v2873, 16
        %v3177 = vrot.slane %v3175, 2
        %v3178 = vor.u32 %v3174, %v3177
        %v3180 = vshrl.u32 %v2874, 16
        %v3182 = vrot.slane %v3180, 1
        %v3183 = vshll.u32 %v2874, 16
        %v3185 = vrot.slane %v3183, 2
        %v3186 = vor.u32 %v3182, %v3185
        %v3187 = vsel %vm3170, %v3178, %v3186
        %v3189 = vshrl.u32 %v3169, 16
        %v3191 = vrot.slane %v3189, 1
        %v3192 = vshll.u32 %v3169, 16
        %v3194 = vrot.slane %v3192, 2
        %v3195 = vor.u32 %v3191, %v3194
        %v3196 = vsel %vm3170, %v3186, %v3195
        %v3216 = vunpack.c.l.b16 %v3151
        %v3217 = vunpack.c.l.b16 %v3152
        %v3218 = vunpack.c.l.b16 %v3153
        %v3219 = vunpack.c.l.b16 %v3154
        %v3220 = vunpack.c.l.b16 %v3155
        %v3221 = vunpack.c.l.b16 %v3156
        %v3222 = vunpack.c.l.b16 %v3157
        %v3223 = vunpack.c.l.b16 %v3158
        %v3224 = vunpack.c.l.b16 %v3159
        %v3225 = vunpack.c.l.b16 %v3160
        %v3226 = vunpack.c.l.b16 %v3161
        %v3227 = vunpack.c.l.b16 %v3162
        %v3228 = vunpack.c.l.b16 %v3163
        %v3229 = vunpack.c.l.b16 %v3164
        %v3230 = vunpack.c.l.b16 %v3165
        %v3231 = vunpack.c.l.b16 %v3166
        %v3232 = vpack.c.b16 %v3217, %v3216
        %v3233 = vpack.c.b16 %v3219, %v3218
        %v3234 = vpack.c.b16 %v3221, %v3220
        %v3235 = vpack.c.b16 %v3223, %v3222
        %v3236 = vpack.c.b16 %v3225, %v3224
        %v3237 = vpack.c.b16 %v3227, %v3226
        %v3238 = vpack.c.b16 %v3229, %v3228
        %v3239 = vpack.c.b16 %v3231, %v3230
        %3248 = vmatprep.subr.bf16.mxu0 0
        %3249 = vmatpush1.bf16.msra.mxu0 %v3232
        %3250 = vmatprep.subr.bf16.mxu0 0
        %3251 = vmatpush1.bf16.msra.mxu0 %v3233
        %3252 = vmatprep.subr.bf16.mxu0 0
        %3253 = vmatpush1.bf16.msra.mxu0 %v3234
        %3254 = vmatprep.subr.bf16.mxu0 0
        %3255 = vmatpush1.bf16.msra.mxu0 %v3235
        %3256 = vmatprep.subr.bf16.mxu0 0
        %3257 = vmatpush1.bf16.msra.mxu0 %v3236
        %3258 = vmatprep.subr.bf16.mxu0 0
        %3259 = vmatpush1.bf16.msra.mxu0 %v3237
        %3260 = vmatprep.subr.bf16.mxu0 0
        %3261 = vmatpush1.bf16.msra.mxu0 %v3238
        %3262 = vmatprep.subr.bf16.mxu0 0
        %3263 = vmatpush1.bf16.msra.mxu0 %v3239
        %3264 = vmatprep.subr.bf16.mxu0 0
        %3265 = vmatpush1.bf16.msra.mxu0 0
        %3266 = vmatprep.subr.bf16.mxu0 0
        %3267 = vmatpush1.bf16.msra.mxu0 0
        %3268 = vmatprep.subr.bf16.mxu0 0
        %3269 = vmatpush1.bf16.msra.mxu0 0
        %3270 = vmatprep.subr.bf16.mxu0 0
        %3271 = vmatpush1.bf16.msra.mxu0 0
        %3272 = vmatprep.subr.bf16.mxu0 0
        %3273 = vmatpush1.bf16.msra.mxu0 0
        %3274 = vmatprep.subr.bf16.mxu0 0
        %3275 = vmatpush1.bf16.msra.mxu0 0
        %3276 = vmatprep.subr.bf16.mxu0 0
        %3277 = vmatpush1.bf16.msra.mxu0 0
        %3278 = vmatprep.subr.bf16.mxu0 0
        %3279 = vmatpush1.bf16.msra.mxu0 0
        %3280 = vmatprep.mubr.bf16.mxu0 0
        %3281 = vmatmul.mubr.bf16.gmra.mrb[0].mxu0 %v3187
        %v3282 = vpop.f32.mrb[0].mxu0
        %v3283 = vadd.f32 0.0, %v3282
        %v3284 = vpop.f32.mrb[0].mxu0
        %v3285 = vpop.f32.mrb[0].mxu0
        %v3286 = vadd.f32 0.0, %v3285
        %v3287 = vpop.f32.mrb[0].mxu0
        %3288 = vmatprep.mubr.bf16.mxu0 0
        %3289 = vmatmul.mubr.bf16.gmra.mrb[0].mxu0 %v3196
        %v3290 = vpop.f32.mrb[0].mxu0
        %v3291 = vadd.f32 0.0, %v3290
        %v3292 = vpop.f32.mrb[0].mxu0
        %v3293 = vpop.f32.mrb[0].mxu0
        %v3294 = vadd.f32 0.0, %v3293
        %v3295 = vpop.f32.mrb[0].mxu0
        %3296 = vmatprep.mubr.bf16.mxu0 0
        %3297 = vmatmul.mubr.bf16.gmra.mrb[0].mxu0 %v3195
        %v3298 = vpop.f32.mrb[0].mxu0
        %v3299 = vadd.f32 0.0, %v3298
        %v3300 = vpop.f32.mrb[0].mxu0
        %v3301 = vpop.f32.mrb[0].mxu0
        %v3302 = vpop.f32.mrb[0].mxu0
        %3303 = vdwg.mxu0
        %v3304 = vadd.f32 %v3144, %v3283
        %v3305 = vadd.f32 %v3145, %v3286
        %v3306 = vadd.f32 %v3146, %v3291
        %v3307 = vadd.f32 %v3147, %v3294
        %v3308 = vadd.f32 %v3148, %v3299
        %v3309 = vld [vmem:[%s966 + $0x18] sm:$0x3]
        %s3310 = scalar_lea.vmem [#allocation11], 704
        %v3311 = vld [vmem:[%s3310] sm:$0xf]
        %v3312 = vld [vmem:[%s3310 + $0x4] sm:$0xf]
        %v3313 = vld [vmem:[%s3310 + $0x8] sm:$0xf]
        %v3314 = vld [vmem:[%s3310 + $0xc] sm:$0xf]
        %v3315 = vld [vmem:[%s3310 + $0x10] sm:$0xf]
        %v3316 = vld [vmem:[%s3310 + $0x14] sm:$0xf]
        %v3317 = vld [vmem:[%s3310 + $0x18] sm:$0xf]
        %v3318 = vld [vmem:[%s3310 + $0x1c] sm:$0xf]
        %v3319 = vld [vmem:[%s3310 + $0x20] sm:$0xf]
        %v3320 = vld [vmem:[%s3310 + $0x24] sm:$0xf]
        %v3321 = vld [vmem:[%s3310 + $0x28] sm:$0xf]
        %v3322 = vld [vmem:[%s3310 + $0x2c] sm:$0xf]
        %v3323 = vld [vmem:[%s3310 + $0x30] sm:$0xf]
        %v3324 = vld [vmem:[%s3310 + $0x34] sm:$0xf]
        %v3325 = vld [vmem:[%s3310 + $0x38] sm:$0xf]
        %v3326 = vld [vmem:[%s3310 + $0x3c] sm:$0xf]
        %v3328 = vunpack.c.l.b16 %v3309
        %v3329 = vpack.c.b16 %v3328, %v3027
        %v3331 = vshrl.u32 %v3029, 16
        %v3333 = vrot.slane %v3331, 1
        %v3334 = vshll.u32 %v3029, 16
        %v3336 = vrot.slane %v3334, 2
        %v3337 = vor.u32 %v3333, %v3336
        %v3339 = vshrl.u32 %v3030, 16
        %v3341 = vrot.slane %v3339, 1
        %v3342 = vshll.u32 %v3030, 16
        %v3344 = vrot.slane %v3342, 2
        %v3345 = vor.u32 %v3341, %v3344
        %v3346 = vsel %vm3170, %v3337, %v3345
        %v3348 = vshrl.u32 %v3329, 16
        %v3350 = vrot.slane %v3348, 1
        %v3351 = vshll.u32 %v3329, 16
        %v3353 = vrot.slane %v3351, 2
        %v3354 = vor.u32 %v3350, %v3353
        %v3355 = vsel %vm3170, %v3345, %v3354
        %v3375 = vunpack.c.l.b16 %v3311
        %v3376 = vunpack.c.l.b16 %v3312
        %v3377 = vunpack.c.l.b16 %v3313
        %v3378 = vunpack.c.l.b16 %v3314
        %v3379 = vunpack.c.l.b16 %v3315
        %v3380 = vunpack.c.l.b16 %v3316
        %v3381 = vunpack.c.l.b16 %v3317
        %v3382 = vunpack.c.l.b16 %v3318
        %v3383 = vunpack.c.l.b16 %v3319
        %v3384 = vunpack.c.l.b16 %v3320
        %v3385 = vunpack.c.l.b16 %v3321
        %v3386 = vunpack.c.l.b16 %v3322
        %v3387 = vunpack.c.l.b16 %v3323
        %v3388 = vunpack.c.l.b16 %v3324
        %v3389 = vunpack.c.l.b16 %v3325
        %v3390 = vunpack.c.l.b16 %v3326
        %v3391 = vpack.c.b16 %v3376, %v3375
        %v3392 = vpack.c.b16 %v3378, %v3377
        %v3393 = vpack.c.b16 %v3380, %v3379
        %v3394 = vpack.c.b16 %v3382, %v3381
        %v3395 = vpack.c.b16 %v3384, %v3383
        %v3396 = vpack.c.b16 %v3386, %v3385
        %v3397 = vpack.c.b16 %v3388, %v3387
        %v3398 = vpack.c.b16 %v3390, %v3389
        %3407 = vmatprep.subr.bf16.mxu0 0
        %3408 = vmatpush1.bf16.msra.mxu0 %v3391
        %3409 = vmatprep.subr.bf16.mxu0 0
        %3410 = vmatpush1.bf16.msra.mxu0 %v3392
        %3411 = vmatprep.subr.bf16.mxu0 0
        %3412 = vmatpush1.bf16.msra.mxu0 %v3393
        %3413 = vmatprep.subr.bf16.mxu0 0
        %3414 = vmatpush1.bf16.msra.mxu0 %v3394
        %3415 = vmatprep.subr.bf16.mxu0 0
        %3416 = vmatpush1.bf16.msra.mxu0 %v3395
        %3417 = vmatprep.subr.bf16.mxu0 0
        %3418 = vmatpush1.bf16.msra.mxu0 %v3396
        %3419 = vmatprep.subr.bf16.mxu0 0
        %3420 = vmatpush1.bf16.msra.mxu0 %v3397
        %3421 = vmatprep.subr.bf16.mxu0 0
        %3422 = vmatpush1.bf16.msra.mxu0 %v3398
        %3423 = vmatprep.subr.bf16.mxu0 0
        %3424 = vmatpush1.bf16.msra.mxu0 0
        %3425 = vmatprep.subr.bf16.mxu0 0
        %3426 = vmatpush1.bf16.msra.mxu0 0
        %3427 = vmatprep.subr.bf16.mxu0 0
        %3428 = vmatpush1.bf16.msra.mxu0 0
        %3429 = vmatprep.subr.bf16.mxu0 0
        %3430 = vmatpush1.bf16.msra.mxu0 0
        %3431 = vmatprep.subr.bf16.mxu0 0
        %3432 = vmatpush1.bf16.msra.mxu0 0
        %3433 = vmatprep.subr.bf16.mxu0 0
        %3434 = vmatpush1.bf16.msra.mxu0 0
        %3435 = vmatprep.subr.bf16.mxu0 0
        %3436 = vmatpush1.bf16.msra.mxu0 0
        %3437 = vmatprep.subr.bf16.mxu0 0
        %3438 = vmatpush1.bf16.msra.mxu0 0
        %3439 = vmatprep.mubr.bf16.mxu0 0
        %3440 = vmatmul.mubr.bf16.gmra.mrb[0].mxu0 %v3346
        %v3441 = vpop.f32.mrb[0].mxu0
        %v3442 = vadd.f32 0.0, %v3441
        %v3443 = vpop.f32.mrb[0].mxu0
        %v3444 = vpop.f32.mrb[0].mxu0
        %v3445 = vadd.f32 0.0, %v3444
        %v3446 = vpop.f32.mrb[0].mxu0
        %3447 = vmatprep.mubr.bf16.mxu0 0
        %3448 = vmatmul.mubr.bf16.gmra.mrb[0].mxu0 %v3355
        %v3449 = vpop.f32.mrb[0].mxu0
        %v3450 = vadd.f32 0.0, %v3449
        %v3451 = vpop.f32.mrb[0].mxu0
        %v3452 = vpop.f32.mrb[0].mxu0
        %v3453 = vadd.f32 0.0, %v3452
        %v3454 = vpop.f32.mrb[0].mxu0
        %3455 = vmatprep.mubr.bf16.mxu0 0
        %3456 = vmatmul.mubr.bf16.gmra.mrb[0].mxu0 %v3354
        %v3457 = vpop.f32.mrb[0].mxu0
        %v3458 = vadd.f32 0.0, %v3457
        %v3459 = vpop.f32.mrb[0].mxu0
        %v3460 = vpop.f32.mrb[0].mxu0
        %v3461 = vpop.f32.mrb[0].mxu0
        %3462 = vdwg.mxu0
        %v3463 = vadd.f32 %v3304, %v3442
        %v3464 = vadd.f32 %v3305, %v3445
        %v3465 = vadd.f32 %v3306, %v3450
        %v3466 = vadd.f32 %v3307, %v3453
        %v3467 = vadd.f32 %v3308, %v3458
        %v3468 = vld [vmem:[%s1208 + $0x4] sm:$0xe]
        %v3469 = vld [vmem:[%s1208 + $0x8] sm:$0xf]
        %v3470 = vld [vmem:[%s1208 + $0xc] sm:$0xf]
        %v3471 = vld [vmem:[%s1208 + $0x10] sm:$0xf]
        %v3472 = vld [vmem:[%s1208 + $0x14] sm:$0xf]
        %v3473 = vld [vmem:[%s1208 + $0x18] sm:$0x1]
        %s3474 = scalar_lea.vmem [#allocation11], 768
        %v3475 = vld [vmem:[%s3474] sm:$0xf]
        %v3476 = vld [vmem:[%s3474 + $0x4] sm:$0xf]
        %v3477 = vld [vmem:[%s3474 + $0x8] sm:$0xf]
        %v3478 = vld [vmem:[%s3474 + $0xc] sm:$0xf]
        %v3479 = vld [vmem:[%s3474 + $0x10] sm:$0xf]
        %v3480 = vld [vmem:[%s3474 + $0x14] sm:$0xf]
        %v3481 = vld [vmem:[%s3474 + $0x18] sm:$0xf]
        %v3482 = vld [vmem:[%s3474 + $0x1c] sm:$0xf]
        %v3483 = vld [vmem:[%s3474 + $0x20] sm:$0xf]
        %v3484 = vld [vmem:[%s3474 + $0x24] sm:$0xf]
        %v3485 = vld [vmem:[%s3474 + $0x28] sm:$0xf]
        %v3486 = vld [vmem:[%s3474 + $0x2c] sm:$0xf]
        %v3487 = vld [vmem:[%s3474 + $0x30] sm:$0xf]
        %v3488 = vld [vmem:[%s3474 + $0x34] sm:$0xf]
        %v3489 = vld [vmem:[%s3474 + $0x38] sm:$0xf]
        %v3490 = vld [vmem:[%s3474 + $0x3c] sm:$0xf]
        %v3497 = vunpack.c.l.b16 %v3468
        %v3498 = vunpack.c.l.b16 %v3469
        %v3499 = vunpack.c.l.b16 %v3470
        %v3500 = vunpack.c.l.b16 %v3471
        %v3501 = vunpack.c.l.b16 %v3472
        %v3502 = vunpack.c.l.b16 %v3473
        %v3503 = vpack.c.b16 %v3498, %v3497
        %v3504 = vpack.c.b16 %v3500, %v3499
        %v3505 = vpack.c.b16 %v3502, %v3501
        %v3506 = vrot.slane %v3503, 1
        %v3507 = vrot.slane %v3504, 1
        %v3508 = vsel %vm2876, %v3506, %v3507
        %v3509 = vrot.slane %v3505, 1
        %v3510 = vsel %vm2876, %v3507, %v3509
        %v3530 = vunpack.c.l.b16 %v3475
        %v3531 = vunpack.c.l.b16 %v3476
        %v3532 = vunpack.c.l.b16 %v3477
        %v3533 = vunpack.c.l.b16 %v3478
        %v3534 = vunpack.c.l.b16 %v3479
        %v3535 = vunpack.c.l.b16 %v3480
        %v3536 = vunpack.c.l.b16 %v3481
        %v3537 = vunpack.c.l.b16 %v3482
        %v3538 = vunpack.c.l.b16 %v3483
        %v3539 = vunpack.c.l.b16 %v3484
        %v3540 = vunpack.c.l.b16 %v3485
        %v3541 = vunpack.c.l.b16 %v3486
        %v3542 = vunpack.c.l.b16 %v3487
        %v3543 = vunpack.c.l.b16 %v3488
        %v3544 = vunpack.c.l.b16 %v3489
        %v3545 = vunpack.c.l.b16 %v3490
        %v3546 = vpack.c.b16 %v3531, %v3530
        %v3547 = vpack.c.b16 %v3533, %v3532
        %v3548 = vpack.c.b16 %v3535, %v3534
        %v3549 = vpack.c.b16 %v3537, %v3536
        %v3550 = vpack.c.b16 %v3539, %v3538
        %v3551 = vpack.c.b16 %v3541, %v3540
        %v3552 = vpack.c.b16 %v3543, %v3542
        %v3553 = vpack.c.b16 %v3545, %v3544
        %3562 = vmatprep.subr.bf16.mxu0 0
        %3563 = vmatpush1.bf16.msra.mxu0 %v3546
        %3564 = vmatprep.subr.bf16.mxu0 0
        %3565 = vmatpush1.bf16.msra.mxu0 %v3547
        %3566 = vmatprep.subr.bf16.mxu0 0
        %3567 = vmatpush1.bf16.msra.mxu0 %v3548
        %3568 = vmatprep.subr.bf16.mxu0 0
        %3569 = vmatpush1.bf16.msra.mxu0 %v3549
        %3570 = vmatprep.subr.bf16.mxu0 0
        %3571 = vmatpush1.bf16.msra.mxu0 %v3550
        %3572 = vmatprep.subr.bf16.mxu0 0
        %3573 = vmatpush1.bf16.msra.mxu0 %v3551
        %3574 = vmatprep.subr.bf16.mxu0 0
        %3575 = vmatpush1.bf16.msra.mxu0 %v3552
        %3576 = vmatprep.subr.bf16.mxu0 0
        %3577 = vmatpush1.bf16.msra.mxu0 %v3553
        %3578 = vmatprep.subr.bf16.mxu0 0
        %3579 = vmatpush1.bf16.msra.mxu0 0
        %3580 = vmatprep.subr.bf16.mxu0 0
        %3581 = vmatpush1.bf16.msra.mxu0 0
        %3582 = vmatprep.subr.bf16.mxu0 0
        %3583 = vmatpush1.bf16.msra.mxu0 0
        %3584 = vmatprep.subr.bf16.mxu0 0
        %3585 = vmatpush1.bf16.msra.mxu0 0
        %3586 = vmatprep.subr.bf16.mxu0 0
        %3587 = vmatpush1.bf16.msra.mxu0 0
        %3588 = vmatprep.subr.bf16.mxu0 0
        %3589 = vmatpush1.bf16.msra.mxu0 0
        %3590 = vmatprep.subr.bf16.mxu0 0
        %3591 = vmatpush1.bf16.msra.mxu0 0
        %3592 = vmatprep.subr.bf16.mxu0 0
        %3593 = vmatpush1.bf16.msra.mxu0 0
        %3594 = vmatprep.mubr.bf16.mxu0 0
        %3595 = vmatmul.mubr.bf16.gmra.mrb[0].mxu0 %v3508
        %v3596 = vpop.f32.mrb[0].mxu0
        %v3597 = vadd.f32 0.0, %v3596
        %v3598 = vpop.f32.mrb[0].mxu0
        %v3599 = vpop.f32.mrb[0].mxu0
        %v3600 = vadd.f32 0.0, %v3599
        %v3601 = vpop.f32.mrb[0].mxu0
        %3602 = vmatprep.mubr.bf16.mxu0 0
        %3603 = vmatmul.mubr.bf16.gmra.mrb[0].mxu0 %v3510
        %v3604 = vpop.f32.mrb[0].mxu0
        %v3605 = vadd.f32 0.0, %v3604
        %v3606 = vpop.f32.mrb[0].mxu0
        %v3607 = vpop.f32.mrb[0].mxu0
        %v3608 = vadd.f32 0.0, %v3607
        %v3609 = vpop.f32.mrb[0].mxu0
        %3610 = vmatprep.mubr.bf16.mxu0 0
        %3611 = vmatmul.mubr.bf16.gmra.mrb[0].mxu0 %v3509
        %v3612 = vpop.f32.mrb[0].mxu0
        %v3613 = vadd.f32 0.0, %v3612
        %v3614 = vpop.f32.mrb[0].mxu0
        %v3615 = vpop.f32.mrb[0].mxu0
        %v3616 = vpop.f32.mrb[0].mxu0
        %3617 = vdwg.mxu0
        %v3618 = vadd.f32 %v3463, %v3597
        %v3619 = vadd.f32 %v3464, %v3600
        %v3620 = vadd.f32 %v3465, %v3605
        %v3621 = vadd.f32 %v3466, %v3608
        %v3622 = vadd.f32 %v3467, %v3613
        %v3623 = vld [vmem:[%s1450 + $0x4] sm:$0xe]
        %v3624 = vld [vmem:[%s1450 + $0x8] sm:$0xf]
        %v3625 = vld [vmem:[%s1450 + $0xc] sm:$0xf]
        %v3626 = vld [vmem:[%s1450 + $0x10] sm:$0xf]
        %v3627 = vld [vmem:[%s1450 + $0x14] sm:$0xf]
        %v3628 = vld [vmem:[%s1450 + $0x18] sm:$0x1]
        %s3629 = scalar_lea.vmem [#allocation11], 832
        %v3630 = vld [vmem:[%s3629] sm:$0xf]
        %v3631 = vld [vmem:[%s3629 + $0x4] sm:$0xf]
        %v3632 = vld [vmem:[%s3629 + $0x8] sm:$0xf]
        %v3633 = vld [vmem:[%s3629 + $0xc] sm:$0xf]
        %v3634 = vld [vmem:[%s3629 + $0x10] sm:$0xf]
        %v3635 = vld [vmem:[%s3629 + $0x14] sm:$0xf]
        %v3636 = vld [vmem:[%s3629 + $0x18] sm:$0xf]
        %v3637 = vld [vmem:[%s3629 + $0x1c] sm:$0xf]
        %v3638 = vld [vmem:[%s3629 + $0x20] sm:$0xf]
        %v3639 = vld [vmem:[%s3629 + $0x24] sm:$0xf]
        %v3640 = vld [vmem:[%s3629 + $0x28] sm:$0xf]
        %v3641 = vld [vmem:[%s3629 + $0x2c] sm:$0xf]
        %v3642 = vld [vmem:[%s3629 + $0x30] sm:$0xf]
        %v3643 = vld [vmem:[%s3629 + $0x34] sm:$0xf]
        %v3644 = vld [vmem:[%s3629 + $0x38] sm:$0xf]
        %v3645 = vld [vmem:[%s3629 + $0x3c] sm:$0xf]
        %v3652 = vunpack.c.l.b16 %v3623
        %v3653 = vunpack.c.l.b16 %v3624
        %v3654 = vunpack.c.l.b16 %v3625
        %v3655 = vunpack.c.l.b16 %v3626
        %v3656 = vunpack.c.l.b16 %v3627
        %v3657 = vunpack.c.l.b16 %v3628
        %v3658 = vpack.c.b16 %v3653, %v3652
        %v3659 = vpack.c.b16 %v3655, %v3654
        %v3660 = vpack.c.b16 %v3657, %v3656
        %v3661 = vrot.slane %v3658, 1
        %v3662 = vrot.slane %v3659, 1
        %v3663 = vsel %vm2876, %v3661, %v3662
        %v3664 = vrot.slane %v3660, 1
        %v3665 = vsel %vm2876, %v3662, %v3664
        %v3685 = vunpack.c.l.b16 %v3630
        %v3686 = vunpack.c.l.b16 %v3631
        %v3687 = vunpack.c.l.b16 %v3632
        %v3688 = vunpack.c.l.b16 %v3633
        %v3689 = vunpack.c.l.b16 %v3634
        %v3690 = vunpack.c.l.b16 %v3635
        %v3691 = vunpack.c.l.b16 %v3636
        %v3692 = vunpack.c.l.b16 %v3637
        %v3693 = vunpack.c.l.b16 %v3638
        %v3694 = vunpack.c.l.b16 %v3639
        %v3695 = vunpack.c.l.b16 %v3640
        %v3696 = vunpack.c.l.b16 %v3641
        %v3697 = vunpack.c.l.b16 %v3642
        %v3698 = vunpack.c.l.b16 %v3643
        %v3699 = vunpack.c.l.b16 %v3644
        %v3700 = vunpack.c.l.b16 %v3645
        %v3701 = vpack.c.b16 %v3686, %v3685
        %v3702 = vpack.c.b16 %v3688, %v3687
        %v3703 = vpack.c.b16 %v3690, %v3689
        %v3704 = vpack.c.b16 %v3692, %v3691
        %v3705 = vpack.c.b16 %v3694, %v3693
        %v3706 = vpack.c.b16 %v3696, %v3695
        %v3707 = vpack.c.b16 %v3698, %v3697
        %v3708 = vpack.c.b16 %v3700, %v3699
        %3717 = vmatprep.subr.bf16.mxu0 0
        %3718 = vmatpush1.bf16.msra.mxu0 %v3701
        %3719 = vmatprep.subr.bf16.mxu0 0
        %3720 = vmatpush1.bf16.msra.mxu0 %v3702
        %3721 = vmatprep.subr.bf16.mxu0 0
        %3722 = vmatpush1.bf16.msra.mxu0 %v3703
        %3723 = vmatprep.subr.bf16.mxu0 0
        %3724 = vmatpush1.bf16.msra.mxu0 %v3704
        %3725 = vmatprep.subr.bf16.mxu0 0
        %3726 = vmatpush1.bf16.msra.mxu0 %v3705
        %3727 = vmatprep.subr.bf16.mxu0 0
        %3728 = vmatpush1.bf16.msra.mxu0 %v3706
        %3729 = vmatprep.subr.bf16.mxu0 0
        %3730 = vmatpush1.bf16.msra.mxu0 %v3707
        %3731 = vmatprep.subr.bf16.mxu0 0
        %3732 = vmatpush1.bf16.msra.mxu0 %v3708
        %3733 = vmatprep.subr.bf16.mxu0 0
        %3734 = vmatpush1.bf16.msra.mxu0 0
        %3735 = vmatprep.subr.bf16.mxu0 0
        %3736 = vmatpush1.bf16.msra.mxu0 0
        %3737 = vmatprep.subr.bf16.mxu0 0
        %3738 = vmatpush1.bf16.msra.mxu0 0
        %3739 = vmatprep.subr.bf16.mxu0 0
        %3740 = vmatpush1.bf16.msra.mxu0 0
        %3741 = vmatprep.subr.bf16.mxu0 0
        %3742 = vmatpush1.bf16.msra.mxu0 0
        %3743 = vmatprep.subr.bf16.mxu0 0
        %3744 = vmatpush1.bf16.msra.mxu0 0
        %3745 = vmatprep.subr.bf16.mxu0 0
        %3746 = vmatpush1.bf16.msra.mxu0 0
        %3747 = vmatprep.subr.bf16.mxu0 0
        %3748 = vmatpush1.bf16.msra.mxu0 0
        %3749 = vmatprep.mubr.bf16.mxu0 0
        %3750 = vmatmul.mubr.bf16.gmra.mrb[0].mxu0 %v3663
        %v3751 = vpop.f32.mrb[0].mxu0
        %v3752 = vadd.f32 0.0, %v3751
        %v3753 = vpop.f32.mrb[0].mxu0
        %v3754 = vpop.f32.mrb[0].mxu0
        %v3755 = vadd.f32 0.0, %v3754
        %v3756 = vpop.f32.mrb[0].mxu0
        %3757 = vmatprep.mubr.bf16.mxu0 0
        %3758 = vmatmul.mubr.bf16.gmra.mrb[0].mxu0 %v3665
        %v3759 = vpop.f32.mrb[0].mxu0
        %v3760 = vadd.f32 0.0, %v3759
        %v3761 = vpop.f32.mrb[0].mxu0
        %v3762 = vpop.f32.mrb[0].mxu0
        %v3763 = vadd.f32 0.0, %v3762
        %v3764 = vpop.f32.mrb[0].mxu0
        %3765 = vmatprep.mubr.bf16.mxu0 0
        %3766 = vmatmul.mubr.bf16.gmra.mrb[0].mxu0 %v3664
        %v3767 = vpop.f32.mrb[0].mxu0
        %v3768 = vadd.f32 0.0, %v3767
        %v3769 = vpop.f32.mrb[0].mxu0
        %v3770 = vpop.f32.mrb[0].mxu0
        %v3771 = vpop.f32.mrb[0].mxu0
        %3772 = vdwg.mxu0
        %v3773 = vadd.f32 %v3618, %v3752
        %v3774 = vadd.f32 %v3619, %v3755
        %v3775 = vadd.f32 %v3620, %v3760
        %v3776 = vadd.f32 %v3621, %v3763
        %v3777 = vadd.f32 %v3622, %v3768
        %v3778 = vld [vmem:[%s1208 + $0x18] sm:$0x3]
        %s3779 = scalar_lea.vmem [#allocation11], 896
        %v3780 = vld [vmem:[%s3779] sm:$0xf]
        %v3781 = vld [vmem:[%s3779 + $0x4] sm:$0xf]
        %v3782 = vld [vmem:[%s3779 + $0x8] sm:$0xf]
        %v3783 = vld [vmem:[%s3779 + $0xc] sm:$0xf]
        %v3784 = vld [vmem:[%s3779 + $0x10] sm:$0xf]
        %v3785 = vld [vmem:[%s3779 + $0x14] sm:$0xf]
        %v3786 = vld [vmem:[%s3779 + $0x18] sm:$0xf]
        %v3787 = vld [vmem:[%s3779 + $0x1c] sm:$0xf]
        %v3788 = vld [vmem:[%s3779 + $0x20] sm:$0xf]
        %v3789 = vld [vmem:[%s3779 + $0x24] sm:$0xf]
        %v3790 = vld [vmem:[%s3779 + $0x28] sm:$0xf]
        %v3791 = vld [vmem:[%s3779 + $0x2c] sm:$0xf]
        %v3792 = vld [vmem:[%s3779 + $0x30] sm:$0xf]
        %v3793 = vld [vmem:[%s3779 + $0x34] sm:$0xf]
        %v3794 = vld [vmem:[%s3779 + $0x38] sm:$0xf]
        %v3795 = vld [vmem:[%s3779 + $0x3c] sm:$0xf]
        %v3797 = vunpack.c.l.b16 %v3778
        %v3798 = vpack.c.b16 %v3797, %v3501
        %v3800 = vshrl.u32 %v3503, 16
        %v3802 = vrot.slane %v3800, 1
        %v3803 = vshll.u32 %v3503, 16
        %v3805 = vrot.slane %v3803, 2
        %v3806 = vor.u32 %v3802, %v3805
        %v3808 = vshrl.u32 %v3504, 16
        %v3810 = vrot.slane %v3808, 1
        %v3811 = vshll.u32 %v3504, 16
        %v3813 = vrot.slane %v3811, 2
        %v3814 = vor.u32 %v3810, %v3813
        %v3815 = vsel %vm3170, %v3806, %v3814
        %v3817 = vshrl.u32 %v3798, 16
        %v3819 = vrot.slane %v3817, 1
        %v3820 = vshll.u32 %v3798, 16
        %v3822 = vrot.slane %v3820, 2
        %v3823 = vor.u32 %v3819, %v3822
        %v3824 = vsel %vm3170, %v3814, %v3823
        %v3844 = vunpack.c.l.b16 %v3780
        %v3845 = vunpack.c.l.b16 %v3781
        %v3846 = vunpack.c.l.b16 %v3782
        %v3847 = vunpack.c.l.b16 %v3783
        %v3848 = vunpack.c.l.b16 %v3784
        %v3849 = vunpack.c.l.b16 %v3785
        %v3850 = vunpack.c.l.b16 %v3786
        %v3851 = vunpack.c.l.b16 %v3787
        %v3852 = vunpack.c.l.b16 %v3788
        %v3853 = vunpack.c.l.b16 %v3789
        %v3854 = vunpack.c.l.b16 %v3790
        %v3855 = vunpack.c.l.b16 %v3791
        %v3856 = vunpack.c.l.b16 %v3792
        %v3857 = vunpack.c.l.b16 %v3793
        %v3858 = vunpack.c.l.b16 %v3794
        %v3859 = vunpack.c.l.b16 %v3795
        %v3860 = vpack.c.b16 %v3845, %v3844
        %v3861 = vpack.c.b16 %v3847, %v3846
        %v3862 = vpack.c.b16 %v3849, %v3848
        %v3863 = vpack.c.b16 %v3851, %v3850
        %v3864 = vpack.c.b16 %v3853, %v3852
        %v3865 = vpack.c.b16 %v3855, %v3854
        %v3866 = vpack.c.b16 %v3857, %v3856
        %v3867 = vpack.c.b16 %v3859, %v3858
        %3876 = vmatprep.subr.bf16.mxu0 0
        %3877 = vmatpush1.bf16.msra.mxu0 %v3860
        %3878 = vmatprep.subr.bf16.mxu0 0
        %3879 = vmatpush1.bf16.msra.mxu0 %v3861
        %3880 = vmatprep.subr.bf16.mxu0 0
        %3881 = vmatpush1.bf16.msra.mxu0 %v3862
        %3882 = vmatprep.subr.bf16.mxu0 0
        %3883 = vmatpush1.bf16.msra.mxu0 %v3863
        %3884 = vmatprep.subr.bf16.mxu0 0
        %3885 = vmatpush1.bf16.msra.mxu0 %v3864
        %3886 = vmatprep.subr.bf16.mxu0 0
        %3887 = vmatpush1.bf16.msra.mxu0 %v3865
        %3888 = vmatprep.subr.bf16.mxu0 0
        %3889 = vmatpush1.bf16.msra.mxu0 %v3866
        %3890 = vmatprep.subr.bf16.mxu0 0
        %3891 = vmatpush1.bf16.msra.mxu0 %v3867
        %3892 = vmatprep.subr.bf16.mxu0 0
        %3893 = vmatpush1.bf16.msra.mxu0 0
        %3894 = vmatprep.subr.bf16.mxu0 0
        %3895 = vmatpush1.bf16.msra.mxu0 0
        %3896 = vmatprep.subr.bf16.mxu0 0
        %3897 = vmatpush1.bf16.msra.mxu0 0
        %3898 = vmatprep.subr.bf16.mxu0 0
        %3899 = vmatpush1.bf16.msra.mxu0 0
        %3900 = vmatprep.subr.bf16.mxu0 0
        %3901 = vmatpush1.bf16.msra.mxu0 0
        %3902 = vmatprep.subr.bf16.mxu0 0
        %3903 = vmatpush1.bf16.msra.mxu0 0
        %3904 = vmatprep.subr.bf16.mxu0 0
        %3905 = vmatpush1.bf16.msra.mxu0 0
        %3906 = vmatprep.subr.bf16.mxu0 0
        %3907 = vmatpush1.bf16.msra.mxu0 0
        %3908 = vmatprep.mubr.bf16.mxu0 0
        %3909 = vmatmul.mubr.bf16.gmra.mrb[0].mxu0 %v3815
        %v3910 = vpop.f32.mrb[0].mxu0
        %v3911 = vadd.f32 0.0, %v3910
        %v3912 = vpop.f32.mrb[0].mxu0
        %v3913 = vpop.f32.mrb[0].mxu0
        %v3914 = vadd.f32 0.0, %v3913
        %v3915 = vpop.f32.mrb[0].mxu0
        %3916 = vmatprep.mubr.bf16.mxu0 0
        %3917 = vmatmul.mubr.bf16.gmra.mrb[0].mxu0 %v3824
        %v3918 = vpop.f32.mrb[0].mxu0
        %v3919 = vadd.f32 0.0, %v3918
        %v3920 = vpop.f32.mrb[0].mxu0
        %v3921 = vpop.f32.mrb[0].mxu0
        %v3922 = vadd.f32 0.0, %v3921
        %v3923 = vpop.f32.mrb[0].mxu0
        %3924 = vmatprep.mubr.bf16.mxu0 0
        %3925 = vmatmul.mubr.bf16.gmra.mrb[0].mxu0 %v3823
        %v3926 = vpop.f32.mrb[0].mxu0
        %v3927 = vadd.f32 0.0, %v3926
        %v3928 = vpop.f32.mrb[0].mxu0
        %v3929 = vpop.f32.mrb[0].mxu0
        %v3930 = vpop.f32.mrb[0].mxu0
        %3931 = vdwg.mxu0
        %v3932 = vadd.f32 %v3773, %v3911
        %v3933 = vadd.f32 %v3774, %v3914
        %v3934 = vadd.f32 %v3775, %v3919
        %v3935 = vadd.f32 %v3776, %v3922
        %v3936 = vadd.f32 %v3777, %v3927
        %v3937 = vld [vmem:[%s1450 + $0x18] sm:$0x3]
        %s3938 = scalar_lea.vmem [#allocation11], 960
        %v3939 = vld [vmem:[%s3938] sm:$0xf]
        %v3940 = vld [vmem:[%s3938 + $0x4] sm:$0xf]
        %v3941 = vld [vmem:[%s3938 + $0x8] sm:$0xf]
        %v3942 = vld [vmem:[%s3938 + $0xc] sm:$0xf]
        %v3943 = vld [vmem:[%s3938 + $0x10] sm:$0xf]
        %v3944 = vld [vmem:[%s3938 + $0x14] sm:$0xf]
        %v3945 = vld [vmem:[%s3938 + $0x18] sm:$0xf]
        %v3946 = vld [vmem:[%s3938 + $0x1c] sm:$0xf]
        %v3947 = vld [vmem:[%s3938 + $0x20] sm:$0xf]
        %v3948 = vld [vmem:[%s3938 + $0x24] sm:$0xf]
        %v3949 = vld [vmem:[%s3938 + $0x28] sm:$0xf]
        %v3950 = vld [vmem:[%s3938 + $0x2c] sm:$0xf]
        %v3951 = vld [vmem:[%s3938 + $0x30] sm:$0xf]
        %v3952 = vld [vmem:[%s3938 + $0x34] sm:$0xf]
        %v3953 = vld [vmem:[%s3938 + $0x38] sm:$0xf]
        %v3954 = vld [vmem:[%s3938 + $0x3c] sm:$0xf]
        %v3956 = vunpack.c.l.b16 %v3937
        %v3957 = vpack.c.b16 %v3956, %v3656
        %v3959 = vshrl.u32 %v3658, 16
        %v3961 = vrot.slane %v3959, 1
        %v3962 = vshll.u32 %v3658, 16
        %v3964 = vrot.slane %v3962, 2
        %v3965 = vor.u32 %v3961, %v3964
        %v3967 = vshrl.u32 %v3659, 16
        %v3969 = vrot.slane %v3967, 1
        %v3970 = vshll.u32 %v3659, 16
        %v3972 = vrot.slane %v3970, 2
        %v3973 = vor.u32 %v3969, %v3972
        %v3974 = vsel %vm3170, %v3965, %v3973
        %v3976 = vshrl.u32 %v3957, 16
        %v3978 = vrot.slane %v3976, 1
        %v3979 = vshll.u32 %v3957, 16
        %v3981 = vrot.slane %v3979, 2
        %v3982 = vor.u32 %v3978, %v3981
        %v3983 = vsel %vm3170, %v3973, %v3982
        %v4003 = vunpack.c.l.b16 %v3939
        %v4004 = vunpack.c.l.b16 %v3940
        %v4005 = vunpack.c.l.b16 %v3941
        %v4006 = vunpack.c.l.b16 %v3942
        %v4007 = vunpack.c.l.b16 %v3943
        %v4008 = vunpack.c.l.b16 %v3944
        %v4009 = vunpack.c.l.b16 %v3945
        %v4010 = vunpack.c.l.b16 %v3946
        %v4011 = vunpack.c.l.b16 %v3947
        %v4012 = vunpack.c.l.b16 %v3948
        %v4013 = vunpack.c.l.b16 %v3949
        %v4014 = vunpack.c.l.b16 %v3950
        %v4015 = vunpack.c.l.b16 %v3951
        %v4016 = vunpack.c.l.b16 %v3952
        %v4017 = vunpack.c.l.b16 %v3953
        %v4018 = vunpack.c.l.b16 %v3954
        %v4019 = vpack.c.b16 %v4004, %v4003
        %v4020 = vpack.c.b16 %v4006, %v4005
        %v4021 = vpack.c.b16 %v4008, %v4007
        %v4022 = vpack.c.b16 %v4010, %v4009
        %v4023 = vpack.c.b16 %v4012, %v4011
        %v4024 = vpack.c.b16 %v4014, %v4013
        %v4025 = vpack.c.b16 %v4016, %v4015
        %v4026 = vpack.c.b16 %v4018, %v4017
        %4035 = vmatprep.subr.bf16.mxu0 0
        %4036 = vmatpush1.bf16.msra.mxu0 %v4019
        %4037 = vmatprep.subr.bf16.mxu0 0
        %4038 = vmatpush1.bf16.msra.mxu0 %v4020
        %4039 = vmatprep.subr.bf16.mxu0 0
        %4040 = vmatpush1.bf16.msra.mxu0 %v4021
        %4041 = vmatprep.subr.bf16.mxu0 0
        %4042 = vmatpush1.bf16.msra.mxu0 %v4022
        %4043 = vmatprep.subr.bf16.mxu0 0
        %4044 = vmatpush1.bf16.msra.mxu0 %v4023
        %4045 = vmatprep.subr.bf16.mxu0 0
        %4046 = vmatpush1.bf16.msra.mxu0 %v4024
        %4047 = vmatprep.subr.bf16.mxu0 0
        %4048 = vmatpush1.bf16.msra.mxu0 %v4025
        %4049 = vmatprep.subr.bf16.mxu0 0
        %4050 = vmatpush1.bf16.msra.mxu0 %v4026
        %4051 = vmatprep.subr.bf16.mxu0 0
        %4052 = vmatpush1.bf16.msra.mxu0 0
        %4053 = vmatprep.subr.bf16.mxu0 0
        %4054 = vmatpush1.bf16.msra.mxu0 0
        %4055 = vmatprep.subr.bf16.mxu0 0
        %4056 = vmatpush1.bf16.msra.mxu0 0
        %4057 = vmatprep.subr.bf16.mxu0 0
        %4058 = vmatpush1.bf16.msra.mxu0 0
        %4059 = vmatprep.subr.bf16.mxu0 0
        %4060 = vmatpush1.bf16.msra.mxu0 0
        %4061 = vmatprep.subr.bf16.mxu0 0
        %4062 = vmatpush1.bf16.msra.mxu0 0
        %4063 = vmatprep.subr.bf16.mxu0 0
        %4064 = vmatpush1.bf16.msra.mxu0 0
        %4065 = vmatprep.subr.bf16.mxu0 0
        %4066 = vmatpush1.bf16.msra.mxu0 0
        %4067 = vmatprep.mubr.bf16.mxu0 0
        %4068 = vmatmul.mubr.bf16.gmra.mrb[0].mxu0 %v3974
        %v4069 = vpop.f32.mrb[0].mxu0
        %v4070 = vadd.f32 0.0, %v4069
        %v4071 = vpop.f32.mrb[0].mxu0
        %v4072 = vpop.f32.mrb[0].mxu0
        %v4073 = vadd.f32 0.0, %v4072
        %v4074 = vpop.f32.mrb[0].mxu0
        %4075 = vmatprep.mubr.bf16.mxu0 0
        %4076 = vmatmul.mubr.bf16.gmra.mrb[0].mxu0 %v3983
        %v4077 = vpop.f32.mrb[0].mxu0
        %v4078 = vadd.f32 0.0, %v4077
        %v4079 = vpop.f32.mrb[0].mxu0
        %v4080 = vpop.f32.mrb[0].mxu0
        %v4081 = vadd.f32 0.0, %v4080
        %v4082 = vpop.f32.mrb[0].mxu0
        %4083 = vmatprep.mubr.bf16.mxu0 0
        %4084 = vmatmul.mubr.bf16.gmra.mrb[0].mxu0 %v3982
        %v4085 = vpop.f32.mrb[0].mxu0
        %v4086 = vadd.f32 0.0, %v4085
        %v4087 = vpop.f32.mrb[0].mxu0
        %v4088 = vpop.f32.mrb[0].mxu0
        %v4089 = vpop.f32.mrb[0].mxu0
        %4090 = vdwg.mxu0
        %v4091 = vadd.f32 %v3932, %v4070
        %v4092 = vadd.f32 %v3933, %v4073
        %v4093 = vadd.f32 %v3934, %v4078
        %v4094 = vadd.f32 %v3935, %v4081
        %v4095 = vadd.f32 %v3936, %v4086
        %4096 = vst [vmem:[%s490] sm:$0xff] %v4091
        %4097 = vst [vmem:[%s490 + $0x8] sm:$0xff] %v4092
        %4098 = vst [vmem:[%s490 + $0x10] sm:$0xff] %v4093
        %4099 = vst [vmem:[%s490 + $0x18] sm:$0xff] %v4094
        %4100 = vst [vmem:[%s490 + $0x20] sm:$0xff] %v4095
        %s4101 = sand.u32 %s239, 1
        %s4102 = scalar_lea.sflag [#allocation5], %s4101
        %s4103 = sand.u32 %s239, 1
        %s4104 = smul.addr %s4103, 40
        %s4105 = scalar_lea.vmem [#allocation16], %s4104
        // Predicated region
        $region85: #{tpu_custom_call.1} parent=51 // pred_check
          %p4106 = pneg %p249
        $region86: #{tpu_custom_call.1} parent=51 // pred_check_branch
          %4108 = sbr.rel (%p4106) target = $region88
        $region87: #{tpu_custom_call.1} parent=51 // pred_region
          %s4110 = ssub.s32 640, 640
          %4111 = vsyncadd %s4102, %s4110
          %s4112 = smul.addr %s35, 5
          %s4113 = smul.addr %s34, 10
          %s4114 = sadd.s32 %s4112, %s4113
          %s4115 = smul.addr %s4114, 128
          %s4116 = scalar_lea.hbm %s8, %s4115
          %s4117 = sshll.u32 %s4105, 4
          %s4118 = int_to_ptr.vmem [resolvable:$true] %s4117
          %4123 = dma.vmem_to_hbm [thread:$0]  %s4118, 640, %s4116, %s4102, 128, 128, 8
        $region88: #{tpu_custom_call.1} parent=51 // pred_fallthru
          _
      $region52: #{tpu_custom_call.1} parent=5 // pred_fallthru
        _
      %p4124 = scmp.le.s32.totalorder 2, %s25
      // Predicated region
      $region89: #{tpu_custom_call.1} parent=5 // pred_check
        %p4125 = pneg %p4124
      $region90: #{tpu_custom_call.1} parent=5 // pred_check_branch
        %4127 = sbr.rel (%p4125) target = $region92
      $region91: #{tpu_custom_call.1} parent=5 // pred_region
        %s4128 = ssub.s32 %s25, 2
        // Predicated region
        $region93: #{tpu_custom_call.1} parent=91 // pred_check
          %p4129 = pneg %p255
        $region94: #{tpu_custom_call.1} parent=91 // pred_check_branch
          %4131 = sbr.rel (%p4129) target = $region96
        $region95: #{tpu_custom_call.1} parent=91 // pred_region
          %s4132 = sand.u32 %s240, 1
          %s4133 = scalar_lea.sflag [#allocation5], %s4132
          %s4134 = sand.u32 %s240, 1
          %s4135 = smul.addr %s4134, 40
          %s4136 = scalar_lea.vmem [#allocation16], %s4135
          %4137 = dma.done %s4133, 640
        $region96: #{tpu_custom_call.1} parent=91 // pred_fallthru
          _
      $region92: #{tpu_custom_call.1} parent=5 // pred_fallthru
        _
    $region6: #{tpu_custom_call.1} parent=1 // loop_footer
      %s29 = sadd.s32 1, %s25
    $region7: #{tpu_custom_call.1} parent=1 // loop_footer_branch
      %24 = sbr.rel target = $region3
    $region8: #{tpu_custom_call.1} parent=1 // loop_exit
      _
    %4138 = vsyncpa [#allocation4], 1
    %s4139 = scalar_lea.sflag [#allocation4], 1
    %4140 = vsyncpa %s4139, 1
    %4141 = vsyncpa [#allocation7], 1
    %s4142 = scalar_lea.sflag [#allocation7], 1
    %4143 = vsyncpa %s4142, 1
    %4144 = vsyncpa [#allocation10], 1
    %4145 = vsyncpa [#allocation13], 1
    %4146 = vsyncpa [#allocation5], 1
    %s4147 = scalar_lea.sflag [#allocation5], 1
    %4148 = vsyncpa %s4147, 1

</llo_original>
